<compile_context>
chip_gen: v7x
topology: tpu7x:2x2x1
jax: 0.10.0
libtpu: 0.0.40
codegen_flags: <defaults>
</compile_context>

<pallas_src>
import functools
import math

import jax
import jax.numpy as jnp
import numpy as np
from jax import lax
from jax.experimental import pallas as pl
from jax.experimental.pallas import tpu as pltpu

# ---- model hyper-parameters (small, consistent with the module defaults) ----
D_MODEL = 32
D_STATE = 16
D_CONV = 4
EXPAND = 2
D_INNER = EXPAND * D_MODEL          # 64
DT_RANK = math.ceil(D_MODEL / 16)   # 2
BATCH = 2
SEQLEN = 16
RMS_EPS = 1e-5


def _silu(x):
    return x / (1.0 + jnp.exp(-x))


def _softplus(x):
    # numerically stable: max(x, 0) + log(1 + exp(-|x|))
    return jnp.maximum(x, 0.0) + jnp.log(1.0 + jnp.exp(-jnp.abs(x)))


# ---------------------------------------------------------------------------
# Pallas kernel: the whole (batch, seq) problem in one invocation.
# ---------------------------------------------------------------------------
def _mamba_kernel(h_ref, w_in_ref, conv_w_ref, vecs_ref, w_dtc_ref, w_xp_b_ref,
                  a_fold_ref, w_out_ref, out_ref, d_a_ref, d_bu_ref, states_ref,
                  *, batch, seqlen, d_inner, d_state, d_conv, eps):
    bl = batch * seqlen
    h2 = h_ref[...]                                          # (B*L, D)

    # ---- fused in_proj: one lane-dense (B*L, 2*d_inner) MXU result ---------
    xz = jnp.dot(h2, w_in_ref[...], preferred_element_type=jnp.float32)
    x_all = xz[:, :d_inner]                                  # (B*L, d_inner)
    z_all = xz[:, d_inner:]

    conv_b = vecs_ref[0:1, :]
    dt_bias = vecs_ref[1:2, :]
    d_vec = vecs_ref[2:3, :]
    rms_w = vecs_ref[3:4, :]

    # ---- depthwise causal conv along time ----------------------------------
    # one zero-pad + static slices; batch boundaries masked via (row mod L).
    # (the pad copy is ~9 KB and off the critical chain)
    xpad = jnp.concatenate(
        [jnp.zeros((d_conv - 1, d_inner), jnp.float32), x_all], axis=0)
    row_ids = lax.broadcasted_iota(jnp.int32, (bl, d_inner), 0)
    l_ids = row_ids % seqlen
    xc = jnp.zeros((bl, d_inner), jnp.float32)
    for k in range(d_conv):
        shift = d_conv - 1 - k
        tap = xpad[k:k + bl, :]
        if shift > 0:
            tap = jnp.where(l_ids >= shift, tap, 0.0)
        xc = xc + tap * conv_w_ref[k:k + 1, :]
    xc = _silu(xc + conv_b)                                  # (B*L, d_inner)

    # ---- fused [dt | C] projection: one lane-dense (B*L, 128) matmul -------
    dtc = jnp.dot(xc, w_dtc_ref[...], preferred_element_type=jnp.float32)
    delta = _softplus(dtc[:, :d_inner] + dt_bias)            # (B*L, d_inner)
    c_rows = dtc[:, d_inner:d_inner + d_state]               # (B*L, d_state)
    # B^T (d_state, B*L): per-step values come out as cheap column slices in
    # the bulk prework below (never touched inside the serial scan).
    b_t = lax.dot_general(w_xp_b_ref[...], xc, (((1,), (1,)), ((), ())),
                          preferred_element_type=jnp.float32)
    dxu = delta * xc                                         # (B*L, d_inner)

    # ---- bulk prework (independent per-l, off the serial chain) ------------
    # materialize per-step slabs with batch folded into the 128-lane axis:
    #   d_a [l*ds+n, b*di+d] = exp(A[d,n] * delta[b*L+l, d])
    #   d_bu[l*ds+n, b*di+d] = B[b*L+l, n] * delta[b*L+l, d] * x[b*L+l, d]
    a_fold = a_fold_ref[...]                                 # (d_state, B*d_inner)
    delta_fold = jnp.concatenate(
        [delta[b * seqlen:(b + 1) * seqlen, :] for b in range(batch)], axis=1)
    for l in range(seqlen):
        lo = l * d_state
        d_a_ref[lo:lo + d_state, :] = jnp.exp(a_fold * delta_fold[l:l + 1, :])
        d_bu_ref[lo:lo + d_state, :] = jnp.concatenate(
            [b_t[:, b * seqlen + l:b * seqlen + l + 1]
             * dxu[b * seqlen + l:b * seqlen + l + 1, :]
             for b in range(batch)], axis=1)

    # ---- selective scan: both batch chains in one (16, 128) carried state --
    # per step: 2 full-tile slab loads + multiply-add + 1 store (off chain).
    # TODO(synk): for long seqlen chunk time over a grid axis (state held in a
    # persistent VMEM scratch) and use lax.fori_loop(..., unroll=4-8).
    state = jnp.zeros((d_state, batch * d_inner), jnp.float32)
    for l in range(seqlen):
        lo = l * d_state
        state = d_a_ref[lo:lo + d_state, :] * state + d_bu_ref[lo:lo + d_state, :]
        states_ref[lo:lo + d_state, :] = state

    # ---- bulk y readout on the MXU ------------------------------------------
    # y[r,:] = sum_n C[r,n] * state_{batch(r), l(r)}[n,:], done as ONE matmul
    # against a block-diagonal C matrix m[r, l*ds+n] = C[r,n] * [l == r mod L].
    l_of_r = lax.broadcasted_iota(jnp.int32, (bl, d_state), 0) % seqlen
    m = jnp.concatenate(
        [jnp.where(l_of_r == l, c_rows, 0.0) for l in range(seqlen)], axis=1)
    y_both = jnp.dot(m, states_ref[...], preferred_element_type=jnp.float32)
    y = jnp.concatenate(
        [y_both[b * seqlen:(b + 1) * seqlen, b * d_inner:(b + 1) * d_inner]
         for b in range(batch)], axis=0)                     # (B*L, d_inner)

    # ---- D skip, SiLU(z) gating, RMSNorm (module's norm_back), out_proj ----
    y = y + xc * d_vec
    y = y * _silu(z_all)
    var = jnp.mean(y * y, axis=-1, keepdims=True)
    y = y * lax.rsqrt(var + eps) * rms_w
    # TODO(synk): cast weights/activations to bf16 at the MXU inputs once
    # d_model/d_inner grow (keep the scan recurrence and RMSNorm in f32).
    out_ref[...] = jnp.dot(y, w_out_ref[...], preferred_element_type=jnp.float32)


def mamba1_forward(h, p):
    batch, seqlen, d_model = h.shape
    bl = batch * seqlen

    # ---- one-time host/XLA-side weight fusion & packing ---------------------
    w_in_t = jnp.transpose(p['w_in'])                            # (D, 2*d_inner)
    conv_w = jnp.transpose(p['conv_w'])                          # (d_conv, d_inner)
    w_xp_dt = p['w_xp'][:DT_RANK]                                # (dt_rank, d_inner)
    w_xp_b = p['w_xp'][DT_RANK:DT_RANK + D_STATE]                # (d_state, d_inner)
    w_xp_c_t = jnp.transpose(p['w_xp'][DT_RANK + D_STATE:])      # (d_inner, d_state)
    # dt path: x_proj(dt_rank) and dt_proj fused exactly (linear composition)
    w_dt_fused = jnp.dot(jnp.transpose(w_xp_dt),
                         jnp.transpose(p['w_dt']))               # (d_inner, d_inner)
    # fused [dt | C | zero-pad] projection weight, lane width padded to 128
    pad_cols = (-(D_INNER + D_STATE)) % 128
    w_dtc = jnp.concatenate(
        [w_dt_fused, w_xp_c_t, jnp.zeros((D_INNER, pad_cols), jnp.float32)],
        axis=1)                                                  # (d_inner, 128)
    a_t = jnp.transpose(-jnp.exp(p['a_log']))                    # (d_state, d_inner)
    a_fold = jnp.tile(a_t, (1, batch))                           # (d_state, B*d_inner)
    vecs = jnp.stack([p['conv_b'], p['dt_bias'], p['d_vec'], p['rms_w']], axis=0)
    w_out_t = jnp.transpose(p['w_out'])                          # (d_inner, D)

    h2 = h.reshape(bl, d_model)

    kernel = functools.partial(
        _mamba_kernel, batch=batch, seqlen=seqlen, d_inner=D_INNER,
        d_state=D_STATE, d_conv=D_CONV, eps=RMS_EPS)

    operands = (h2, w_in_t, conv_w, vecs, w_dtc, w_xp_b, a_fold, w_out_t)
    vmem_spec = pl.BlockSpec(memory_space=pltpu.MemorySpace.VMEM)
    cost = pl.CostEstimate(
        flops=int(2 * bl * d_model * 2 * D_INNER                  # in_proj
                  + 2 * bl * D_INNER * w_dtc.shape[1]             # dt|C proj
                  + 2 * bl * D_INNER * D_STATE                    # B^T proj
                  + 6 * seqlen * D_STATE * batch * D_INNER        # prework+scan
                  + 2 * bl * seqlen * D_STATE * batch * D_INNER   # y readout
                  + 2 * bl * D_INNER * d_model),                  # out_proj
        transcendentals=int(seqlen * D_STATE * batch * D_INNER + 5 * bl * D_INNER),
        bytes_accessed=int(4 * (sum(int(o.size) for o in operands)
                                + bl * d_model)))

    # Single invocation, no grid: the problem is latency-bound on the serial
    # scan, so one TensorCore and fully VMEM-resident operands.
    # TODO(synk): on v7x add a size-`batch` "parallel" grid axis (or core_map
    # over a 2-core mesh) so each TensorCore runs one batch chain; keep the
    # gridless form on v5e/v6e.
    out = pl.pallas_call(
        kernel,
        out_shape=jax.ShapeDtypeStruct((bl, d_model), jnp.float32),
        in_specs=[vmem_spec] * len(operands),
        out_specs=vmem_spec,
        scratch_shapes=[
            pltpu.VMEM((seqlen * D_STATE, batch * D_INNER), jnp.float32),  # d_a
            pltpu.VMEM((seqlen * D_STATE, batch * D_INNER), jnp.float32),  # d_bu
            pltpu.VMEM((seqlen * D_STATE, batch * D_INNER), jnp.float32),  # states
        ],
        cost_estimate=cost,
    )(*operands)
    return out.reshape(batch, seqlen, d_model)


# ---------------------------------------------------------------------------
# Deterministic parameter construction (shapes mirror Mamba1.__init__).
# ---------------------------------------------------------------------------
def init_params(key):
    ks = jax.random.split(key, 8)

    def u(k, shape, scale):
        return jax.random.uniform(k, shape, jnp.float32, -scale, scale)

    w_in = u(ks[0], (2 * D_INNER, D_MODEL), 1.0 / math.sqrt(D_MODEL))
    conv_w = u(ks[1], (D_INNER, D_CONV), 1.0 / math.sqrt(D_CONV))
    conv_b = u(ks[2], (D_INNER,), 1.0 / math.sqrt(D_CONV))
    w_xp = u(ks[3], (DT_RANK + 2 * D_STATE, D_INNER), 1.0 / math.sqrt(D_INNER))
    w_dt = u(ks[4], (D_INNER, DT_RANK), DT_RANK ** -0.5)

    dt = jnp.exp(jax.random.uniform(ks[5], (D_INNER,), jnp.float32)
                 * (math.log(0.1) - math.log(0.001)) + math.log(0.001))
    dt = jnp.maximum(dt, 1e-4)
    inv_dt = dt + jnp.log(-jnp.expm1(-dt))          # softplus(inv_dt) == dt

    a_log = jnp.log(jnp.broadcast_to(
        jnp.arange(1, D_STATE + 1, dtype=jnp.float32), (D_INNER, D_STATE)))
    w_out = u(ks[6], (D_MODEL, D_INNER), 1.0 / math.sqrt(D_INNER))

    return dict(
        w_in=w_in,                                   # (2*d_inner, D)
        conv_w=conv_w,                               # (d_inner, d_conv)
        conv_b=conv_b,                               # (d_inner,)
        w_xp=w_xp,                                   # (dt_rank+2*d_state, d_inner)
        w_dt=w_dt,                                   # (d_inner, dt_rank)
        dt_bias=inv_dt,                              # (d_inner,)
        a_log=a_log,                                 # (d_inner, d_state)
        d_vec=jnp.ones((D_INNER,), jnp.float32),
        rms_w=jnp.ones((D_INNER,), jnp.float32),
        w_out=w_out,                                 # (D, d_inner)
    )


# ---------------------------------------------------------------------------
# Pure-JAX reference (mirrors the PyTorch forward math) for self-checking.
# ---------------------------------------------------------------------------
def mamba1_reference(h, p):
    batch, L, _ = h.shape
    x = h @ jnp.transpose(p['w_in'][:D_INNER])
    z = h @ jnp.transpose(p['w_in'][D_INNER:])
    xc = jnp.zeros_like(x)
    for k in range(D_CONV):
        shift = D_CONV - 1 - k
        xs = jnp.pad(x, ((0, 0), (shift, 0), (0, 0)))[:, :L, :]
        xc = xc + xs * p['conv_w'][:, k][None, None, :]
    xc = _silu(xc + p['conv_b'][None, None, :])
    x_dbl = xc @ jnp.transpose(p['w_xp'])
    dt_lr = x_dbl[..., :DT_RANK]
    b_mat = x_dbl[..., DT_RANK:DT_RANK + D_STATE]
    c_mat = x_dbl[..., DT_RANK + D_STATE:]
    delta = jax.nn.softplus(dt_lr @ jnp.transpose(p['w_dt']) + p['dt_bias'])
    a = -jnp.exp(p['a_log'])                          # (d_inner, d_state)
    state = jnp.zeros((batch, D_INNER, D_STATE), jnp.float32)
    ys = []
    for l in range(L):
        dl = delta[:, l, :]
        d_a = jnp.exp(dl[:, :, None] * a[None])
        d_bu = dl[:, :, None] * b_mat[:, l, None, :] * xc[:, l, :, None]
        state = d_a * state + d_bu
        ys.append(jnp.einsum('bdn,bn->bd', state, c_mat[:, l, :]))
    y = jnp.stack(ys, axis=1)
    y = y + xc * p['d_vec']
    y = y * _silu(z)
    var = jnp.mean(y * y, axis=-1, keepdims=True)
    y = y * lax.rsqrt(var + RMS_EPS) * p['rms_w']
    return y @ jnp.transpose(p['w_out'])


if __name__ == "__main__":
    key = jax.random.PRNGKey(0)
    k_h, k_p = jax.random.split(key)
    params = init_params(k_p)
    hidden_states = jax.random.normal(k_h, (BATCH, SEQLEN, D_MODEL), jnp.float32)

    out = jax.block_until_ready(mamba1_forward(hidden_states, params))
    ref = jax.block_until_ready(mamba1_reference(hidden_states, params))

    assert out.shape == (BATCH, SEQLEN, D_MODEL)
    if not np.allclose(np.asarray(out), np.asarray(ref), atol=1e-2, rtol=1e-2):
        diff = float(np.max(np.abs(np.asarray(out) - np.asarray(ref))))
        raise SystemExit(f"KERNEL_MISMATCH max_abs_diff={diff}")
    print("KERNEL_OK")
</pallas_src>

<mosaic_0001>
module attributes {stable_mosaic.version = 11 : i64} {
  func.func @_mamba_kernel(%arg0: memref<32x32xf32, #tpu.memory_space<vmem>>, %arg1: memref<32x128xf32, #tpu.memory_space<vmem>>, %arg2: memref<4x64xf32, #tpu.memory_space<vmem>>, %arg3: memref<4x64xf32, #tpu.memory_space<vmem>>, %arg4: memref<64x128xf32, #tpu.memory_space<vmem>>, %arg5: memref<16x64xf32, #tpu.memory_space<vmem>>, %arg6: memref<16x128xf32, #tpu.memory_space<vmem>>, %arg7: memref<64x32xf32, #tpu.memory_space<vmem>>, %arg8: memref<32x32xf32, #tpu.memory_space<vmem>>, %arg9: memref<256x128xf32, #tpu.memory_space<vmem>>, %arg10: memref<256x128xf32, #tpu.memory_space<vmem>>, %arg11: memref<256x128xf32, #tpu.memory_space<vmem>>) attributes {dimension_semantics = [], scalar_prefetch = 0 : i64, scratch_operands = 3 : i64, tpu.core_type = #tpu.core_type<tc>} {
    %c0 = arith.constant 0 : index
    %c0_0 = arith.constant 0 : index
    %0 = vector.load %arg0[%c0, %c0_0] : memref<32x32xf32, #tpu.memory_space<vmem>>, vector<32x32xf32>
    %c0_1 = arith.constant 0 : index
    %c0_2 = arith.constant 0 : index
    %1 = vector.load %arg1[%c0_1, %c0_2] : memref<32x128xf32, #tpu.memory_space<vmem>>, vector<32x128xf32>
    %cst = arith.constant dense<0.000000e+00> : vector<32x128xf32>
    %2 = tpu.matmul %0, %1, %cst {dimension_numbers = #tpu.dot_dimension_numbers<[1], [0], [0], [1], [0, 0, 1, 1], [], []>} : vector<32x32xf32>, vector<32x128xf32>, vector<32x128xf32> -> vector<32x128xf32>
    %3 = vector.extract_strided_slice %2 {offsets = [0, 0], sizes = [32, 64], strides = [1, 1]} : vector<32x128xf32> to vector<32x64xf32>
    %4 = vector.extract_strided_slice %2 {offsets = [0, 64], sizes = [32, 64], strides = [1, 1]} : vector<32x128xf32> to vector<32x64xf32>
    %c0_3 = arith.constant 0 : index
    %c0_4 = arith.constant 0 : index
    %5 = vector.load %arg3[%c0_3, %c0_4] : memref<4x64xf32, #tpu.memory_space<vmem>>, vector<1x64xf32>
    %c1 = arith.constant 1 : index
    %c0_5 = arith.constant 0 : index
    %6 = vector.load %arg3[%c1, %c0_5] : memref<4x64xf32, #tpu.memory_space<vmem>>, vector<1x64xf32>
    %c2 = arith.constant 2 : index
    %c0_6 = arith.constant 0 : index
    %7 = vector.load %arg3[%c2, %c0_6] : memref<4x64xf32, #tpu.memory_space<vmem>>, vector<1x64xf32>
    %c3 = arith.constant 3 : index
    %c0_7 = arith.constant 0 : index
    %8 = vector.load %arg3[%c3, %c0_7] : memref<4x64xf32, #tpu.memory_space<vmem>>, vector<1x64xf32>
    %cst_8 = arith.constant 0.000000e+00 : f32
    %9 = vector.broadcast %cst_8 : f32 to vector<3x64xf32>
    %10 = tpu.concatenate %9, %3 in 0 : vector<3x64xf32>, vector<32x64xf32> -> vector<35x64xf32>
    %11 = tpu.iota {dimensions = array<i32: 0>} : vector<32x64xi32>
    %c16_i32 = arith.constant 16 : i32
    %c0_i32 = arith.constant 0 : i32
    %12 = arith.cmpi eq, %c16_i32, %c0_i32 : i32
    %c1_i32 = arith.constant 1 : i32
    %13 = arith.select %12, %c1_i32, %c16_i32 : i32
    %14 = vector.broadcast %13 : i32 to vector<32x64xi32>
    %15 = arith.remsi %11, %14 : vector<32x64xi32>
    %c0_i32_9 = arith.constant 0 : i32
    %16 = vector.broadcast %c0_i32_9 : i32 to vector<32x64xi32>
    %17 = arith.cmpi ne, %15, %16 : vector<32x64xi32>
    %c0_i32_10 = arith.constant 0 : i32
    %18 = vector.broadcast %c0_i32_10 : i32 to vector<32x64xi32>
    %19 = arith.cmpi slt, %15, %18 : vector<32x64xi32>
    %c0_i32_11 = arith.constant 0 : i32
    %20 = arith.cmpi slt, %13, %c0_i32_11 : i32
    %21 = vector.broadcast %20 : i1 to vector<32x64xi1>
    %22 = vector.broadcast %21 : vector<32x64xi1> to vector<32x64xi1>
    %23 = arith.xori %19, %22 : vector<32x64xi1>
    %24 = arith.andi %23, %17 : vector<32x64xi1>
    %25 = vector.broadcast %13 : i32 to vector<32x64xi32>
    %26 = arith.addi %15, %25 : vector<32x64xi32>
    %27 = arith.select %24, %26, %15 : vector<32x64xi1>, vector<32x64xi32>
    %cst_12 = arith.constant 0.000000e+00 : f32
    %28 = vector.broadcast %cst_12 : f32 to vector<32x64xf32>
    %29 = vector.extract_strided_slice %10 {offsets = [0, 0], sizes = [32, 64], strides = [1, 1]} : vector<35x64xf32> to vector<32x64xf32>
    %c3_i32 = arith.constant 3 : i32
    %30 = vector.broadcast %c3_i32 : i32 to vector<32x64xi32>
    %31 = arith.cmpi sge, %27, %30 : vector<32x64xi32>
    %cst_13 = arith.constant 0.000000e+00 : f32
    %32 = vector.broadcast %cst_13 : f32 to vector<32x64xf32>
    %33 = arith.select %31, %29, %32 : vector<32x64xi1>, vector<32x64xf32>
    %c0_14 = arith.constant 0 : index
    %c0_15 = arith.constant 0 : index
    %34 = vector.load %arg2[%c0_14, %c0_15] : memref<4x64xf32, #tpu.memory_space<vmem>>, vector<1x64xf32>
    %35 = vector.broadcast %34 : vector<1x64xf32> to vector<32x64xf32>
    %36 = arith.mulf %33, %35 : vector<32x64xf32>
    %37 = arith.addf %28, %36 : vector<32x64xf32>
    %38 = vector.extract_strided_slice %10 {offsets = [1, 0], sizes = [32, 64], strides = [1, 1]} : vector<35x64xf32> to vector<32x64xf32>
    %c2_i32 = arith.constant 2 : i32
    %39 = vector.broadcast %c2_i32 : i32 to vector<32x64xi32>
    %40 = arith.cmpi sge, %27, %39 : vector<32x64xi32>
    %cst_16 = arith.constant 0.000000e+00 : f32
    %41 = vector.broadcast %cst_16 : f32 to vector<32x64xf32>
    %42 = arith.select %40, %38, %41 : vector<32x64xi1>, vector<32x64xf32>
    %c1_17 = arith.constant 1 : index
    %c0_18 = arith.constant 0 : index
    %43 = vector.load %arg2[%c1_17, %c0_18] : memref<4x64xf32, #tpu.memory_space<vmem>>, vector<1x64xf32>
    %44 = vector.broadcast %43 : vector<1x64xf32> to vector<32x64xf32>
    %45 = arith.mulf %42, %44 : vector<32x64xf32>
    %46 = arith.addf %37, %45 : vector<32x64xf32>
    %47 = vector.extract_strided_slice %10 {offsets = [2, 0], sizes = [32, 64], strides = [1, 1]} : vector<35x64xf32> to vector<32x64xf32>
    %c1_i32_19 = arith.constant 1 : i32
    %48 = vector.broadcast %c1_i32_19 : i32 to vector<32x64xi32>
    %49 = arith.cmpi sge, %27, %48 : vector<32x64xi32>
    %cst_20 = arith.constant 0.000000e+00 : f32
    %50 = vector.broadcast %cst_20 : f32 to vector<32x64xf32>
    %51 = arith.select %49, %47, %50 : vector<32x64xi1>, vector<32x64xf32>
    %c2_21 = arith.constant 2 : index
    %c0_22 = arith.constant 0 : index
    %52 = vector.load %arg2[%c2_21, %c0_22] : memref<4x64xf32, #tpu.memory_space<vmem>>, vector<1x64xf32>
    %53 = vector.broadcast %52 : vector<1x64xf32> to vector<32x64xf32>
    %54 = arith.mulf %51, %53 : vector<32x64xf32>
    %55 = arith.addf %46, %54 : vector<32x64xf32>
    %56 = vector.extract_strided_slice %10 {offsets = [3, 0], sizes = [32, 64], strides = [1, 1]} : vector<35x64xf32> to vector<32x64xf32>
    %c3_23 = arith.constant 3 : index
    %c0_24 = arith.constant 0 : index
    %57 = vector.load %arg2[%c3_23, %c0_24] : memref<4x64xf32, #tpu.memory_space<vmem>>, vector<1x64xf32>
    %58 = vector.broadcast %57 : vector<1x64xf32> to vector<32x64xf32>
    %59 = arith.mulf %56, %58 : vector<32x64xf32>
    %60 = arith.addf %55, %59 : vector<32x64xf32>
    %61 = vector.broadcast %5 : vector<1x64xf32> to vector<32x64xf32>
    %62 = arith.addf %60, %61 : vector<32x64xf32>
    %cst_25 = arith.constant 0.000000e+00 : f32
    %63 = vector.broadcast %cst_25 : f32 to vector<32x64xf32>
    %64 = arith.subf %63, %62 : vector<32x64xf32>
    %65 = math.exp %64 : vector<32x64xf32>
    %cst_26 = arith.constant 1.000000e+00 : f32
    %66 = vector.broadcast %cst_26 : f32 to vector<32x64xf32>
    %67 = arith.addf %66, %65 : vector<32x64xf32>
    %68 = arith.divf %62, %67 : vector<32x64xf32>
    %c0_27 = arith.constant 0 : index
    %c0_28 = arith.constant 0 : index
    %69 = vector.load %arg4[%c0_27, %c0_28] : memref<64x128xf32, #tpu.memory_space<vmem>>, vector<64x128xf32>
    %cst_29 = arith.constant dense<0.000000e+00> : vector<32x128xf32>
    %70 = tpu.matmul %68, %69, %cst_29 {dimension_numbers = #tpu.dot_dimension_numbers<[1], [0], [0], [1], [0, 0, 1, 1], [], []>} : vector<32x64xf32>, vector<64x128xf32>, vector<32x128xf32> -> vector<32x128xf32>
    %71 = vector.extract_strided_slice %70 {offsets = [0, 0], sizes = [32, 64], strides = [1, 1]} : vector<32x128xf32> to vector<32x64xf32>
    %72 = vector.broadcast %6 : vector<1x64xf32> to vector<32x64xf32>
    %73 = arith.addf %71, %72 : vector<32x64xf32>
    %cst_30 = arith.constant 0.000000e+00 : f32
    %74 = vector.broadcast %cst_30 : f32 to vector<32x64xf32>
    %75 = arith.maximumf %73, %74 : vector<32x64xf32>
    %76 = math.absf %73 : vector<32x64xf32>
    %cst_31 = arith.constant 0.000000e+00 : f32
    %77 = vector.broadcast %cst_31 : f32 to vector<32x64xf32>
    %78 = arith.subf %77, %76 : vector<32x64xf32>
    %79 = math.exp %78 : vector<32x64xf32>
    %cst_32 = arith.constant 1.000000e+00 : f32
    %80 = vector.broadcast %cst_32 : f32 to vector<32x64xf32>
    %81 = arith.addf %80, %79 : vector<32x64xf32>
    %82 = math.log %81 : vector<32x64xf32>
    %83 = arith.addf %75, %82 : vector<32x64xf32>
    %84 = vector.extract_strided_slice %70 {offsets = [0, 64], sizes = [32, 16], strides = [1, 1]} : vector<32x128xf32> to vector<32x16xf32>
    %c0_33 = arith.constant 0 : index
    %c0_34 = arith.constant 0 : index
    %85 = vector.load %arg5[%c0_33, %c0_34] : memref<16x64xf32, #tpu.memory_space<vmem>>, vector<16x64xf32>
    %cst_35 = arith.constant dense<0.000000e+00> : vector<16x32xf32>
    %86 = tpu.matmul %85, %68, %cst_35 {dimension_numbers = #tpu.dot_dimension_numbers<[1], [1], [0], [0], [0, 0, 1, 0], [], []>} : vector<16x64xf32>, vector<32x64xf32>, vector<16x32xf32> -> vector<16x32xf32>
    %87 = arith.mulf %83, %68 : vector<32x64xf32>
    %c0_36 = arith.constant 0 : index
    %c0_37 = arith.constant 0 : index
    %88 = vector.load %arg6[%c0_36, %c0_37] : memref<16x128xf32, #tpu.memory_space<vmem>>, vector<16x128xf32>
    %89 = vector.extract_strided_slice %83 {offsets = [0, 0], sizes = [16, 64], strides = [1, 1]} : vector<32x64xf32> to vector<16x64xf32>
    %90 = vector.extract_strided_slice %83 {offsets = [16, 0], sizes = [16, 64], strides = [1, 1]} : vector<32x64xf32> to vector<16x64xf32>
    %91 = tpu.concatenate %89, %90 in 1 : vector<16x64xf32>, vector<16x64xf32> -> vector<16x128xf32>
    %92 = vector.extract_strided_slice %91 {offsets = [0, 0], sizes = [1, 128], strides = [1, 1]} : vector<16x128xf32> to vector<1x128xf32>
    %93 = vector.broadcast %92 : vector<1x128xf32> to vector<16x128xf32>
    %94 = arith.mulf %88, %93 : vector<16x128xf32>
    %95 = math.exp %94 : vector<16x128xf32>
    %c0_38 = arith.constant 0 : index
    %c0_39 = arith.constant 0 : index
    %96 = vector.load %arg9[%c0_38, %c0_39] : memref<256x128xf32, #tpu.memory_space<vmem>>, vector<16x128xf32>
    tpu.vector_store %arg9[%c0_38, %c0_39], %95 {strides = array<i32>} : memref<256x128xf32, #tpu.memory_space<vmem>>, vector<16x128xf32>,
    %97 = vector.extract_strided_slice %86 {offsets = [0, 0], sizes = [16, 1], strides = [1, 1]} : vector<16x32xf32> to vector<16x1xf32>
    %98 = vector.extract_strided_slice %87 {offsets = [0, 0], sizes = [1, 64], strides = [1, 1]} : vector<32x64xf32> to vector<1x64xf32>
    %99 = vector.broadcast %97 : vector<16x1xf32> to vector<16x64xf32>
    %100 = vector.broadcast %98 : vector<1x64xf32> to vector<16x64xf32>
    %101 = arith.mulf %99, %100 : vector<16x64xf32>
    %102 = vector.extract_strided_slice %86 {offsets = [0, 16], sizes = [16, 1], strides = [1, 1]} : vector<16x32xf32> to vector<16x1xf32>
    %103 = vector.extract_strided_slice %87 {offsets = [16, 0], sizes = [1, 64], strides = [1, 1]} : vector<32x64xf32> to vector<1x64xf32>
    %104 = vector.broadcast %102 : vector<16x1xf32> to vector<16x64xf32>
    %105 = vector.broadcast %103 : vector<1x64xf32> to vector<16x64xf32>
    %106 = arith.mulf %104, %105 : vector<16x64xf32>
    %107 = tpu.concatenate %101, %106 in 1 : vector<16x64xf32>, vector<16x64xf32> -> vector<16x128xf32>
    %c0_40 = arith.constant 0 : index
    %c0_41 = arith.constant 0 : index
    %108 = vector.load %arg10[%c0_40, %c0_41] : memref<256x128xf32, #tpu.memory_space<vmem>>, vector<16x128xf32>
    tpu.vector_store %arg10[%c0_40, %c0_41], %107 {strides = array<i32>} : memref<256x128xf32, #tpu.memory_space<vmem>>, vector<16x128xf32>,
    %109 = vector.extract_strided_slice %91 {offsets = [1, 0], sizes = [1, 128], strides = [1, 1]} : vector<16x128xf32> to vector<1x128xf32>
    %110 = vector.broadcast %109 : vector<1x128xf32> to vector<16x128xf32>
    %111 = arith.mulf %88, %110 : vector<16x128xf32>
    %112 = math.exp %111 : vector<16x128xf32>
    %c16 = arith.constant 16 : index
    %c0_42 = arith.constant 0 : index
    %113 = vector.load %arg9[%c16, %c0_42] : memref<256x128xf32, #tpu.memory_space<vmem>>, vector<16x128xf32>
    tpu.vector_store %arg9[%c16, %c0_42], %112 {strides = array<i32>} : memref<256x128xf32, #tpu.memory_space<vmem>>, vector<16x128xf32>,
    %114 = vector.extract_strided_slice %86 {offsets = [0, 1], sizes = [16, 1], strides = [1, 1]} : vector<16x32xf32> to vector<16x1xf32>
    %115 = vector.extract_strided_slice %87 {offsets = [1, 0], sizes = [1, 64], strides = [1, 1]} : vector<32x64xf32> to vector<1x64xf32>
    %116 = vector.broadcast %114 : vector<16x1xf32> to vector<16x64xf32>
    %117 = vector.broadcast %115 : vector<1x64xf32> to vector<16x64xf32>
    %118 = arith.mulf %116, %117 : vector<16x64xf32>
    %119 = vector.extract_strided_slice %86 {offsets = [0, 17], sizes = [16, 1], strides = [1, 1]} : vector<16x32xf32> to vector<16x1xf32>
    %120 = vector.extract_strided_slice %87 {offsets = [17, 0], sizes = [1, 64], strides = [1, 1]} : vector<32x64xf32> to vector<1x64xf32>
    %121 = vector.broadcast %119 : vector<16x1xf32> to vector<16x64xf32>
    %122 = vector.broadcast %120 : vector<1x64xf32> to vector<16x64xf32>
    %123 = arith.mulf %121, %122 : vector<16x64xf32>
    %124 = tpu.concatenate %118, %123 in 1 : vector<16x64xf32>, vector<16x64xf32> -> vector<16x128xf32>
    %c16_43 = arith.constant 16 : index
    %c0_44 = arith.constant 0 : index
    %125 = vector.load %arg10[%c16_43, %c0_44] : memref<256x128xf32, #tpu.memory_space<vmem>>, vector<16x128xf32>
    tpu.vector_store %arg10[%c16_43, %c0_44], %124 {strides = array<i32>} : memref<256x128xf32, #tpu.memory_space<vmem>>, vector<16x128xf32>,
    %126 = vector.extract_strided_slice %91 {offsets = [2, 0], sizes = [1, 128], strides = [1, 1]} : vector<16x128xf32> to vector<1x128xf32>
    %127 = vector.broadcast %126 : vector<1x128xf32> to vector<16x128xf32>
    %128 = arith.mulf %88, %127 : vector<16x128xf32>
    %129 = math.exp %128 : vector<16x128xf32>
    %c32 = arith.constant 32 : index
    %c0_45 = arith.constant 0 : index
    %130 = vector.load %arg9[%c32, %c0_45] : memref<256x128xf32, #tpu.memory_space<vmem>>, vector<16x128xf32>
    tpu.vector_store %arg9[%c32, %c0_45], %129 {strides = array<i32>} : memref<256x128xf32, #tpu.memory_space<vmem>>, vector<16x128xf32>,
    %131 = vector.extract_strided_slice %86 {offsets = [0, 2], sizes = [16, 1], strides = [1, 1]} : vector<16x32xf32> to vector<16x1xf32>
    %132 = vector.extract_strided_slice %87 {offsets = [2, 0], sizes = [1, 64], strides = [1, 1]} : vector<32x64xf32> to vector<1x64xf32>
    %133 = vector.broadcast %131 : vector<16x1xf32> to vector<16x64xf32>
    %134 = vector.broadcast %132 : vector<1x64xf32> to vector<16x64xf32>
    %135 = arith.mulf %133, %134 : vector<16x64xf32>
    %136 = vector.extract_strided_slice %86 {offsets = [0, 18], sizes = [16, 1], strides = [1, 1]} : vector<16x32xf32> to vector<16x1xf32>
    %137 = vector.extract_strided_slice %87 {offsets = [18, 0], sizes = [1, 64], strides = [1, 1]} : vector<32x64xf32> to vector<1x64xf32>
    %138 = vector.broadcast %136 : vector<16x1xf32> to vector<16x64xf32>
    %139 = vector.broadcast %137 : vector<1x64xf32> to vector<16x64xf32>
    %140 = arith.mulf %138, %139 : vector<16x64xf32>
    %141 = tpu.concatenate %135, %140 in 1 : vector<16x64xf32>, vector<16x64xf32> -> vector<16x128xf32>
    %c32_46 = arith.constant 32 : index
    %c0_47 = arith.constant 0 : index
    %142 = vector.load %arg10[%c32_46, %c0_47] : memref<256x128xf32, #tpu.memory_space<vmem>>, vector<16x128xf32>
    tpu.vector_store %arg10[%c32_46, %c0_47], %141 {strides = array<i32>} : memref<256x128xf32, #tpu.memory_space<vmem>>, vector<16x128xf32>,
    %143 = vector.extract_strided_slice %91 {offsets = [3, 0], sizes = [1, 128], strides = [1, 1]} : vector<16x128xf32> to vector<1x128xf32>
    %144 = vector.broadcast %143 : vector<1x128xf32> to vector<16x128xf32>
    %145 = arith.mulf %88, %144 : vector<16x128xf32>
    %146 = math.exp %145 : vector<16x128xf32>
    %c48 = arith.constant 48 : index
    %c0_48 = arith.constant 0 : index
    %147 = vector.load %arg9[%c48, %c0_48] : memref<256x128xf32, #tpu.memory_space<vmem>>, vector<16x128xf32>
    tpu.vector_store %arg9[%c48, %c0_48], %146 {strides = array<i32>} : memref<256x128xf32, #tpu.memory_space<vmem>>, vector<16x128xf32>,
    %148 = vector.extract_strided_slice %86 {offsets = [0, 3], sizes = [16, 1], strides = [1, 1]} : vector<16x32xf32> to vector<16x1xf32>
    %149 = vector.extract_strided_slice %87 {offsets = [3, 0], sizes = [1, 64], strides = [1, 1]} : vector<32x64xf32> to vector<1x64xf32>
    %150 = vector.broadcast %148 : vector<16x1xf32> to vector<16x64xf32>
    %151 = vector.broadcast %149 : vector<1x64xf32> to vector<16x64xf32>
    %152 = arith.mulf %150, %151 : vector<16x64xf32>
    %153 = vector.extract_strided_slice %86 {offsets = [0, 19], sizes = [16, 1], strides = [1, 1]} : vector<16x32xf32> to vector<16x1xf32>
    %154 = vector.extract_strided_slice %87 {offsets = [19, 0], sizes = [1, 64], strides = [1, 1]} : vector<32x64xf32> to vector<1x64xf32>
    %155 = vector.broadcast %153 : vector<16x1xf32> to vector<16x64xf32>
    %156 = vector.broadcast %154 : vector<1x64xf32> to vector<16x64xf32>
    %157 = arith.mulf %155, %156 : vector<16x64xf32>
    %158 = tpu.concatenate %152, %157 in 1 : vector<16x64xf32>, vector<16x64xf32> -> vector<16x128xf32>
    %c48_49 = arith.constant 48 : index
    %c0_50 = arith.constant 0 : index
    %159 = vector.load %arg10[%c48_49, %c0_50] : memref<256x128xf32, #tpu.memory_space<vmem>>, vector<16x128xf32>
    tpu.vector_store %arg10[%c48_49, %c0_50], %158 {strides = array<i32>} : memref<256x128xf32, #tpu.memory_space<vmem>>, vector<16x128xf32>,
    %160 = vector.extract_strided_slice %91 {offsets = [4, 0], sizes = [1, 128], strides = [1, 1]} : vector<16x128xf32> to vector<1x128xf32>
    %161 = vector.broadcast %160 : vector<1x128xf32> to vector<16x128xf32>
    %162 = arith.mulf %88, %161 : vector<16x128xf32>
    %163 = math.exp %162 : vector<16x128xf32>
    %c64 = arith.constant 64 : index
    %c0_51 = arith.constant 0 : index
    %164 = vector.load %arg9[%c64, %c0_51] : memref<256x128xf32, #tpu.memory_space<vmem>>, vector<16x128xf32>
    tpu.vector_store %arg9[%c64, %c0_51], %163 {strides = array<i32>} : memref<256x128xf32, #tpu.memory_space<vmem>>, vector<16x128xf32>,
    %165 = vector.extract_strided_slice %86 {offsets = [0, 4], sizes = [16, 1], strides = [1, 1]} : vector<16x32xf32> to vector<16x1xf32>
    %166 = vector.extract_strided_slice %87 {offsets = [4, 0], sizes = [1, 64], strides = [1, 1]} : vector<32x64xf32> to vector<1x64xf32>
    %167 = vector.broadcast %165 : vector<16x1xf32> to vector<16x64xf32>
    %168 = vector.broadcast %166 : vector<1x64xf32> to vector<16x64xf32>
    %169 = arith.mulf %167, %168 : vector<16x64xf32>
    %170 = vector.extract_strided_slice %86 {offsets = [0, 20], sizes = [16, 1], strides = [1, 1]} : vector<16x32xf32> to vector<16x1xf32>
    %171 = vector.extract_strided_slice %87 {offsets = [20, 0], sizes = [1, 64], strides = [1, 1]} : vector<32x64xf32> to vector<1x64xf32>
    %172 = vector.broadcast %170 : vector<16x1xf32> to vector<16x64xf32>
    %173 = vector.broadcast %171 : vector<1x64xf32> to vector<16x64xf32>
    %174 = arith.mulf %172, %173 : vector<16x64xf32>
    %175 = tpu.concatenate %169, %174 in 1 : vector<16x64xf32>, vector<16x64xf32> -> vector<16x128xf32>
    %c64_52 = arith.constant 64 : index
    %c0_53 = arith.constant 0 : index
    %176 = vector.load %arg10[%c64_52, %c0_53] : memref<256x128xf32, #tpu.memory_space<vmem>>, vector<16x128xf32>
    tpu.vector_store %arg10[%c64_52, %c0_53], %175 {strides = array<i32>} : memref<256x128xf32, #tpu.memory_space<vmem>>, vector<16x128xf32>,
    %177 = vector.extract_strided_slice %91 {offsets = [5, 0], sizes = [1, 128], strides = [1, 1]} : vector<16x128xf32> to vector<1x128xf32>
    %178 = vector.broadcast %177 : vector<1x128xf32> to vector<16x128xf32>
    %179 = arith.mulf %88, %178 : vector<16x128xf32>
    %180 = math.exp %179 : vector<16x128xf32>
    %c80 = arith.constant 80 : index
    %c0_54 = arith.constant 0 : index
    %181 = vector.load %arg9[%c80, %c0_54] : memref<256x128xf32, #tpu.memory_space<vmem>>, vector<16x128xf32>
    tpu.vector_store %arg9[%c80, %c0_54], %180 {strides = array<i32>} : memref<256x128xf32, #tpu.memory_space<vmem>>, vector<16x128xf32>,
    %182 = vector.extract_strided_slice %86 {offsets = [0, 5], sizes = [16, 1], strides = [1, 1]} : vector<16x32xf32> to vector<16x1xf32>
    %183 = vector.extract_strided_slice %87 {offsets = [5, 0], sizes = [1, 64], strides = [1, 1]} : vector<32x64xf32> to vector<1x64xf32>
    %184 = vector.broadcast %182 : vector<16x1xf32> to vector<16x64xf32>
    %185 = vector.broadcast %183 : vector<1x64xf32> to vector<16x64xf32>
    %186 = arith.mulf %184, %185 : vector<16x64xf32>
    %187 = vector.extract_strided_slice %86 {offsets = [0, 21], sizes = [16, 1], strides = [1, 1]} : vector<16x32xf32> to vector<16x1xf32>
    %188 = vector.extract_strided_slice %87 {offsets = [21, 0], sizes = [1, 64], strides = [1, 1]} : vector<32x64xf32> to vector<1x64xf32>
    %189 = vector.broadcast %187 : vector<16x1xf32> to vector<16x64xf32>
    %190 = vector.broadcast %188 : vector<1x64xf32> to vector<16x64xf32>
    %191 = arith.mulf %189, %190 : vector<16x64xf32>
    %192 = tpu.concatenate %186, %191 in 1 : vector<16x64xf32>, vector<16x64xf32> -> vector<16x128xf32>
    %c80_55 = arith.constant 80 : index
    %c0_56 = arith.constant 0 : index
    %193 = vector.load %arg10[%c80_55, %c0_56] : memref<256x128xf32, #tpu.memory_space<vmem>>, vector<16x128xf32>
    tpu.vector_store %arg10[%c80_55, %c0_56], %192 {strides = array<i32>} : memref<256x128xf32, #tpu.memory_space<vmem>>, vector<16x128xf32>,
    %194 = vector.extract_strided_slice %91 {offsets = [6, 0], sizes = [1, 128], strides = [1, 1]} : vector<16x128xf32> to vector<1x128xf32>
    %195 = vector.broadcast %194 : vector<1x128xf32> to vector<16x128xf32>
    %196 = arith.mulf %88, %195 : vector<16x128xf32>
    %197 = math.exp %196 : vector<16x128xf32>
    %c96 = arith.constant 96 : index
    %c0_57 = arith.constant 0 : index
    %198 = vector.load %arg9[%c96, %c0_57] : memref<256x128xf32, #tpu.memory_space<vmem>>, vector<16x128xf32>
    tpu.vector_store %arg9[%c96, %c0_57], %197 {strides = array<i32>} : memref<256x128xf32, #tpu.memory_space<vmem>>, vector<16x128xf32>,
    %199 = vector.extract_strided_slice %86 {offsets = [0, 6], sizes = [16, 1], strides = [1, 1]} : vector<16x32xf32> to vector<16x1xf32>
    %200 = vector.extract_strided_slice %87 {offsets = [6, 0], sizes = [1, 64], strides = [1, 1]} : vector<32x64xf32> to vector<1x64xf32>
    %201 = vector.broadcast %199 : vector<16x1xf32> to vector<16x64xf32>
    %202 = vector.broadcast %200 : vector<1x64xf32> to vector<16x64xf32>
    %203 = arith.mulf %201, %202 : vector<16x64xf32>
    %204 = vector.extract_strided_slice %86 {offsets = [0, 22], sizes = [16, 1], strides = [1, 1]} : vector<16x32xf32> to vector<16x1xf32>
    %205 = vector.extract_strided_slice %87 {offsets = [22, 0], sizes = [1, 64], strides = [1, 1]} : vector<32x64xf32> to vector<1x64xf32>
    %206 = vector.broadcast %204 : vector<16x1xf32> to vector<16x64xf32>
    %207 = vector.broadcast %205 : vector<1x64xf32> to vector<16x64xf32>
    %208 = arith.mulf %206, %207 : vector<16x64xf32>
    %209 = tpu.concatenate %203, %208 in 1 : vector<16x64xf32>, vector<16x64xf32> -> vector<16x128xf32>
    %c96_58 = arith.constant 96 : index
    %c0_59 = arith.constant 0 : index
    %210 = vector.load %arg10[%c96_58, %c0_59] : memref<256x128xf32, #tpu.memory_space<vmem>>, vector<16x128xf32>
    tpu.vector_store %arg10[%c96_58, %c0_59], %209 {strides = array<i32>} : memref<256x128xf32, #tpu.memory_space<vmem>>, vector<16x128xf32>,
    %211 = vector.extract_strided_slice %91 {offsets = [7, 0], sizes = [1, 128], strides = [1, 1]} : vector<16x128xf32> to vector<1x128xf32>
    %212 = vector.broadcast %211 : vector<1x128xf32> to vector<16x128xf32>
    %213 = arith.mulf %88, %212 : vector<16x128xf32>
    %214 = math.exp %213 : vector<16x128xf32>
    %c112 = arith.constant 112 : index
    %c0_60 = arith.constant 0 : index
    %215 = vector.load %arg9[%c112, %c0_60] : memref<256x128xf32, #tpu.memory_space<vmem>>, vector<16x128xf32>
    tpu.vector_store %arg9[%c112, %c0_60], %214 {strides = array<i32>} : memref<256x128xf32, #tpu.memory_space<vmem>>, vector<16x128xf32>,
    %216 = vector.extract_strided_slice %86 {offsets = [0, 7], sizes = [16, 1], strides = [1, 1]} : vector<16x32xf32> to vector<16x1xf32>
    %217 = vector.extract_strided_slice %87 {offsets = [7, 0], sizes = [1, 64], strides = [1, 1]} : vector<32x64xf32> to vector<1x64xf32>
    %218 = vector.broadcast %216 : vector<16x1xf32> to vector<16x64xf32>
    %219 = vector.broadcast %217 : vector<1x64xf32> to vector<16x64xf32>
    %220 = arith.mulf %218, %219 : vector<16x64xf32>
    %221 = vector.extract_strided_slice %86 {offsets = [0, 23], sizes = [16, 1], strides = [1, 1]} : vector<16x32xf32> to vector<16x1xf32>
    %222 = vector.extract_strided_slice %87 {offsets = [23, 0], sizes = [1, 64], strides = [1, 1]} : vector<32x64xf32> to vector<1x64xf32>
    %223 = vector.broadcast %221 : vector<16x1xf32> to vector<16x64xf32>
    %224 = vector.broadcast %222 : vector<1x64xf32> to vector<16x64xf32>
    %225 = arith.mulf %223, %224 : vector<16x64xf32>
    %226 = tpu.concatenate %220, %225 in 1 : vector<16x64xf32>, vector<16x64xf32> -> vector<16x128xf32>
    %c112_61 = arith.constant 112 : index
    %c0_62 = arith.constant 0 : index
    %227 = vector.load %arg10[%c112_61, %c0_62] : memref<256x128xf32, #tpu.memory_space<vmem>>, vector<16x128xf32>
    tpu.vector_store %arg10[%c112_61, %c0_62], %226 {strides = array<i32>} : memref<256x128xf32, #tpu.memory_space<vmem>>, vector<16x128xf32>,
    %228 = vector.extract_strided_slice %91 {offsets = [8, 0], sizes = [1, 128], strides = [1, 1]} : vector<16x128xf32> to vector<1x128xf32>
    %229 = vector.broadcast %228 : vector<1x128xf32> to vector<16x128xf32>
    %230 = arith.mulf %88, %229 : vector<16x128xf32>
    %231 = math.exp %230 : vector<16x128xf32>
    %c128 = arith.constant 128 : index
    %c0_63 = arith.constant 0 : index
    %232 = vector.load %arg9[%c128, %c0_63] : memref<256x128xf32, #tpu.memory_space<vmem>>, vector<16x128xf32>
    tpu.vector_store %arg9[%c128, %c0_63], %231 {strides = array<i32>} : memref<256x128xf32, #tpu.memory_space<vmem>>, vector<16x128xf32>,
    %233 = vector.extract_strided_slice %86 {offsets = [0, 8], sizes = [16, 1], strides = [1, 1]} : vector<16x32xf32> to vector<16x1xf32>
    %234 = vector.extract_strided_slice %87 {offsets = [8, 0], sizes = [1, 64], strides = [1, 1]} : vector<32x64xf32> to vector<1x64xf32>
    %235 = vector.broadcast %233 : vector<16x1xf32> to vector<16x64xf32>
    %236 = vector.broadcast %234 : vector<1x64xf32> to vector<16x64xf32>
    %237 = arith.mulf %235, %236 : vector<16x64xf32>
    %238 = vector.extract_strided_slice %86 {offsets = [0, 24], sizes = [16, 1], strides = [1, 1]} : vector<16x32xf32> to vector<16x1xf32>
    %239 = vector.extract_strided_slice %87 {offsets = [24, 0], sizes = [1, 64], strides = [1, 1]} : vector<32x64xf32> to vector<1x64xf32>
    %240 = vector.broadcast %238 : vector<16x1xf32> to vector<16x64xf32>
    %241 = vector.broadcast %239 : vector<1x64xf32> to vector<16x64xf32>
    %242 = arith.mulf %240, %241 : vector<16x64xf32>
    %243 = tpu.concatenate %237, %242 in 1 : vector<16x64xf32>, vector<16x64xf32> -> vector<16x128xf32>
    %c128_64 = arith.constant 128 : index
    %c0_65 = arith.constant 0 : index
    %244 = vector.load %arg10[%c128_64, %c0_65] : memref<256x128xf32, #tpu.memory_space<vmem>>, vector<16x128xf32>
    tpu.vector_store %arg10[%c128_64, %c0_65], %243 {strides = array<i32>} : memref<256x128xf32, #tpu.memory_space<vmem>>, vector<16x128xf32>,
    %245 = vector.extract_strided_slice %91 {offsets = [9, 0], sizes = [1, 128], strides = [1, 1]} : vector<16x128xf32> to vector<1x128xf32>
    %246 = vector.broadcast %245 : vector<1x128xf32> to vector<16x128xf32>
    %247 = arith.mulf %88, %246 : vector<16x128xf32>
    %248 = math.exp %247 : vector<16x128xf32>
    %c144 = arith.constant 144 : index
    %c0_66 = arith.constant 0 : index
    %249 = vector.load %arg9[%c144, %c0_66] : memref<256x128xf32, #tpu.memory_space<vmem>>, vector<16x128xf32>
    tpu.vector_store %arg9[%c144, %c0_66], %248 {strides = array<i32>} : memref<256x128xf32, #tpu.memory_space<vmem>>, vector<16x128xf32>,
    %250 = vector.extract_strided_slice %86 {offsets = [0, 9], sizes = [16, 1], strides = [1, 1]} : vector<16x32xf32> to vector<16x1xf32>
    %251 = vector.extract_strided_slice %87 {offsets = [9, 0], sizes = [1, 64], strides = [1, 1]} : vector<32x64xf32> to vector<1x64xf32>
    %252 = vector.broadcast %250 : vector<16x1xf32> to vector<16x64xf32>
    %253 = vector.broadcast %251 : vector<1x64xf32> to vector<16x64xf32>
    %254 = arith.mulf %252, %253 : vector<16x64xf32>
    %255 = vector.extract_strided_slice %86 {offsets = [0, 25], sizes = [16, 1], strides = [1, 1]} : vector<16x32xf32> to vector<16x1xf32>
    %256 = vector.extract_strided_slice %87 {offsets = [25, 0], sizes = [1, 64], strides = [1, 1]} : vector<32x64xf32> to vector<1x64xf32>
    %257 = vector.broadcast %255 : vector<16x1xf32> to vector<16x64xf32>
    %258 = vector.broadcast %256 : vector<1x64xf32> to vector<16x64xf32>
    %259 = arith.mulf %257, %258 : vector<16x64xf32>
    %260 = tpu.concatenate %254, %259 in 1 : vector<16x64xf32>, vector<16x64xf32> -> vector<16x128xf32>
    %c144_67 = arith.constant 144 : index
    %c0_68 = arith.constant 0 : index
    %261 = vector.load %arg10[%c144_67, %c0_68] : memref<256x128xf32, #tpu.memory_space<vmem>>, vector<16x128xf32>
    tpu.vector_store %arg10[%c144_67, %c0_68], %260 {strides = array<i32>} : memref<256x128xf32, #tpu.memory_space<vmem>>, vector<16x128xf32>,
    %262 = vector.extract_strided_slice %91 {offsets = [10, 0], sizes = [1, 128], strides = [1, 1]} : vector<16x128xf32> to vector<1x128xf32>
    %263 = vector.broadcast %262 : vector<1x128xf32> to vector<16x128xf32>
    %264 = arith.mulf %88, %263 : vector<16x128xf32>
    %265 = math.exp %264 : vector<16x128xf32>
    %c160 = arith.constant 160 : index
    %c0_69 = arith.constant 0 : index
    %266 = vector.load %arg9[%c160, %c0_69] : memref<256x128xf32, #tpu.memory_space<vmem>>, vector<16x128xf32>
    tpu.vector_store %arg9[%c160, %c0_69], %265 {strides = array<i32>} : memref<256x128xf32, #tpu.memory_space<vmem>>, vector<16x128xf32>,
    %267 = vector.extract_strided_slice %86 {offsets = [0, 10], sizes = [16, 1], strides = [1, 1]} : vector<16x32xf32> to vector<16x1xf32>
    %268 = vector.extract_strided_slice %87 {offsets = [10, 0], sizes = [1, 64], strides = [1, 1]} : vector<32x64xf32> to vector<1x64xf32>
    %269 = vector.broadcast %267 : vector<16x1xf32> to vector<16x64xf32>
    %270 = vector.broadcast %268 : vector<1x64xf32> to vector<16x64xf32>
    %271 = arith.mulf %269, %270 : vector<16x64xf32>
    %272 = vector.extract_strided_slice %86 {offsets = [0, 26], sizes = [16, 1], strides = [1, 1]} : vector<16x32xf32> to vector<16x1xf32>
    %273 = vector.extract_strided_slice %87 {offsets = [26, 0], sizes = [1, 64], strides = [1, 1]} : vector<32x64xf32> to vector<1x64xf32>
    %274 = vector.broadcast %272 : vector<16x1xf32> to vector<16x64xf32>
    %275 = vector.broadcast %273 : vector<1x64xf32> to vector<16x64xf32>
    %276 = arith.mulf %274, %275 : vector<16x64xf32>
    %277 = tpu.concatenate %271, %276 in 1 : vector<16x64xf32>, vector<16x64xf32> -> vector<16x128xf32>
    %c160_70 = arith.constant 160 : index
    %c0_71 = arith.constant 0 : index
    %278 = vector.load %arg10[%c160_70, %c0_71] : memref<256x128xf32, #tpu.memory_space<vmem>>, vector<16x128xf32>
    tpu.vector_store %arg10[%c160_70, %c0_71], %277 {strides = array<i32>} : memref<256x128xf32, #tpu.memory_space<vmem>>, vector<16x128xf32>,
    %279 = vector.extract_strided_slice %91 {offsets = [11, 0], sizes = [1, 128], strides = [1, 1]} : vector<16x128xf32> to vector<1x128xf32>
    %280 = vector.broadcast %279 : vector<1x128xf32> to vector<16x128xf32>
    %281 = arith.mulf %88, %280 : vector<16x128xf32>
    %282 = math.exp %281 : vector<16x128xf32>
    %c176 = arith.constant 176 : index
    %c0_72 = arith.constant 0 : index
    %283 = vector.load %arg9[%c176, %c0_72] : memref<256x128xf32, #tpu.memory_space<vmem>>, vector<16x128xf32>
    tpu.vector_store %arg9[%c176, %c0_72], %282 {strides = array<i32>} : memref<256x128xf32, #tpu.memory_space<vmem>>, vector<16x128xf32>,
    %284 = vector.extract_strided_slice %86 {offsets = [0, 11], sizes = [16, 1], strides = [1, 1]} : vector<16x32xf32> to vector<16x1xf32>
    %285 = vector.extract_strided_slice %87 {offsets = [11, 0], sizes = [1, 64], strides = [1, 1]} : vector<32x64xf32> to vector<1x64xf32>
    %286 = vector.broadcast %284 : vector<16x1xf32> to vector<16x64xf32>
    %287 = vector.broadcast %285 : vector<1x64xf32> to vector<16x64xf32>
    %288 = arith.mulf %286, %287 : vector<16x64xf32>
    %289 = vector.extract_strided_slice %86 {offsets = [0, 27], sizes = [16, 1], strides = [1, 1]} : vector<16x32xf32> to vector<16x1xf32>
    %290 = vector.extract_strided_slice %87 {offsets = [27, 0], sizes = [1, 64], strides = [1, 1]} : vector<32x64xf32> to vector<1x64xf32>
    %291 = vector.broadcast %289 : vector<16x1xf32> to vector<16x64xf32>
    %292 = vector.broadcast %290 : vector<1x64xf32> to vector<16x64xf32>
    %293 = arith.mulf %291, %292 : vector<16x64xf32>
    %294 = tpu.concatenate %288, %293 in 1 : vector<16x64xf32>, vector<16x64xf32> -> vector<16x128xf32>
    %c176_73 = arith.constant 176 : index
    %c0_74 = arith.constant 0 : index
    %295 = vector.load %arg10[%c176_73, %c0_74] : memref<256x128xf32, #tpu.memory_space<vmem>>, vector<16x128xf32>
    tpu.vector_store %arg10[%c176_73, %c0_74], %294 {strides = array<i32>} : memref<256x128xf32, #tpu.memory_space<vmem>>, vector<16x128xf32>,
    %296 = vector.extract_strided_slice %91 {offsets = [12, 0], sizes = [1, 128], strides = [1, 1]} : vector<16x128xf32> to vector<1x128xf32>
    %297 = vector.broadcast %296 : vector<1x128xf32> to vector<16x128xf32>
    %298 = arith.mulf %88, %297 : vector<16x128xf32>
    %299 = math.exp %298 : vector<16x128xf32>
    %c192 = arith.constant 192 : index
    %c0_75 = arith.constant 0 : index
    %300 = vector.load %arg9[%c192, %c0_75] : memref<256x128xf32, #tpu.memory_space<vmem>>, vector<16x128xf32>
    tpu.vector_store %arg9[%c192, %c0_75], %299 {strides = array<i32>} : memref<256x128xf32, #tpu.memory_space<vmem>>, vector<16x128xf32>,
    %301 = vector.extract_strided_slice %86 {offsets = [0, 12], sizes = [16, 1], strides = [1, 1]} : vector<16x32xf32> to vector<16x1xf32>
    %302 = vector.extract_strided_slice %87 {offsets = [12, 0], sizes = [1, 64], strides = [1, 1]} : vector<32x64xf32> to vector<1x64xf32>
    %303 = vector.broadcast %301 : vector<16x1xf32> to vector<16x64xf32>
    %304 = vector.broadcast %302 : vector<1x64xf32> to vector<16x64xf32>
    %305 = arith.mulf %303, %304 : vector<16x64xf32>
    %306 = vector.extract_strided_slice %86 {offsets = [0, 28], sizes = [16, 1], strides = [1, 1]} : vector<16x32xf32> to vector<16x1xf32>
    %307 = vector.extract_strided_slice %87 {offsets = [28, 0], sizes = [1, 64], strides = [1, 1]} : vector<32x64xf32> to vector<1x64xf32>
    %308 = vector.broadcast %306 : vector<16x1xf32> to vector<16x64xf32>
    %309 = vector.broadcast %307 : vector<1x64xf32> to vector<16x64xf32>
    %310 = arith.mulf %308, %309 : vector<16x64xf32>
    %311 = tpu.concatenate %305, %310 in 1 : vector<16x64xf32>, vector<16x64xf32> -> vector<16x128xf32>
    %c192_76 = arith.constant 192 : index
    %c0_77 = arith.constant 0 : index
    %312 = vector.load %arg10[%c192_76, %c0_77] : memref<256x128xf32, #tpu.memory_space<vmem>>, vector<16x128xf32>
    tpu.vector_store %arg10[%c192_76, %c0_77], %311 {strides = array<i32>} : memref<256x128xf32, #tpu.memory_space<vmem>>, vector<16x128xf32>,
    %313 = vector.extract_strided_slice %91 {offsets = [13, 0], sizes = [1, 128], strides = [1, 1]} : vector<16x128xf32> to vector<1x128xf32>
    %314 = vector.broadcast %313 : vector<1x128xf32> to vector<16x128xf32>
    %315 = arith.mulf %88, %314 : vector<16x128xf32>
    %316 = math.exp %315 : vector<16x128xf32>
    %c208 = arith.constant 208 : index
    %c0_78 = arith.constant 0 : index
    %317 = vector.load %arg9[%c208, %c0_78] : memref<256x128xf32, #tpu.memory_space<vmem>>, vector<16x128xf32>
    tpu.vector_store %arg9[%c208, %c0_78], %316 {strides = array<i32>} : memref<256x128xf32, #tpu.memory_space<vmem>>, vector<16x128xf32>,
    %318 = vector.extract_strided_slice %86 {offsets = [0, 13], sizes = [16, 1], strides = [1, 1]} : vector<16x32xf32> to vector<16x1xf32>
    %319 = vector.extract_strided_slice %87 {offsets = [13, 0], sizes = [1, 64], strides = [1, 1]} : vector<32x64xf32> to vector<1x64xf32>
    %320 = vector.broadcast %318 : vector<16x1xf32> to vector<16x64xf32>
    %321 = vector.broadcast %319 : vector<1x64xf32> to vector<16x64xf32>
    %322 = arith.mulf %320, %321 : vector<16x64xf32>
    %323 = vector.extract_strided_slice %86 {offsets = [0, 29], sizes = [16, 1], strides = [1, 1]} : vector<16x32xf32> to vector<16x1xf32>
    %324 = vector.extract_strided_slice %87 {offsets = [29, 0], sizes = [1, 64], strides = [1, 1]} : vector<32x64xf32> to vector<1x64xf32>
    %325 = vector.broadcast %323 : vector<16x1xf32> to vector<16x64xf32>
    %326 = vector.broadcast %324 : vector<1x64xf32> to vector<16x64xf32>
    %327 = arith.mulf %325, %326 : vector<16x64xf32>
    %328 = tpu.concatenate %322, %327 in 1 : vector<16x64xf32>, vector<16x64xf32> -> vector<16x128xf32>
    %c208_79 = arith.constant 208 : index
    %c0_80 = arith.constant 0 : index
    %329 = vector.load %arg10[%c208_79, %c0_80] : memref<256x128xf32, #tpu.memory_space<vmem>>, vector<16x128xf32>
    tpu.vector_store %arg10[%c208_79, %c0_80], %328 {strides = array<i32>} : memref<256x128xf32, #tpu.memory_space<vmem>>, vector<16x128xf32>,
    %330 = vector.extract_strided_slice %91 {offsets = [14, 0], sizes = [1, 128], strides = [1, 1]} : vector<16x128xf32> to vector<1x128xf32>
    %331 = vector.broadcast %330 : vector<1x128xf32> to vector<16x128xf32>
    %332 = arith.mulf %88, %331 : vector<16x128xf32>
    %333 = math.exp %332 : vector<16x128xf32>
    %c224 = arith.constant 224 : index
    %c0_81 = arith.constant 0 : index
    %334 = vector.load %arg9[%c224, %c0_81] : memref<256x128xf32, #tpu.memory_space<vmem>>, vector<16x128xf32>
    tpu.vector_store %arg9[%c224, %c0_81], %333 {strides = array<i32>} : memref<256x128xf32, #tpu.memory_space<vmem>>, vector<16x128xf32>,
    %335 = vector.extract_strided_slice %86 {offsets = [0, 14], sizes = [16, 1], strides = [1, 1]} : vector<16x32xf32> to vector<16x1xf32>
    %336 = vector.extract_strided_slice %87 {offsets = [14, 0], sizes = [1, 64], strides = [1, 1]} : vector<32x64xf32> to vector<1x64xf32>
    %337 = vector.broadcast %335 : vector<16x1xf32> to vector<16x64xf32>
    %338 = vector.broadcast %336 : vector<1x64xf32> to vector<16x64xf32>
    %339 = arith.mulf %337, %338 : vector<16x64xf32>
    %340 = vector.extract_strided_slice %86 {offsets = [0, 30], sizes = [16, 1], strides = [1, 1]} : vector<16x32xf32> to vector<16x1xf32>
    %341 = vector.extract_strided_slice %87 {offsets = [30, 0], sizes = [1, 64], strides = [1, 1]} : vector<32x64xf32> to vector<1x64xf32>
    %342 = vector.broadcast %340 : vector<16x1xf32> to vector<16x64xf32>
    %343 = vector.broadcast %341 : vector<1x64xf32> to vector<16x64xf32>
    %344 = arith.mulf %342, %343 : vector<16x64xf32>
    %345 = tpu.concatenate %339, %344 in 1 : vector<16x64xf32>, vector<16x64xf32> -> vector<16x128xf32>
    %c224_82 = arith.constant 224 : index
    %c0_83 = arith.constant 0 : index
    %346 = vector.load %arg10[%c224_82, %c0_83] : memref<256x128xf32, #tpu.memory_space<vmem>>, vector<16x128xf32>
    tpu.vector_store %arg10[%c224_82, %c0_83], %345 {strides = array<i32>} : memref<256x128xf32, #tpu.memory_space<vmem>>, vector<16x128xf32>,
    %347 = vector.extract_strided_slice %91 {offsets = [15, 0], sizes = [1, 128], strides = [1, 1]} : vector<16x128xf32> to vector<1x128xf32>
    %348 = vector.broadcast %347 : vector<1x128xf32> to vector<16x128xf32>
    %349 = arith.mulf %88, %348 : vector<16x128xf32>
    %350 = math.exp %349 : vector<16x128xf32>
    %c240 = arith.constant 240 : index
    %c0_84 = arith.constant 0 : index
    %351 = vector.load %arg9[%c240, %c0_84] : memref<256x128xf32, #tpu.memory_space<vmem>>, vector<16x128xf32>
    tpu.vector_store %arg9[%c240, %c0_84], %350 {strides = array<i32>} : memref<256x128xf32, #tpu.memory_space<vmem>>, vector<16x128xf32>,
    %352 = vector.extract_strided_slice %86 {offsets = [0, 15], sizes = [16, 1], strides = [1, 1]} : vector<16x32xf32> to vector<16x1xf32>
    %353 = vector.extract_strided_slice %87 {offsets = [15, 0], sizes = [1, 64], strides = [1, 1]} : vector<32x64xf32> to vector<1x64xf32>
    %354 = vector.broadcast %352 : vector<16x1xf32> to vector<16x64xf32>
    %355 = vector.broadcast %353 : vector<1x64xf32> to vector<16x64xf32>
    %356 = arith.mulf %354, %355 : vector<16x64xf32>
    %357 = vector.extract_strided_slice %86 {offsets = [0, 31], sizes = [16, 1], strides = [1, 1]} : vector<16x32xf32> to vector<16x1xf32>
    %358 = vector.extract_strided_slice %87 {offsets = [31, 0], sizes = [1, 64], strides = [1, 1]} : vector<32x64xf32> to vector<1x64xf32>
    %359 = vector.broadcast %357 : vector<16x1xf32> to vector<16x64xf32>
    %360 = vector.broadcast %358 : vector<1x64xf32> to vector<16x64xf32>
    %361 = arith.mulf %359, %360 : vector<16x64xf32>
    %362 = tpu.concatenate %356, %361 in 1 : vector<16x64xf32>, vector<16x64xf32> -> vector<16x128xf32>
    %c240_85 = arith.constant 240 : index
    %c0_86 = arith.constant 0 : index
    %363 = vector.load %arg10[%c240_85, %c0_86] : memref<256x128xf32, #tpu.memory_space<vmem>>, vector<16x128xf32>
    tpu.vector_store %arg10[%c240_85, %c0_86], %362 {strides = array<i32>} : memref<256x128xf32, #tpu.memory_space<vmem>>, vector<16x128xf32>,
    %cst_87 = arith.constant 0.000000e+00 : f32
    %364 = vector.broadcast %cst_87 : f32 to vector<16x128xf32>
    %c0_88 = arith.constant 0 : index
    %c0_89 = arith.constant 0 : index
    %365 = vector.load %arg9[%c0_88, %c0_89] : memref<256x128xf32, #tpu.memory_space<vmem>>, vector<16x128xf32>
    %366 = arith.mulf %365, %364 : vector<16x128xf32>
    %c0_90 = arith.constant 0 : index
    %c0_91 = arith.constant 0 : index
    %367 = vector.load %arg10[%c0_90, %c0_91] : memref<256x128xf32, #tpu.memory_space<vmem>>, vector<16x128xf32>
    %368 = arith.addf %366, %367 : vector<16x128xf32>
    %c0_92 = arith.constant 0 : index
    %c0_93 = arith.constant 0 : index
    %369 = vector.load %arg11[%c0_92, %c0_93] : memref<256x128xf32, #tpu.memory_space<vmem>>, vector<16x128xf32>
    tpu.vector_store %arg11[%c0_92, %c0_93], %368 {strides = array<i32>} : memref<256x128xf32, #tpu.memory_space<vmem>>, vector<16x128xf32>,
    %c16_94 = arith.constant 16 : index
    %c0_95 = arith.constant 0 : index
    %370 = vector.load %arg9[%c16_94, %c0_95] : memref<256x128xf32, #tpu.memory_space<vmem>>, vector<16x128xf32>
    %371 = arith.mulf %370, %368 : vector<16x128xf32>
    %c16_96 = arith.constant 16 : index
    %c0_97 = arith.constant 0 : index
    %372 = vector.load %arg10[%c16_96, %c0_97] : memref<256x128xf32, #tpu.memory_space<vmem>>, vector<16x128xf32>
    %373 = arith.addf %371, %372 : vector<16x128xf32>
    %c16_98 = arith.constant 16 : index
    %c0_99 = arith.constant 0 : index
    %374 = vector.load %arg11[%c16_98, %c0_99] : memref<256x128xf32, #tpu.memory_space<vmem>>, vector<16x128xf32>
    tpu.vector_store %arg11[%c16_98, %c0_99], %373 {strides = array<i32>} : memref<256x128xf32, #tpu.memory_space<vmem>>, vector<16x128xf32>,
    %c32_100 = arith.constant 32 : index
    %c0_101 = arith.constant 0 : index
    %375 = vector.load %arg9[%c32_100, %c0_101] : memref<256x128xf32, #tpu.memory_space<vmem>>, vector<16x128xf32>
    %376 = arith.mulf %375, %373 : vector<16x128xf32>
    %c32_102 = arith.constant 32 : index
    %c0_103 = arith.constant 0 : index
    %377 = vector.load %arg10[%c32_102, %c0_103] : memref<256x128xf32, #tpu.memory_space<vmem>>, vector<16x128xf32>
    %378 = arith.addf %376, %377 : vector<16x128xf32>
    %c32_104 = arith.constant 32 : index
    %c0_105 = arith.constant 0 : index
    %379 = vector.load %arg11[%c32_104, %c0_105] : memref<256x128xf32, #tpu.memory_space<vmem>>, vector<16x128xf32>
    tpu.vector_store %arg11[%c32_104, %c0_105], %378 {strides = array<i32>} : memref<256x128xf32, #tpu.memory_space<vmem>>, vector<16x128xf32>,
    %c48_106 = arith.constant 48 : index
    %c0_107 = arith.constant 0 : index
    %380 = vector.load %arg9[%c48_106, %c0_107] : memref<256x128xf32, #tpu.memory_space<vmem>>, vector<16x128xf32>
    %381 = arith.mulf %380, %378 : vector<16x128xf32>
    %c48_108 = arith.constant 48 : index
    %c0_109 = arith.constant 0 : index
    %382 = vector.load %arg10[%c48_108, %c0_109] : memref<256x128xf32, #tpu.memory_space<vmem>>, vector<16x128xf32>
    %383 = arith.addf %381, %382 : vector<16x128xf32>
    %c48_110 = arith.constant 48 : index
    %c0_111 = arith.constant 0 : index
    %384 = vector.load %arg11[%c48_110, %c0_111] : memref<256x128xf32, #tpu.memory_space<vmem>>, vector<16x128xf32>
    tpu.vector_store %arg11[%c48_110, %c0_111], %383 {strides = array<i32>} : memref<256x128xf32, #tpu.memory_space<vmem>>, vector<16x128xf32>,
    %c64_112 = arith.constant 64 : index
    %c0_113 = arith.constant 0 : index
    %385 = vector.load %arg9[%c64_112, %c0_113] : memref<256x128xf32, #tpu.memory_space<vmem>>, vector<16x128xf32>
    %386 = arith.mulf %385, %383 : vector<16x128xf32>
    %c64_114 = arith.constant 64 : index
    %c0_115 = arith.constant 0 : index
    %387 = vector.load %arg10[%c64_114, %c0_115] : memref<256x128xf32, #tpu.memory_space<vmem>>, vector<16x128xf32>
    %388 = arith.addf %386, %387 : vector<16x128xf32>
    %c64_116 = arith.constant 64 : index
    %c0_117 = arith.constant 0 : index
    %389 = vector.load %arg11[%c64_116, %c0_117] : memref<256x128xf32, #tpu.memory_space<vmem>>, vector<16x128xf32>
    tpu.vector_store %arg11[%c64_116, %c0_117], %388 {strides = array<i32>} : memref<256x128xf32, #tpu.memory_space<vmem>>, vector<16x128xf32>,
    %c80_118 = arith.constant 80 : index
    %c0_119 = arith.constant 0 : index
    %390 = vector.load %arg9[%c80_118, %c0_119] : memref<256x128xf32, #tpu.memory_space<vmem>>, vector<16x128xf32>
    %391 = arith.mulf %390, %388 : vector<16x128xf32>
    %c80_120 = arith.constant 80 : index
    %c0_121 = arith.constant 0 : index
    %392 = vector.load %arg10[%c80_120, %c0_121] : memref<256x128xf32, #tpu.memory_space<vmem>>, vector<16x128xf32>
    %393 = arith.addf %391, %392 : vector<16x128xf32>
    %c80_122 = arith.constant 80 : index
    %c0_123 = arith.constant 0 : index
    %394 = vector.load %arg11[%c80_122, %c0_123] : memref<256x128xf32, #tpu.memory_space<vmem>>, vector<16x128xf32>
    tpu.vector_store %arg11[%c80_122, %c0_123], %393 {strides = array<i32>} : memref<256x128xf32, #tpu.memory_space<vmem>>, vector<16x128xf32>,
    %c96_124 = arith.constant 96 : index
    %c0_125 = arith.constant 0 : index
    %395 = vector.load %arg9[%c96_124, %c0_125] : memref<256x128xf32, #tpu.memory_space<vmem>>, vector<16x128xf32>
    %396 = arith.mulf %395, %393 : vector<16x128xf32>
    %c96_126 = arith.constant 96 : index
    %c0_127 = arith.constant 0 : index
    %397 = vector.load %arg10[%c96_126, %c0_127] : memref<256x128xf32, #tpu.memory_space<vmem>>, vector<16x128xf32>
    %398 = arith.addf %396, %397 : vector<16x128xf32>
    %c96_128 = arith.constant 96 : index
    %c0_129 = arith.constant 0 : index
    %399 = vector.load %arg11[%c96_128, %c0_129] : memref<256x128xf32, #tpu.memory_space<vmem>>, vector<16x128xf32>
    tpu.vector_store %arg11[%c96_128, %c0_129], %398 {strides = array<i32>} : memref<256x128xf32, #tpu.memory_space<vmem>>, vector<16x128xf32>,
    %c112_130 = arith.constant 112 : index
    %c0_131 = arith.constant 0 : index
    %400 = vector.load %arg9[%c112_130, %c0_131] : memref<256x128xf32, #tpu.memory_space<vmem>>, vector<16x128xf32>
    %401 = arith.mulf %400, %398 : vector<16x128xf32>
    %c112_132 = arith.constant 112 : index
    %c0_133 = arith.constant 0 : index
    %402 = vector.load %arg10[%c112_132, %c0_133] : memref<256x128xf32, #tpu.memory_space<vmem>>, vector<16x128xf32>
    %403 = arith.addf %401, %402 : vector<16x128xf32>
    %c112_134 = arith.constant 112 : index
    %c0_135 = arith.constant 0 : index
    %404 = vector.load %arg11[%c112_134, %c0_135] : memref<256x128xf32, #tpu.memory_space<vmem>>, vector<16x128xf32>
    tpu.vector_store %arg11[%c112_134, %c0_135], %403 {strides = array<i32>} : memref<256x128xf32, #tpu.memory_space<vmem>>, vector<16x128xf32>,
    %c128_136 = arith.constant 128 : index
    %c0_137 = arith.constant 0 : index
    %405 = vector.load %arg9[%c128_136, %c0_137] : memref<256x128xf32, #tpu.memory_space<vmem>>, vector<16x128xf32>
    %406 = arith.mulf %405, %403 : vector<16x128xf32>
    %c128_138 = arith.constant 128 : index
    %c0_139 = arith.constant 0 : index
    %407 = vector.load %arg10[%c128_138, %c0_139] : memref<256x128xf32, #tpu.memory_space<vmem>>, vector<16x128xf32>
    %408 = arith.addf %406, %407 : vector<16x128xf32>
    %c128_140 = arith.constant 128 : index
    %c0_141 = arith.constant 0 : index
    %409 = vector.load %arg11[%c128_140, %c0_141] : memref<256x128xf32, #tpu.memory_space<vmem>>, vector<16x128xf32>
    tpu.vector_store %arg11[%c128_140, %c0_141], %408 {strides = array<i32>} : memref<256x128xf32, #tpu.memory_space<vmem>>, vector<16x128xf32>,
    %c144_142 = arith.constant 144 : index
    %c0_143 = arith.constant 0 : index
    %410 = vector.load %arg9[%c144_142, %c0_143] : memref<256x128xf32, #tpu.memory_space<vmem>>, vector<16x128xf32>
    %411 = arith.mulf %410, %408 : vector<16x128xf32>
    %c144_144 = arith.constant 144 : index
    %c0_145 = arith.constant 0 : index
    %412 = vector.load %arg10[%c144_144, %c0_145] : memref<256x128xf32, #tpu.memory_space<vmem>>, vector<16x128xf32>
    %413 = arith.addf %411, %412 : vector<16x128xf32>
    %c144_146 = arith.constant 144 : index
    %c0_147 = arith.constant 0 : index
    %414 = vector.load %arg11[%c144_146, %c0_147] : memref<256x128xf32, #tpu.memory_space<vmem>>, vector<16x128xf32>
    tpu.vector_store %arg11[%c144_146, %c0_147], %413 {strides = array<i32>} : memref<256x128xf32, #tpu.memory_space<vmem>>, vector<16x128xf32>,
    %c160_148 = arith.constant 160 : index
    %c0_149 = arith.constant 0 : index
    %415 = vector.load %arg9[%c160_148, %c0_149] : memref<256x128xf32, #tpu.memory_space<vmem>>, vector<16x128xf32>
    %416 = arith.mulf %415, %413 : vector<16x128xf32>
    %c160_150 = arith.constant 160 : index
    %c0_151 = arith.constant 0 : index
    %417 = vector.load %arg10[%c160_150, %c0_151] : memref<256x128xf32, #tpu.memory_space<vmem>>, vector<16x128xf32>
    %418 = arith.addf %416, %417 : vector<16x128xf32>
    %c160_152 = arith.constant 160 : index
    %c0_153 = arith.constant 0 : index
    %419 = vector.load %arg11[%c160_152, %c0_153] : memref<256x128xf32, #tpu.memory_space<vmem>>, vector<16x128xf32>
    tpu.vector_store %arg11[%c160_152, %c0_153], %418 {strides = array<i32>} : memref<256x128xf32, #tpu.memory_space<vmem>>, vector<16x128xf32>,
    %c176_154 = arith.constant 176 : index
    %c0_155 = arith.constant 0 : index
    %420 = vector.load %arg9[%c176_154, %c0_155] : memref<256x128xf32, #tpu.memory_space<vmem>>, vector<16x128xf32>
    %421 = arith.mulf %420, %418 : vector<16x128xf32>
    %c176_156 = arith.constant 176 : index
    %c0_157 = arith.constant 0 : index
    %422 = vector.load %arg10[%c176_156, %c0_157] : memref<256x128xf32, #tpu.memory_space<vmem>>, vector<16x128xf32>
    %423 = arith.addf %421, %422 : vector<16x128xf32>
    %c176_158 = arith.constant 176 : index
    %c0_159 = arith.constant 0 : index
    %424 = vector.load %arg11[%c176_158, %c0_159] : memref<256x128xf32, #tpu.memory_space<vmem>>, vector<16x128xf32>
    tpu.vector_store %arg11[%c176_158, %c0_159], %423 {strides = array<i32>} : memref<256x128xf32, #tpu.memory_space<vmem>>, vector<16x128xf32>,
    %c192_160 = arith.constant 192 : index
    %c0_161 = arith.constant 0 : index
    %425 = vector.load %arg9[%c192_160, %c0_161] : memref<256x128xf32, #tpu.memory_space<vmem>>, vector<16x128xf32>
    %426 = arith.mulf %425, %423 : vector<16x128xf32>
    %c192_162 = arith.constant 192 : index
    %c0_163 = arith.constant 0 : index
    %427 = vector.load %arg10[%c192_162, %c0_163] : memref<256x128xf32, #tpu.memory_space<vmem>>, vector<16x128xf32>
    %428 = arith.addf %426, %427 : vector<16x128xf32>
    %c192_164 = arith.constant 192 : index
    %c0_165 = arith.constant 0 : index
    %429 = vector.load %arg11[%c192_164, %c0_165] : memref<256x128xf32, #tpu.memory_space<vmem>>, vector<16x128xf32>
    tpu.vector_store %arg11[%c192_164, %c0_165], %428 {strides = array<i32>} : memref<256x128xf32, #tpu.memory_space<vmem>>, vector<16x128xf32>,
    %c208_166 = arith.constant 208 : index
    %c0_167 = arith.constant 0 : index
    %430 = vector.load %arg9[%c208_166, %c0_167] : memref<256x128xf32, #tpu.memory_space<vmem>>, vector<16x128xf32>
    %431 = arith.mulf %430, %428 : vector<16x128xf32>
    %c208_168 = arith.constant 208 : index
    %c0_169 = arith.constant 0 : index
    %432 = vector.load %arg10[%c208_168, %c0_169] : memref<256x128xf32, #tpu.memory_space<vmem>>, vector<16x128xf32>
    %433 = arith.addf %431, %432 : vector<16x128xf32>
    %c208_170 = arith.constant 208 : index
    %c0_171 = arith.constant 0 : index
    %434 = vector.load %arg11[%c208_170, %c0_171] : memref<256x128xf32, #tpu.memory_space<vmem>>, vector<16x128xf32>
    tpu.vector_store %arg11[%c208_170, %c0_171], %433 {strides = array<i32>} : memref<256x128xf32, #tpu.memory_space<vmem>>, vector<16x128xf32>,
    %c224_172 = arith.constant 224 : index
    %c0_173 = arith.constant 0 : index
    %435 = vector.load %arg9[%c224_172, %c0_173] : memref<256x128xf32, #tpu.memory_space<vmem>>, vector<16x128xf32>
    %436 = arith.mulf %435, %433 : vector<16x128xf32>
    %c224_174 = arith.constant 224 : index
    %c0_175 = arith.constant 0 : index
    %437 = vector.load %arg10[%c224_174, %c0_175] : memref<256x128xf32, #tpu.memory_space<vmem>>, vector<16x128xf32>
    %438 = arith.addf %436, %437 : vector<16x128xf32>
    %c224_176 = arith.constant 224 : index
    %c0_177 = arith.constant 0 : index
    %439 = vector.load %arg11[%c224_176, %c0_177] : memref<256x128xf32, #tpu.memory_space<vmem>>, vector<16x128xf32>
    tpu.vector_store %arg11[%c224_176, %c0_177], %438 {strides = array<i32>} : memref<256x128xf32, #tpu.memory_space<vmem>>, vector<16x128xf32>,
    %c240_178 = arith.constant 240 : index
    %c0_179 = arith.constant 0 : index
    %440 = vector.load %arg9[%c240_178, %c0_179] : memref<256x128xf32, #tpu.memory_space<vmem>>, vector<16x128xf32>
    %441 = arith.mulf %440, %438 : vector<16x128xf32>
    %c240_180 = arith.constant 240 : index
    %c0_181 = arith.constant 0 : index
    %442 = vector.load %arg10[%c240_180, %c0_181] : memref<256x128xf32, #tpu.memory_space<vmem>>, vector<16x128xf32>
    %443 = arith.addf %441, %442 : vector<16x128xf32>
    %c240_182 = arith.constant 240 : index
    %c0_183 = arith.constant 0 : index
    %444 = vector.load %arg11[%c240_182, %c0_183] : memref<256x128xf32, #tpu.memory_space<vmem>>, vector<16x128xf32>
    tpu.vector_store %arg11[%c240_182, %c0_183], %443 {strides = array<i32>} : memref<256x128xf32, #tpu.memory_space<vmem>>, vector<16x128xf32>,
    %445 = tpu.iota {dimensions = array<i32: 0>} : vector<32x16xi32>
    %c16_i32_184 = arith.constant 16 : i32
    %c0_i32_185 = arith.constant 0 : i32
    %446 = arith.cmpi eq, %c16_i32_184, %c0_i32_185 : i32
    %c1_i32_186 = arith.constant 1 : i32
    %447 = arith.select %446, %c1_i32_186, %c16_i32_184 : i32
    %448 = vector.broadcast %447 : i32 to vector<32x16xi32>
    %449 = arith.remsi %445, %448 : vector<32x16xi32>
    %c0_i32_187 = arith.constant 0 : i32
    %450 = vector.broadcast %c0_i32_187 : i32 to vector<32x16xi32>
    %451 = arith.cmpi ne, %449, %450 : vector<32x16xi32>
    %c0_i32_188 = arith.constant 0 : i32
    %452 = vector.broadcast %c0_i32_188 : i32 to vector<32x16xi32>
    %453 = arith.cmpi slt, %449, %452 : vector<32x16xi32>
    %c0_i32_189 = arith.constant 0 : i32
    %454 = arith.cmpi slt, %447, %c0_i32_189 : i32
    %455 = vector.broadcast %454 : i1 to vector<32x16xi1>
    %456 = vector.broadcast %455 : vector<32x16xi1> to vector<32x16xi1>
    %457 = arith.xori %453, %456 : vector<32x16xi1>
    %458 = arith.andi %457, %451 : vector<32x16xi1>
    %459 = vector.broadcast %447 : i32 to vector<32x16xi32>
    %460 = arith.addi %449, %459 : vector<32x16xi32>
    %461 = arith.select %458, %460, %449 : vector<32x16xi1>, vector<32x16xi32>
    %c0_i32_190 = arith.constant 0 : i32
    %462 = vector.broadcast %c0_i32_190 : i32 to vector<32x16xi32>
    %463 = arith.cmpi eq, %461, %462 : vector<32x16xi32>
    %cst_191 = arith.constant 0.000000e+00 : f32
    %464 = vector.broadcast %cst_191 : f32 to vector<32x16xf32>
    %465 = arith.select %463, %84, %464 : vector<32x16xi1>, vector<32x16xf32>
    %c1_i32_192 = arith.constant 1 : i32
    %466 = vector.broadcast %c1_i32_192 : i32 to vector<32x16xi32>
    %467 = arith.cmpi eq, %461, %466 : vector<32x16xi32>
    %cst_193 = arith.constant 0.000000e+00 : f32
    %468 = vector.broadcast %cst_193 : f32 to vector<32x16xf32>
    %469 = arith.select %467, %84, %468 : vector<32x16xi1>, vector<32x16xf32>
    %c2_i32_194 = arith.constant 2 : i32
    %470 = vector.broadcast %c2_i32_194 : i32 to vector<32x16xi32>
    %471 = arith.cmpi eq, %461, %470 : vector<32x16xi32>
    %cst_195 = arith.constant 0.000000e+00 : f32
    %472 = vector.broadcast %cst_195 : f32 to vector<32x16xf32>
    %473 = arith.select %471, %84, %472 : vector<32x16xi1>, vector<32x16xf32>
    %c3_i32_196 = arith.constant 3 : i32
    %474 = vector.broadcast %c3_i32_196 : i32 to vector<32x16xi32>
    %475 = arith.cmpi eq, %461, %474 : vector<32x16xi32>
    %cst_197 = arith.constant 0.000000e+00 : f32
    %476 = vector.broadcast %cst_197 : f32 to vector<32x16xf32>
    %477 = arith.select %475, %84, %476 : vector<32x16xi1>, vector<32x16xf32>
    %c4_i32 = arith.constant 4 : i32
    %478 = vector.broadcast %c4_i32 : i32 to vector<32x16xi32>
    %479 = arith.cmpi eq, %461, %478 : vector<32x16xi32>
    %cst_198 = arith.constant 0.000000e+00 : f32
    %480 = vector.broadcast %cst_198 : f32 to vector<32x16xf32>
    %481 = arith.select %479, %84, %480 : vector<32x16xi1>, vector<32x16xf32>
    %c5_i32 = arith.constant 5 : i32
    %482 = vector.broadcast %c5_i32 : i32 to vector<32x16xi32>
    %483 = arith.cmpi eq, %461, %482 : vector<32x16xi32>
    %cst_199 = arith.constant 0.000000e+00 : f32
    %484 = vector.broadcast %cst_199 : f32 to vector<32x16xf32>
    %485 = arith.select %483, %84, %484 : vector<32x16xi1>, vector<32x16xf32>
    %c6_i32 = arith.constant 6 : i32
    %486 = vector.broadcast %c6_i32 : i32 to vector<32x16xi32>
    %487 = arith.cmpi eq, %461, %486 : vector<32x16xi32>
    %cst_200 = arith.constant 0.000000e+00 : f32
    %488 = vector.broadcast %cst_200 : f32 to vector<32x16xf32>
    %489 = arith.select %487, %84, %488 : vector<32x16xi1>, vector<32x16xf32>
    %c7_i32 = arith.constant 7 : i32
    %490 = vector.broadcast %c7_i32 : i32 to vector<32x16xi32>
    %491 = arith.cmpi eq, %461, %490 : vector<32x16xi32>
    %cst_201 = arith.constant 0.000000e+00 : f32
    %492 = vector.broadcast %cst_201 : f32 to vector<32x16xf32>
    %493 = arith.select %491, %84, %492 : vector<32x16xi1>, vector<32x16xf32>
    %c8_i32 = arith.constant 8 : i32
    %494 = vector.broadcast %c8_i32 : i32 to vector<32x16xi32>
    %495 = arith.cmpi eq, %461, %494 : vector<32x16xi32>
    %cst_202 = arith.constant 0.000000e+00 : f32
    %496 = vector.broadcast %cst_202 : f32 to vector<32x16xf32>
    %497 = arith.select %495, %84, %496 : vector<32x16xi1>, vector<32x16xf32>
    %c9_i32 = arith.constant 9 : i32
    %498 = vector.broadcast %c9_i32 : i32 to vector<32x16xi32>
    %499 = arith.cmpi eq, %461, %498 : vector<32x16xi32>
    %cst_203 = arith.constant 0.000000e+00 : f32
    %500 = vector.broadcast %cst_203 : f32 to vector<32x16xf32>
    %501 = arith.select %499, %84, %500 : vector<32x16xi1>, vector<32x16xf32>
    %c10_i32 = arith.constant 10 : i32
    %502 = vector.broadcast %c10_i32 : i32 to vector<32x16xi32>
    %503 = arith.cmpi eq, %461, %502 : vector<32x16xi32>
    %cst_204 = arith.constant 0.000000e+00 : f32
    %504 = vector.broadcast %cst_204 : f32 to vector<32x16xf32>
    %505 = arith.select %503, %84, %504 : vector<32x16xi1>, vector<32x16xf32>
    %c11_i32 = arith.constant 11 : i32
    %506 = vector.broadcast %c11_i32 : i32 to vector<32x16xi32>
    %507 = arith.cmpi eq, %461, %506 : vector<32x16xi32>
    %cst_205 = arith.constant 0.000000e+00 : f32
    %508 = vector.broadcast %cst_205 : f32 to vector<32x16xf32>
    %509 = arith.select %507, %84, %508 : vector<32x16xi1>, vector<32x16xf32>
    %c12_i32 = arith.constant 12 : i32
    %510 = vector.broadcast %c12_i32 : i32 to vector<32x16xi32>
    %511 = arith.cmpi eq, %461, %510 : vector<32x16xi32>
    %cst_206 = arith.constant 0.000000e+00 : f32
    %512 = vector.broadcast %cst_206 : f32 to vector<32x16xf32>
    %513 = arith.select %511, %84, %512 : vector<32x16xi1>, vector<32x16xf32>
    %c13_i32 = arith.constant 13 : i32
    %514 = vector.broadcast %c13_i32 : i32 to vector<32x16xi32>
    %515 = arith.cmpi eq, %461, %514 : vector<32x16xi32>
    %cst_207 = arith.constant 0.000000e+00 : f32
    %516 = vector.broadcast %cst_207 : f32 to vector<32x16xf32>
    %517 = arith.select %515, %84, %516 : vector<32x16xi1>, vector<32x16xf32>
    %c14_i32 = arith.constant 14 : i32
    %518 = vector.broadcast %c14_i32 : i32 to vector<32x16xi32>
    %519 = arith.cmpi eq, %461, %518 : vector<32x16xi32>
    %cst_208 = arith.constant 0.000000e+00 : f32
    %520 = vector.broadcast %cst_208 : f32 to vector<32x16xf32>
    %521 = arith.select %519, %84, %520 : vector<32x16xi1>, vector<32x16xf32>
    %c15_i32 = arith.constant 15 : i32
    %522 = vector.broadcast %c15_i32 : i32 to vector<32x16xi32>
    %523 = arith.cmpi eq, %461, %522 : vector<32x16xi32>
    %cst_209 = arith.constant 0.000000e+00 : f32
    %524 = vector.broadcast %cst_209 : f32 to vector<32x16xf32>
    %525 = arith.select %523, %84, %524 : vector<32x16xi1>, vector<32x16xf32>
    %526 = tpu.concatenate %465, %469, %473, %477, %481, %485, %489, %493, %497, %501, %505, %509, %513, %517, %521, %525 in 1 : vector<32x16xf32>, vector<32x16xf32>, vector<32x16xf32>, vector<32x16xf32>, vector<32x16xf32>, vector<32x16xf32>, vector<32x16xf32>, vector<32x16xf32>, vector<32x16xf32>, vector<32x16xf32>, vector<32x16xf32>, vector<32x16xf32>, vector<32x16xf32>, vector<32x16xf32>, vector<32x16xf32>, vector<32x16xf32> -> vector<32x256xf32>
    %c0_210 = arith.constant 0 : index
    %c0_211 = arith.constant 0 : index
    %527 = vector.load %arg11[%c0_210, %c0_211] : memref<256x128xf32, #tpu.memory_space<vmem>>, vector<256x128xf32>
    %cst_212 = arith.constant dense<0.000000e+00> : vector<32x128xf32>
    %528 = tpu.matmul %526, %527, %cst_212 {dimension_numbers = #tpu.dot_dimension_numbers<[1], [0], [0], [1], [0, 0, 1, 1], [], []>} : vector<32x256xf32>, vector<256x128xf32>, vector<32x128xf32> -> vector<32x128xf32>
    %529 = vector.extract_strided_slice %528 {offsets = [0, 0], sizes = [16, 64], strides = [1, 1]} : vector<32x128xf32> to vector<16x64xf32>
    %530 = vector.extract_strided_slice %528 {offsets = [16, 64], sizes = [16, 64], strides = [1, 1]} : vector<32x128xf32> to vector<16x64xf32>
    %531 = tpu.concatenate %529, %530 in 0 : vector<16x64xf32>, vector<16x64xf32> -> vector<32x64xf32>
    %532 = vector.broadcast %7 : vector<1x64xf32> to vector<32x64xf32>
    %533 = arith.mulf %68, %532 : vector<32x64xf32>
    %534 = arith.addf %531, %533 : vector<32x64xf32>
    %cst_213 = arith.constant 0.000000e+00 : f32
    %535 = vector.broadcast %cst_213 : f32 to vector<32x64xf32>
    %536 = arith.subf %535, %4 : vector<32x64xf32>
    %537 = math.exp %536 : vector<32x64xf32>
    %cst_214 = arith.constant 1.000000e+00 : f32
    %538 = vector.broadcast %cst_214 : f32 to vector<32x64xf32>
    %539 = arith.addf %538, %537 : vector<32x64xf32>
    %540 = arith.divf %4, %539 : vector<32x64xf32>
    %541 = arith.mulf %534, %540 : vector<32x64xf32>
    %542 = arith.mulf %541, %541 : vector<32x64xf32>
    %cst_215 = arith.constant dense<0.000000e+00> : vector<32xf32>
    %543 = vector.multi_reduction <add>, %542, %cst_215 [1] : vector<32x64xf32> to vector<32xf32>
    %544 = vector.shape_cast %543 : vector<32xf32> to vector<32x1xf32>
    %cst_216 = arith.constant 6.400000e+01 : f32
    %545 = vector.broadcast %cst_216 : f32 to vector<32x1xf32>
    %546 = arith.divf %544, %545 : vector<32x1xf32>
    %cst_217 = arith.constant 9.99999974E-6 : f32
    %547 = vector.broadcast %cst_217 : f32 to vector<32x1xf32>
    %548 = arith.addf %546, %547 : vector<32x1xf32>
    %549 = math.rsqrt %548 : vector<32x1xf32>
    %550 = vector.broadcast %549 : vector<32x1xf32> to vector<32x64xf32>
    %551 = arith.mulf %541, %550 : vector<32x64xf32>
    %552 = vector.broadcast %8 : vector<1x64xf32> to vector<32x64xf32>
    %553 = arith.mulf %551, %552 : vector<32x64xf32>
    %c0_218 = arith.constant 0 : index
    %c0_219 = arith.constant 0 : index
    %554 = vector.load %arg7[%c0_218, %c0_219] : memref<64x32xf32, #tpu.memory_space<vmem>>, vector<64x32xf32>
    %cst_220 = arith.constant dense<0.000000e+00> : vector<32x32xf32>
    %555 = tpu.matmul %553, %554, %cst_220 {dimension_numbers = #tpu.dot_dimension_numbers<[1], [0], [0], [1], [0, 0, 1, 1], [], []>} : vector<32x64xf32>, vector<64x32xf32>, vector<32x32xf32> -> vector<32x32xf32>
    %c0_221 = arith.constant 0 : index
    %c0_222 = arith.constant 0 : index
    %556 = vector.load %arg8[%c0_221, %c0_222] : memref<32x32xf32, #tpu.memory_space<vmem>>, vector<32x32xf32>
    tpu.vector_store %arg8[%c0_221, %c0_222], %555 {strides = array<i32>} : memref<32x32xf32, #tpu.memory_space<vmem>>, vector<32x32xf32>,
    return
  }
}

</mosaic_0001>

<llo_original>
// kernel: tpu_custom_call.1
$region0: #{tpu_custom_call.1}
  #allocation0 [shape = 'u32[]', space=smem, size = 0x4, offset = 0x4, fixed_abs, tag = 'smem constant byte address 0x4 - core index']
  #allocation1 [shape = 'u32[144,128]{1,0:T(1,128)}', space=vmem, size = 0x12000, scoped, tag = 'internal scratch']
  #allocation2 [shape = 'f32[256,128]{1,0:T(8,128)}', space=vmem, size = 0x20000, scoped, tag = 'scratch operand']
  #allocation3 [shape = 'f32[256,128]{1,0:T(8,128)}', space=vmem, size = 0x20000, scoped, tag = 'scratch operand']
  #allocation4 [shape = 'f32[256,128]{1,0:T(8,128)}', space=vmem, size = 0x20000, scoped, tag = 'scratch operand']
  %s0 = inlined_call_operand.vmem [shape: f32[32,32], index: 0, kind: input, shape index: {}]
  %s1 = inlined_call_operand.hbm [shape: f32[32,128], index: 1, kind: input, shape index: {}]
  %s2 = inlined_call_operand.hbm [shape: f32[4,64], index: 2, kind: input, shape index: {}]
  %s3 = inlined_call_operand.hbm [shape: f32[4,64], index: 3, kind: input, shape index: {}]
  %s4 = inlined_call_operand.vmem [shape: f32[64,128], index: 4, kind: input, shape index: {}]
  %s5 = inlined_call_operand.vmem [shape: f32[16,64], index: 5, kind: input, shape index: {}]
  %s6 = inlined_call_operand.hbm [shape: f32[16,128], index: 6, kind: input, shape index: {}]
  %s7 = inlined_call_operand.vmem [shape: f32[64,32], index: 7, kind: input, shape index: {}]
  %s8 = inlined_call_operand.hbm [shape: f32[32,32], index: 8, kind: output, shape index: {}]
  %s9 = sld [smem:[#allocation0]]
  $region58: #{tpu_custom_call.1} parent=0
    _
  %s11 = ssub.s32 1, %s9
  %s12 = scalar_select 0, %s11, %s9
  $region1: #{tpu_custom_call.1} parent=0
    #allocation5 [shape = 'u8[16384]{0}', space=vmem, size = 0x4000, scoped, tag = 'input window, operand 1, single buffered']
    #allocation6 [shape = 's32[1]{0}', space=sflag, size = 0x4, scoped, tag = 'scoped memory for tpu_custom_call.1']
    #allocation7 [shape = 's32[1]{0}', space=sflag, size = 0x4, scoped, tag = 'scoped memory for tpu_custom_call.1']
    #allocation8 [shape = 'u8[2048]{0}', space=vmem, size = 0x800, scoped, tag = 'input window, operand 2, single buffered']
    #allocation9 [shape = 's32[1]{0}', space=sflag, size = 0x4, scoped, tag = 'scoped memory for tpu_custom_call.1']
    #allocation10 [shape = 'u8[2048]{0}', space=vmem, size = 0x800, scoped, tag = 'input window, operand 3, single buffered']
    #allocation11 [shape = 'u8[8192]{0}', space=vmem, size = 0x2000, scoped, tag = 'input window, operand 6, single buffered']
    #allocation12 [shape = 's32[1]{0}', space=sflag, size = 0x4, scoped, tag = 'scoped memory for tpu_custom_call.1']
    #allocation13 [shape = 'u8[16384]{0}', space=vmem, size = 0x4000, scoped, tag = 'output window, operand 0, single buffered']
    %13 = vsyncpa [#allocation6], 0
    %14 = vsyncpa [#allocation9], 0
    %15 = vsyncpa [#allocation12], 0
    %16 = vsyncpa [#allocation7], 0
    // Predicated region
    $region2: #{tpu_custom_call.1} parent=1 // pred_check
      _
    $region3: #{tpu_custom_call.1} parent=1 // pred_check_branch
      %18 = sbr.rel (0) target = $region5
    $region4: #{tpu_custom_call.1} parent=1 // pred_region
      _
    $region5: #{tpu_custom_call.1} parent=1 // pred_fallthru
      _
    // Predicated region
    $region6: #{tpu_custom_call.1} parent=1 // pred_check
      _
    $region7: #{tpu_custom_call.1} parent=1 // pred_check_branch
      %20 = sbr.rel (0) target = $region9
    $region8: #{tpu_custom_call.1} parent=1 // pred_region
      %s22 = ssub.s32 512, 512
      %23 = vsyncadd [#allocation6], %s22
      %s24 = sshll.u32 [#allocation5], 4
      %s25 = int_to_ptr.vmem [resolvable:$true] %s24
      %30 = dma.hbm_to_vmem [thread:$0]  %s1, 512, %s25, [#allocation6], 128, 128, 8
    $region9: #{tpu_custom_call.1} parent=1 // pred_fallthru
      _
    // Predicated region
    $region10: #{tpu_custom_call.1} parent=1 // pred_check
      _
    $region11: #{tpu_custom_call.1} parent=1 // pred_check_branch
      %32 = sbr.rel (0) target = $region13
    $region12: #{tpu_custom_call.1} parent=1 // pred_region
      %s34 = ssub.s32 64, 64
      %35 = vsyncadd [#allocation9], %s34
      %s37 = sshll.u32 [#allocation8], 4
      %s38 = int_to_ptr.vmem [resolvable:$true] %s37
      %40 = dma.hbm_to_vmem [thread:$0]  %s2, 64, %s38, [#allocation9]
    $region13: #{tpu_custom_call.1} parent=1 // pred_fallthru
      _
    // Predicated region
    $region14: #{tpu_custom_call.1} parent=1 // pred_check
      _
    $region15: #{tpu_custom_call.1} parent=1 // pred_check_branch
      %42 = sbr.rel (0) target = $region17
    $region16: #{tpu_custom_call.1} parent=1 // pred_region
      %s44 = ssub.s32 64, 64
      %45 = vsyncadd [#allocation9], %s44
      %s47 = sshll.u32 [#allocation10], 4
      %s48 = int_to_ptr.vmem [resolvable:$true] %s47
      %50 = dma.hbm_to_vmem [thread:$0]  %s3, 64, %s48, [#allocation9]
    $region17: #{tpu_custom_call.1} parent=1 // pred_fallthru
      _
    // Predicated region
    $region18: #{tpu_custom_call.1} parent=1 // pred_check
      _
    $region19: #{tpu_custom_call.1} parent=1 // pred_check_branch
      %52 = sbr.rel (0) target = $region21
    $region20: #{tpu_custom_call.1} parent=1 // pred_region
      _
    $region21: #{tpu_custom_call.1} parent=1 // pred_fallthru
      _
    // Predicated region
    $region22: #{tpu_custom_call.1} parent=1 // pred_check
      _
    $region23: #{tpu_custom_call.1} parent=1 // pred_check_branch
      %54 = sbr.rel (0) target = $region25
    $region24: #{tpu_custom_call.1} parent=1 // pred_region
      _
    $region25: #{tpu_custom_call.1} parent=1 // pred_fallthru
      _
    // Predicated region
    $region26: #{tpu_custom_call.1} parent=1 // pred_check
      _
    $region27: #{tpu_custom_call.1} parent=1 // pred_check_branch
      %56 = sbr.rel (0) target = $region29
    $region28: #{tpu_custom_call.1} parent=1 // pred_region
      %s58 = ssub.s32 256, 256
      %59 = vsyncadd [#allocation12], %s58
      %s60 = sshll.u32 [#allocation11], 4
      %s61 = int_to_ptr.vmem [resolvable:$true] %s60
      %66 = dma.hbm_to_vmem [thread:$0]  %s6, 256, %s61, [#allocation12], 128, 128, 8
    $region29: #{tpu_custom_call.1} parent=1 // pred_fallthru
      _
    // Predicated region
    $region30: #{tpu_custom_call.1} parent=1 // pred_check
      _
    $region31: #{tpu_custom_call.1} parent=1 // pred_check_branch
      %68 = sbr.rel (0) target = $region33
    $region32: #{tpu_custom_call.1} parent=1 // pred_region
      _
    $region33: #{tpu_custom_call.1} parent=1 // pred_fallthru
      _
    // Predicated region
    $region34: #{tpu_custom_call.1} parent=1 // pred_check
      _
    $region35: #{tpu_custom_call.1} parent=1 // pred_check_branch
      %70 = sbr.rel (0) target = $region37
    $region36: #{tpu_custom_call.1} parent=1 // pred_region
      %71 = dma.done [#allocation6], 512
    $region37: #{tpu_custom_call.1} parent=1 // pred_fallthru
      _
    // Predicated region
    $region38: #{tpu_custom_call.1} parent=1 // pred_check
      _
    $region39: #{tpu_custom_call.1} parent=1 // pred_check_branch
      %73 = sbr.rel (0) target = $region41
    $region40: #{tpu_custom_call.1} parent=1 // pred_region
      %74 = dma.done [#allocation9], 64
    $region41: #{tpu_custom_call.1} parent=1 // pred_fallthru
      _
    // Predicated region
    $region42: #{tpu_custom_call.1} parent=1 // pred_check
      _
    $region43: #{tpu_custom_call.1} parent=1 // pred_check_branch
      %76 = sbr.rel (0) target = $region45
    $region44: #{tpu_custom_call.1} parent=1 // pred_region
      %77 = dma.done [#allocation9], 64
    $region45: #{tpu_custom_call.1} parent=1 // pred_fallthru
      _
    // Predicated region
    $region46: #{tpu_custom_call.1} parent=1 // pred_check
      _
    $region47: #{tpu_custom_call.1} parent=1 // pred_check_branch
      %79 = sbr.rel (0) target = $region49
    $region48: #{tpu_custom_call.1} parent=1 // pred_region
      %80 = dma.done [#allocation12], 256
    $region49: #{tpu_custom_call.1} parent=1 // pred_fallthru
      _
    %v81 = vld [vmem:[%s0] sm:$0xff]
    %v82 = vld [vmem:[%s0 + $0x8] sm:$0xff]
    %v83 = vld [vmem:[%s0 + $0x10] sm:$0xff]
    %v84 = vld [vmem:[%s0 + $0x18] sm:$0xff]
    %v85 = vld [vmem:[#allocation5] sm:$0xff]
    %v86 = vld [vmem:[#allocation5 + $0x8] sm:$0xff]
    %v87 = vld [vmem:[#allocation5 + $0x10] sm:$0xff]
    %v88 = vld [vmem:[#allocation5 + $0x18] sm:$0xff]
    %vm89 = vcmask 261120
    %v91 = vsel %vm89, %v81, 0
    %v94 = vsel %vm89, %v82, 0
    %v97 = vsel %vm89, %v83, 0
    %v100 = vsel %vm89, %v84, 0
    %102 = vmatprep.subr.mxu0 0.0
    %103 = vmatpush1.msra.mxu0 %v85
    %104 = vmatprep.subr.mxu0 0.0
    %105 = vmatpush1.msra.mxu0 %v86
    %106 = vmatprep.subr.mxu0 0.0
    %107 = vmatpush1.msra.mxu0 %v87
    %108 = vmatprep.subr.mxu0 0.0
    %109 = vmatpush1.msra.mxu0 %v88
    %110 = vmatprep.subr.mxu0 0.0
    %111 = vmatpush1.msra.mxu0 0.0
    %112 = vmatprep.subr.mxu0 0.0
    %113 = vmatpush1.msra.mxu0 0.0
    %114 = vmatprep.subr.mxu0 0.0
    %115 = vmatpush1.msra.mxu0 0.0
    %116 = vmatprep.subr.mxu0 0.0
    %117 = vmatpush1.msra.mxu0 0.0
    %118 = vmatprep.subr.mxu0 0.0
    %119 = vmatpush1.msra.mxu0 0.0
    %120 = vmatprep.subr.mxu0 0.0
    %121 = vmatpush1.msra.mxu0 0.0
    %122 = vmatprep.subr.mxu0 0.0
    %123 = vmatpush1.msra.mxu0 0.0
    %124 = vmatprep.subr.mxu0 0.0
    %125 = vmatpush1.msra.mxu0 0.0
    %126 = vmatprep.subr.mxu0 0.0
    %127 = vmatpush1.msra.mxu0 0.0
    %128 = vmatprep.subr.mxu0 0.0
    %129 = vmatpush1.msra.mxu0 0.0
    %130 = vmatprep.subr.mxu0 0.0
    %131 = vmatpush1.msra.mxu0 0.0
    %132 = vmatprep.subr.mxu0 0.0
    %133 = vmatpush1.msra.mxu0 0.0
    %134 = vmatprep.subr.mxu0 0.0
    %135 = vmatpush1.msra.mxu0 0.0
    %136 = vmatprep.subr.mxu0 0.0
    %137 = vmatpush1.msra.mxu0 0.0
    %138 = vmatprep.subr.mxu0 0.0
    %139 = vmatpush1.msra.mxu0 0.0
    %140 = vmatprep.subr.mxu0 0.0
    %141 = vmatpush1.msra.mxu0 0.0
    %142 = vmatprep.subr.mxu0 0.0
    %143 = vmatpush1.msra.mxu0 0.0
    %144 = vmatprep.subr.mxu0 0.0
    %145 = vmatpush1.msra.mxu0 0.0
    %146 = vmatprep.subr.mxu0 0.0
    %147 = vmatpush1.msra.mxu0 0.0
    %148 = vmatprep.subr.mxu0 0.0
    %149 = vmatpush1.msra.mxu0 0.0
    %150 = vmatprep.subr.mxu0 0.0
    %151 = vmatpush1.msra.mxu0 0.0
    %152 = vmatprep.subr.mxu0 0.0
    %153 = vmatpush1.msra.mxu0 0.0
    %154 = vmatprep.subr.mxu0 0.0
    %155 = vmatpush1.msra.mxu0 0.0
    %156 = vmatprep.subr.mxu0 0.0
    %157 = vmatpush1.msra.mxu0 0.0
    %158 = vmatprep.subr.mxu0 0.0
    %159 = vmatpush1.msra.mxu0 0.0
    %160 = vmatprep.subr.mxu0 0.0
    %161 = vmatpush1.msra.mxu0 0.0
    %162 = vmatprep.subr.mxu0 0.0
    %163 = vmatpush1.msra.mxu0 0.0
    %164 = vmatprep.subr.mxu0 0.0
    %165 = vmatpush1.msra.mxu0 0.0
    %166 = vmatprep.mubr.f32.mxu0 0.0
    %167 = vmatmul.mubr.f32.gmra.mrb[0].mxu0 %v91
    %v168 = vpop.f32.mrb[0].mxu0
    %v169 = vadd.f32 0.0, %v168
    %v170 = vpop.f32.mrb[0].mxu0
    %171 = vmatprep.mubr.f32.mxu0 0.0
    %172 = vmatmul.mubr.f32.gmra.mrb[0].mxu0 %v94
    %v173 = vpop.f32.mrb[0].mxu0
    %v174 = vadd.f32 0.0, %v173
    %v175 = vpop.f32.mrb[0].mxu0
    %176 = vmatprep.mubr.f32.mxu0 0.0
    %177 = vmatmul.mubr.f32.gmra.mrb[0].mxu0 %v97
    %v178 = vpop.f32.mrb[0].mxu0
    %v179 = vadd.f32 0.0, %v178
    %v180 = vpop.f32.mrb[0].mxu0
    %181 = vmatprep.mubr.f32.mxu0 0.0
    %182 = vmatmul.mubr.f32.gmra.mrb[0].mxu0 %v100
    %v183 = vpop.f32.mrb[0].mxu0
    %v184 = vadd.f32 0.0, %v183
    %v185 = vpop.f32.mrb[0].mxu0
    %186 = vdwg.mxu0
    %v187 = vld [vmem:[#allocation10] sm:$0x1]
    %v188 = vld [vmem:[#allocation10 + $0x1] sm:$0x1]
    %v189 = vld [vmem:[#allocation10 + $0x2] sm:$0x1]
    %v190 = vld [vmem:[#allocation10 + $0x3] sm:$0x1]
    %vm195 = vcmask 1042432
    %v196 = vrot.slane %v169, 5
    %v197 = vrot.slane %v174, 5
    %v198 = vsel %vm195, %v196, %v197
    %v199 = vrot.slane %v179, 5
    %v200 = vsel %vm195, %v197, %v199
    %v201 = vrot.slane %v184, 5
    %v202 = vsel %vm195, %v199, %v201
    %v208 = vsel %vm195, 0.0, %v196
    %v209 = vlaneseq
    %v210 = vshrl.u32 %v209, 7
    %v211 = vadd.s32 %v210, 8
    %v212 = vadd.s32 %v210, 16
    %v213 = vadd.s32 %v210, 24
    %vm214 = vcmp.lt.s32.totalorder %v210, 0
    %v215 = vsub.s32 0, %v210
    %v216 = vsel %vm214, %v215, %v210
    %v217 = vshrl.u32 %v216, 4
    %v218 = vand.u32 %v216, 15
    %v219 = vsub.s32 0, %v218
    %v220 = vsel %vm214, %v219, %v218
    %vm221 = vcmp.lt.s32.totalorder %v211, 0
    %v222 = vsub.s32 0, %v211
    %v223 = vsel %vm221, %v222, %v211
    %v224 = vshrl.u32 %v223, 4
    %v225 = vand.u32 %v223, 15
    %v226 = vsub.s32 0, %v225
    %v227 = vsel %vm221, %v226, %v225
    %vm228 = vcmp.lt.s32.totalorder %v212, 0
    %v229 = vsub.s32 0, %v212
    %v230 = vsel %vm228, %v229, %v212
    %v231 = vshrl.u32 %v230, 4
    %v232 = vand.u32 %v230, 15
    %v233 = vsub.s32 0, %v232
    %v234 = vsel %vm228, %v233, %v232
    %vm235 = vcmp.lt.s32.totalorder %v213, 0
    %v236 = vsub.s32 0, %v213
    %v237 = vsel %vm235, %v236, %v213
    %v238 = vshrl.u32 %v237, 4
    %v239 = vand.u32 %v237, 15
    %v240 = vsub.s32 0, %v239
    %v241 = vsel %vm235, %v240, %v239
    %vm242 = vcmp.ne.s32.totalorder %v220, 0
    %vm243 = vcmp.ne.s32.totalorder %v227, 0
    %vm244 = vcmp.ne.s32.totalorder %v234, 0
    %vm245 = vcmp.ne.s32.totalorder %v241, 0
    %vm246 = vcmp.lt.s32.totalorder %v220, 0
    %vm247 = vcmp.lt.s32.totalorder %v227, 0
    %vm248 = vcmp.lt.s32.totalorder %v234, 0
    %vm249 = vcmp.lt.s32.totalorder %v241, 0
    %vm250 = vmand %vm246, %vm242
    %vm251 = vmand %vm247, %vm243
    %vm252 = vmand %vm248, %vm244
    %vm253 = vmand %vm249, %vm245
    %v254 = vadd.s32 %v220, 16
    %v255 = vadd.s32 %v227, 16
    %v256 = vadd.s32 %v234, 16
    %v257 = vadd.s32 %v241, 16
    %v258 = vsel %vm250, %v254, %v220
    %v259 = vsel %vm251, %v255, %v227
    %v260 = vsel %vm252, %v256, %v234
    %v261 = vsel %vm253, %v257, %v241
    %vm262 = vcmp.ge.s32.totalorder %v258, 3
    %vm263 = vcmp.ge.s32.totalorder %v259, 3
    %vm264 = vcmp.ge.s32.totalorder %v260, 3
    %vm265 = vcmp.ge.s32.totalorder %v261, 3
    %v266 = vsel %vm262, %v208, 0.0
    %v267 = vsel %vm263, %v198, 0.0
    %v268 = vsel %vm264, %v200, 0.0
    %v269 = vsel %vm265, %v202, 0.0
    %v270 = vld [vmem:[#allocation8] sm:$0x1]
    %v271 = vlaneseq
    %v272 = vshrl.u32 %v271, 7
    %v273 = vsub.s32 0, %v272
    %v274 = vrot.slane %v270, %v273
    %v275 = vmul.f32 %v266, %v274
    %v276 = vmul.f32 %v267, %v274
    %v277 = vmul.f32 %v268, %v274
    %v278 = vmul.f32 %v269, %v274
    %v279 = vadd.f32 %v275, 0.0
    %v280 = vadd.f32 %v276, 0.0
    %v281 = vadd.f32 %v277, 0.0
    %v282 = vadd.f32 %v278, 0.0
    %vm283 = vcmp.ge.s32.totalorder %v258, 2
    %vm284 = vcmp.ge.s32.totalorder %v259, 2
    %vm285 = vcmp.ge.s32.totalorder %v260, 2
    %vm286 = vcmp.ge.s32.totalorder %v261, 2
    %vm288 = vcmask 1046528
    %v289 = vrot.slane %v208, 1
    %v290 = vrot.slane %v198, 1
    %v291 = vsel %vm288, %v289, %v290
    %v292 = vrot.slane %v200, 1
    %v293 = vsel %vm288, %v290, %v292
    %v294 = vrot.slane %v202, 1
    %v295 = vsel %vm288, %v292, %v294
    %v296 = vrot.slane %v201, 1
    %v297 = vsel %vm288, %v294, %v296
    %v302 = vsel %vm283, %v291, 0.0
    %v303 = vsel %vm284, %v293, 0.0
    %v304 = vsel %vm285, %v295, 0.0
    %v305 = vsel %vm286, %v297, 0.0
    %v306 = vld [vmem:[#allocation8 + $0x1] sm:$0x1]
    %v307 = vlaneseq
    %v308 = vshrl.u32 %v307, 7
    %v309 = vsub.s32 0, %v308
    %v310 = vrot.slane %v306, %v309
    %v311 = vmul.f32 %v302, %v310
    %v312 = vmul.f32 %v303, %v310
    %v313 = vmul.f32 %v304, %v310
    %v314 = vmul.f32 %v305, %v310
    %v315 = vadd.f32 %v279, %v311
    %v316 = vadd.f32 %v280, %v312
    %v317 = vadd.f32 %v281, %v313
    %v318 = vadd.f32 %v282, %v314
    %vm319 = vcmp.ge.s32.totalorder %v258, 1
    %vm320 = vcmp.ge.s32.totalorder %v259, 1
    %vm321 = vcmp.ge.s32.totalorder %v260, 1
    %vm322 = vcmp.ge.s32.totalorder %v261, 1
    %vm323 = vcmask 1045504
    %v324 = vrot.slane %v208, 2
    %v325 = vrot.slane %v198, 2
    %v326 = vsel %vm323, %v324, %v325
    %v327 = vrot.slane %v200, 2
    %v328 = vsel %vm323, %v325, %v327
    %v329 = vrot.slane %v202, 2
    %v330 = vsel %vm323, %v327, %v329
    %v331 = vrot.slane %v201, 2
    %v332 = vsel %vm323, %v329, %v331
    %v337 = vsel %vm319, %v326, 0.0
    %v338 = vsel %vm320, %v328, 0.0
    %v339 = vsel %vm321, %v330, 0.0
    %v340 = vsel %vm322, %v332, 0.0
    %v341 = vld [vmem:[#allocation8 + $0x2] sm:$0x1]
    %v342 = vlaneseq
    %v343 = vshrl.u32 %v342, 7
    %v344 = vsub.s32 0, %v343
    %v345 = vrot.slane %v341, %v344
    %v346 = vmul.f32 %v337, %v345
    %v347 = vmul.f32 %v338, %v345
    %v348 = vmul.f32 %v339, %v345
    %v349 = vmul.f32 %v340, %v345
    %v350 = vadd.f32 %v315, %v346
    %v351 = vadd.f32 %v316, %v347
    %v352 = vadd.f32 %v317, %v348
    %v353 = vadd.f32 %v318, %v349
    %v354 = vld [vmem:[#allocation8 + $0x3] sm:$0x1]
    %v355 = vlaneseq
    %v356 = vshrl.u32 %v355, 7
    %v357 = vsub.s32 0, %v356
    %v358 = vrot.slane %v354, %v357
    %v359 = vmul.f32 %v208, %v358
    %v360 = vmul.f32 %v198, %v358
    %v361 = vmul.f32 %v200, %v358
    %v362 = vmul.f32 %v202, %v358
    %v363 = vmul.f32 %v201, %v358
    %vm369 = vcmask 1044480
    %v370 = vrot.slane %v359, 3
    %v371 = vrot.slane %v360, 3
    %v372 = vsel %vm369, %v370, %v371
    %v373 = vrot.slane %v361, 3
    %v374 = vsel %vm369, %v371, %v373
    %v375 = vrot.slane %v362, 3
    %v376 = vsel %vm369, %v373, %v375
    %v377 = vrot.slane %v363, 3
    %v378 = vsel %vm369, %v375, %v377
    %v383 = vadd.f32 %v350, %v372
    %v384 = vadd.f32 %v351, %v374
    %v385 = vadd.f32 %v352, %v376
    %v386 = vadd.f32 %v353, %v378
    %v387 = vlaneseq
    %v388 = vshrl.u32 %v387, 7
    %v389 = vsub.s32 0, %v388
    %v390 = vrot.slane %v187, %v389
    %v391 = vadd.f32 %v383, %v390
    %v392 = vadd.f32 %v384, %v390
    %v393 = vadd.f32 %v385, %v390
    %v394 = vadd.f32 %v386, %v390
    %v395 = vsub.f32 0.0, %v391
    %v396 = vsub.f32 0.0, %v392
    %v397 = vsub.f32 0.0, %v393
    %v398 = vsub.f32 0.0, %v394
    %v399 = vmul.f32 %v395, 1.442695
    %v400 = vpow.pop %v399
    %v401 = vmul.f32 %v396, 1.442695
    %v402 = vpow.pop %v401
    %v403 = vmul.f32 %v397, 1.442695
    %v404 = vpow.pop %v403
    %v405 = vmul.f32 %v398, 1.442695
    %v406 = vpow.pop %v405
    %v407 = vadd.f32 %v400, 1.0
    %v408 = vadd.f32 %v402, 1.0
    %v409 = vadd.f32 %v404, 1.0
    %v410 = vadd.f32 %v406, 1.0
    %v411 = vrcp.pop %v407
    %v412 = vmul.f32 %v391, %v411
    %v413 = vrcp.pop %v408
    %v414 = vmul.f32 %v392, %v413
    %v415 = vrcp.pop %v409
    %v416 = vmul.f32 %v393, %v415
    %v417 = vrcp.pop %v410
    %v418 = vmul.f32 %v394, %v417
    %v419 = vld [vmem:[%s4] sm:$0xff]
    %v420 = vld [vmem:[%s4 + $0x8] sm:$0xff]
    %v421 = vld [vmem:[%s4 + $0x10] sm:$0xff]
    %v422 = vld [vmem:[%s4 + $0x18] sm:$0xff]
    %v423 = vld [vmem:[%s4 + $0x20] sm:$0xff]
    %v424 = vld [vmem:[%s4 + $0x28] sm:$0xff]
    %v425 = vld [vmem:[%s4 + $0x30] sm:$0xff]
    %v426 = vld [vmem:[%s4 + $0x38] sm:$0xff]
    %vm427 = vcmask 523264
    %v429 = vsel %vm427, %v412, 0
    %v432 = vsel %vm427, %v414, 0
    %v435 = vsel %vm427, %v416, 0
    %v438 = vsel %vm427, %v418, 0
    %440 = vmatprep.subr.mxu0 0.0
    %441 = vmatpush1.msra.mxu0 %v419
    %442 = vmatprep.subr.mxu0 0.0
    %443 = vmatpush1.msra.mxu0 %v420
    %444 = vmatprep.subr.mxu0 0.0
    %445 = vmatpush1.msra.mxu0 %v421
    %446 = vmatprep.subr.mxu0 0.0
    %447 = vmatpush1.msra.mxu0 %v422
    %448 = vmatprep.subr.mxu0 0.0
    %449 = vmatpush1.msra.mxu0 %v423
    %450 = vmatprep.subr.mxu0 0.0
    %451 = vmatpush1.msra.mxu0 %v424
    %452 = vmatprep.subr.mxu0 0.0
    %453 = vmatpush1.msra.mxu0 %v425
    %454 = vmatprep.subr.mxu0 0.0
    %455 = vmatpush1.msra.mxu0 %v426
    %456 = vmatprep.subr.mxu0 0.0
    %457 = vmatpush1.msra.mxu0 0.0
    %458 = vmatprep.subr.mxu0 0.0
    %459 = vmatpush1.msra.mxu0 0.0
    %460 = vmatprep.subr.mxu0 0.0
    %461 = vmatpush1.msra.mxu0 0.0
    %462 = vmatprep.subr.mxu0 0.0
    %463 = vmatpush1.msra.mxu0 0.0
    %464 = vmatprep.subr.mxu0 0.0
    %465 = vmatpush1.msra.mxu0 0.0
    %466 = vmatprep.subr.mxu0 0.0
    %467 = vmatpush1.msra.mxu0 0.0
    %468 = vmatprep.subr.mxu0 0.0
    %469 = vmatpush1.msra.mxu0 0.0
    %470 = vmatprep.subr.mxu0 0.0
    %471 = vmatpush1.msra.mxu0 0.0
    %472 = vmatprep.subr.mxu0 0.0
    %473 = vmatpush1.msra.mxu0 0.0
    %474 = vmatprep.subr.mxu0 0.0
    %475 = vmatpush1.msra.mxu0 0.0
    %476 = vmatprep.subr.mxu0 0.0
    %477 = vmatpush1.msra.mxu0 0.0
    %478 = vmatprep.subr.mxu0 0.0
    %479 = vmatpush1.msra.mxu0 0.0
    %480 = vmatprep.subr.mxu0 0.0
    %481 = vmatpush1.msra.mxu0 0.0
    %482 = vmatprep.subr.mxu0 0.0
    %483 = vmatpush1.msra.mxu0 0.0
    %484 = vmatprep.subr.mxu0 0.0
    %485 = vmatpush1.msra.mxu0 0.0
    %486 = vmatprep.subr.mxu0 0.0
    %487 = vmatpush1.msra.mxu0 0.0
    %488 = vmatprep.subr.mxu0 0.0
    %489 = vmatpush1.msra.mxu0 0.0
    %490 = vmatprep.subr.mxu0 0.0
    %491 = vmatpush1.msra.mxu0 0.0
    %492 = vmatprep.subr.mxu0 0.0
    %493 = vmatpush1.msra.mxu0 0.0
    %494 = vmatprep.subr.mxu0 0.0
    %495 = vmatpush1.msra.mxu0 0.0
    %496 = vmatprep.subr.mxu0 0.0
    %497 = vmatpush1.msra.mxu0 0.0
    %498 = vmatprep.subr.mxu0 0.0
    %499 = vmatpush1.msra.mxu0 0.0
    %500 = vmatprep.subr.mxu0 0.0
    %501 = vmatpush1.msra.mxu0 0.0
    %502 = vmatprep.subr.mxu0 0.0
    %503 = vmatpush1.msra.mxu0 0.0
    %504 = vmatprep.mubr.f32.mxu0 0.0
    %505 = vmatmul.mubr.f32.gmra.mrb[0].mxu0 %v429
    %v506 = vpop.f32.mrb[0].mxu0
    %v507 = vadd.f32 0.0, %v506
    %v508 = vpop.f32.mrb[0].mxu0
    %509 = vmatprep.mubr.f32.mxu0 0.0
    %510 = vmatmul.mubr.f32.gmra.mrb[0].mxu0 %v432
    %v511 = vpop.f32.mrb[0].mxu0
    %v512 = vadd.f32 0.0, %v511
    %v513 = vpop.f32.mrb[0].mxu0
    %514 = vmatprep.mubr.f32.mxu0 0.0
    %515 = vmatmul.mubr.f32.gmra.mrb[0].mxu0 %v435
    %v516 = vpop.f32.mrb[0].mxu0
    %v517 = vadd.f32 0.0, %v516
    %v518 = vpop.f32.mrb[0].mxu0
    %519 = vmatprep.mubr.f32.mxu0 0.0
    %520 = vmatmul.mubr.f32.gmra.mrb[0].mxu0 %v438
    %v521 = vpop.f32.mrb[0].mxu0
    %v522 = vadd.f32 0.0, %v521
    %v523 = vpop.f32.mrb[0].mxu0
    %524 = vdwg.mxu0
    %v525 = vlaneseq
    %v526 = vshrl.u32 %v525, 7
    %v527 = vsub.s32 0, %v526
    %v528 = vrot.slane %v188, %v527
    %v529 = vadd.f32 %v507, %v528
    %v530 = vadd.f32 %v512, %v528
    %v531 = vadd.f32 %v517, %v528
    %v532 = vadd.f32 %v522, %v528
    %v533 = vmax.f32 %v529, 0.0
    %v534 = vmax.f32 %v530, 0.0
    %v535 = vmax.f32 %v531, 0.0
    %v536 = vmax.f32 %v532, 0.0
    %v537 = vand.u32 2147483647, %v529
    %v538 = vand.u32 2147483647, %v530
    %v539 = vand.u32 2147483647, %v531
    %v540 = vand.u32 2147483647, %v532
    %v541 = vsub.f32 0.0, %v537
    %v542 = vsub.f32 0.0, %v538
    %v543 = vsub.f32 0.0, %v539
    %v544 = vsub.f32 0.0, %v540
    %v545 = vmul.f32 %v541, 1.442695
    %v546 = vpow.pop %v545
    %v547 = vmul.f32 %v542, 1.442695
    %v548 = vpow.pop %v547
    %v549 = vmul.f32 %v543, 1.442695
    %v550 = vpow.pop %v549
    %v551 = vmul.f32 %v544, 1.442695
    %v552 = vpow.pop %v551
    %v553 = vadd.f32 %v546, 1.0
    %v554 = vadd.f32 %v548, 1.0
    %v555 = vadd.f32 %v550, 1.0
    %v556 = vadd.f32 %v552, 1.0
    %v557 = vlog2.pop %v553
    %v558 = vmul.f32 %v557, 0.6931472
    %v559 = vlog2.pop %v554
    %v560 = vmul.f32 %v559, 0.6931472
    %v561 = vlog2.pop %v555
    %v562 = vmul.f32 %v561, 0.6931472
    %v563 = vlog2.pop %v556
    %v564 = vmul.f32 %v563, 0.6931472
    %v565 = vadd.f32 %v533, %v558
    %v566 = vadd.f32 %v534, %v560
    %v567 = vadd.f32 %v535, %v562
    %v568 = vadd.f32 %v536, %v564
    %v569 = vld [vmem:[%s5] sm:$0xff]
    %v570 = vld [vmem:[%s5 + $0x8] sm:$0xff]
    %v572 = vsel %vm427, %v569, 0
    %v575 = vsel %vm427, %v570, 0
    %577 = vmatprep.subr.mxu0 0.0
    %578 = vmatpush1.xpose.msra.mxu0 %v429
    %579 = vmatprep.subr.mxu0 0.0
    %580 = vmatpush1.xpose.msra.mxu0 %v432
    %581 = vmatprep.subr.mxu0 0.0
    %582 = vmatpush1.xpose.msra.mxu0 %v435
    %583 = vmatprep.subr.mxu0 0.0
    %584 = vmatpush1.xpose.msra.mxu0 %v438
    %585 = vmatprep.subr.mxu0 0.0
    %586 = vmatpush1.xpose.msra.mxu0 0.0
    %587 = vmatprep.subr.mxu0 0.0
    %588 = vmatpush1.xpose.msra.mxu0 0.0
    %589 = vmatprep.subr.mxu0 0.0
    %590 = vmatpush1.xpose.msra.mxu0 0.0
    %591 = vmatprep.subr.mxu0 0.0
    %592 = vmatpush1.xpose.msra.mxu0 0.0
    %593 = vmatprep.subr.mxu0 0.0
    %594 = vmatpush1.xpose.msra.mxu0 0.0
    %595 = vmatprep.subr.mxu0 0.0
    %596 = vmatpush1.xpose.msra.mxu0 0.0
    %597 = vmatprep.subr.mxu0 0.0
    %598 = vmatpush1.xpose.msra.mxu0 0.0
    %599 = vmatprep.subr.mxu0 0.0
    %600 = vmatpush1.xpose.msra.mxu0 0.0
    %601 = vmatprep.subr.mxu0 0.0
    %602 = vmatpush1.xpose.msra.mxu0 0.0
    %603 = vmatprep.subr.mxu0 0.0
    %604 = vmatpush1.xpose.msra.mxu0 0.0
    %605 = vmatprep.subr.mxu0 0.0
    %606 = vmatpush1.xpose.msra.mxu0 0.0
    %607 = vmatprep.subr.mxu0 0.0
    %608 = vmatpush1.xpose.msra.mxu0 0.0
    %609 = vmatprep.subr.mxu0 0.0
    %610 = vmatpush1.xpose.msra.mxu0 0.0
    %611 = vmatprep.subr.mxu0 0.0
    %612 = vmatpush1.xpose.msra.mxu0 0.0
    %613 = vmatprep.subr.mxu0 0.0
    %614 = vmatpush1.xpose.msra.mxu0 0.0
    %615 = vmatprep.subr.mxu0 0.0
    %616 = vmatpush1.xpose.msra.mxu0 0.0
    %617 = vmatprep.subr.mxu0 0.0
    %618 = vmatpush1.xpose.msra.mxu0 0.0
    %619 = vmatprep.subr.mxu0 0.0
    %620 = vmatpush1.xpose.msra.mxu0 0.0
    %621 = vmatprep.subr.mxu0 0.0
    %622 = vmatpush1.xpose.msra.mxu0 0.0
    %623 = vmatprep.subr.mxu0 0.0
    %624 = vmatpush1.xpose.msra.mxu0 0.0
    %625 = vmatprep.subr.mxu0 0.0
    %626 = vmatpush1.xpose.msra.mxu0 0.0
    %627 = vmatprep.subr.mxu0 0.0
    %628 = vmatpush1.xpose.msra.mxu0 0.0
    %629 = vmatprep.subr.mxu0 0.0
    %630 = vmatpush1.xpose.msra.mxu0 0.0
    %631 = vmatprep.subr.mxu0 0.0
    %632 = vmatpush1.xpose.msra.mxu0 0.0
    %633 = vmatprep.subr.mxu0 0.0
    %634 = vmatpush1.xpose.msra.mxu0 0.0
    %635 = vmatprep.subr.mxu0 0.0
    %636 = vmatpush1.xpose.msra.mxu0 0.0
    %637 = vmatprep.subr.mxu0 0.0
    %638 = vmatpush1.xpose.msra.mxu0 0.0
    %639 = vmatprep.subr.mxu0 0.0
    %640 = vmatpush1.xpose.msra.mxu0 0.0
    %641 = vmatprep.mubr.f32.mxu0 0.0
    %642 = vmatmul.mubr.f32.gmra.mrb[0].mxu0 %v572
    %v643 = vpop.f32.mrb[0].mxu0
    %v644 = vadd.f32 0.0, %v643
    %v645 = vpop.f32.mrb[0].mxu0
    %646 = vmatprep.mubr.f32.mxu0 0.0
    %647 = vmatmul.mubr.f32.gmra.mrb[0].mxu0 %v575
    %v648 = vpop.f32.mrb[0].mxu0
    %v649 = vadd.f32 0.0, %v648
    %v650 = vpop.f32.mrb[0].mxu0
    %651 = vdwg.mxu0
    %v652 = vmul.f32 %v565, %v412
    %v653 = vmul.f32 %v566, %v414
    %v654 = vmul.f32 %v567, %v416
    %v655 = vmul.f32 %v568, %v418
    %v656 = vld [vmem:[#allocation11] sm:$0xff]
    %v657 = vld [vmem:[#allocation11 + $0x8] sm:$0xff]
    %660 = vrot.lane.b32.xlu0 %v567, 64
    %v661 = vpop.permute.xlu0 %660
    %662 = vrot.lane.b32.xlu0 %v568, 64
    %v663 = vpop.permute.xlu0 %662
    %v666 = vsel %vm427, %v565, %v661
    %v667 = vsel %vm427, %v566, %v663
    %v668 = vlaneseq
    %v669 = vshrl.u32 %v668, 7
    %v670 = vsub.s32 0, %v669
    %v671 = vrot.slane %v666, %v670
    %v672 = vmul.f32 %v656, %v671
    %v673 = vmul.f32 %v657, %v671
    %v674 = vmul.f32 %v672, 1.442695
    %v675 = vpow.pop %v674
    %v676 = vmul.f32 %v673, 1.442695
    %v677 = vpow.pop %v676
    %678 = vst [vmem:[#allocation2] sm:$0xff] %v675
    %679 = vst [vmem:[#allocation2 + $0x8] sm:$0xff] %v677
    %681 = vset.pattern.permute.xlu0 0
    %682 = vperm.xlu0 %681, %v644
    %v683 = vpop.permute.xlu0 %682
    %686 = vset.pattern.permute.xlu0 0
    %687 = vperm.xlu0 %686, %v649
    %v688 = vpop.permute.xlu0 %687
    %v690 = vlaneseq
    %v691 = vshrl.u32 %v690, 7
    %v692 = vsub.s32 0, %v691
    %v693 = vrot.slane %v652, %v692
    %v694 = vmul.f32 %v683, %v693
    %v695 = vmul.f32 %v688, %v693
    %696 = vset.pattern.permute.xlu0 16
    %697 = vperm.xlu0 %696, %v644
    %v698 = vpop.permute.xlu0 %697
    %700 = vset.pattern.permute.xlu0 16
    %701 = vperm.xlu0 %700, %v649
    %v702 = vpop.permute.xlu0 %701
    %v704 = vlaneseq
    %v705 = vshrl.u32 %v704, 7
    %v706 = vsub.s32 0, %v705
    %v707 = vrot.slane %v654, %v706
    %v708 = vmul.f32 %v698, %v707
    %v709 = vmul.f32 %v702, %v707
    %712 = vrot.lane.b32.xlu0 %v708, 64
    %v713 = vpop.permute.xlu0 %712
    %714 = vrot.lane.b32.xlu0 %v709, 64
    %v715 = vpop.permute.xlu0 %714
    %v718 = vsel %vm427, %v694, %v713
    %v719 = vsel %vm427, %v695, %v715
    %720 = vst [vmem:[#allocation3] sm:$0xff] %v718
    %721 = vst [vmem:[#allocation3 + $0x8] sm:$0xff] %v719
    %v722 = vlaneseq
    %v723 = vshrl.u32 %v722, 7
    %v724 = vsub.s32 1, %v723
    %v725 = vrot.slane %v666, %v724
    %v726 = vmul.f32 %v656, %v725
    %v727 = vmul.f32 %v657, %v725
    %v728 = vmul.f32 %v726, 1.442695
    %v729 = vpow.pop %v728
    %v730 = vmul.f32 %v727, 1.442695
    %v731 = vpow.pop %v730
    %732 = vst [vmem:[#allocation2 + $0x10] sm:$0xff] %v729
    %733 = vst [vmem:[#allocation2 + $0x18] sm:$0xff] %v731
    %734 = vset.pattern.permute.xlu0 1
    %735 = vperm.xlu0 %734, %v644
    %v736 = vpop.permute.xlu0 %735
    %738 = vset.pattern.permute.xlu0 1
    %739 = vperm.xlu0 %738, %v649
    %v740 = vpop.permute.xlu0 %739
    %v742 = vlaneseq
    %v743 = vshrl.u32 %v742, 7
    %v744 = vsub.s32 1, %v743
    %v745 = vrot.slane %v652, %v744
    %v746 = vmul.f32 %v736, %v745
    %v747 = vmul.f32 %v740, %v745
    %748 = vset.pattern.permute.xlu0 17
    %749 = vperm.xlu0 %748, %v644
    %v750 = vpop.permute.xlu0 %749
    %752 = vset.pattern.permute.xlu0 17
    %753 = vperm.xlu0 %752, %v649
    %v754 = vpop.permute.xlu0 %753
    %v756 = vlaneseq
    %v757 = vshrl.u32 %v756, 7
    %v758 = vsub.s32 1, %v757
    %v759 = vrot.slane %v654, %v758
    %v760 = vmul.f32 %v750, %v759
    %v761 = vmul.f32 %v754, %v759
    %764 = vrot.lane.b32.xlu0 %v760, 64
    %v765 = vpop.permute.xlu0 %764
    %766 = vrot.lane.b32.xlu0 %v761, 64
    %v767 = vpop.permute.xlu0 %766
    %v770 = vsel %vm427, %v746, %v765
    %v771 = vsel %vm427, %v747, %v767
    %772 = vst [vmem:[#allocation3 + $0x10] sm:$0xff] %v770
    %773 = vst [vmem:[#allocation3 + $0x18] sm:$0xff] %v771
    %v774 = vlaneseq
    %v775 = vshrl.u32 %v774, 7
    %v776 = vsub.s32 2, %v775
    %v777 = vrot.slane %v666, %v776
    %v778 = vmul.f32 %v656, %v777
    %v779 = vmul.f32 %v657, %v777
    %v780 = vmul.f32 %v778, 1.442695
    %v781 = vpow.pop %v780
    %v782 = vmul.f32 %v779, 1.442695
    %v783 = vpow.pop %v782
    %784 = vst [vmem:[#allocation2 + $0x20] sm:$0xff] %v781
    %785 = vst [vmem:[#allocation2 + $0x28] sm:$0xff] %v783
    %786 = vset.pattern.permute.xlu0 2
    %787 = vperm.xlu0 %786, %v644
    %v788 = vpop.permute.xlu0 %787
    %790 = vset.pattern.permute.xlu0 2
    %791 = vperm.xlu0 %790, %v649
    %v792 = vpop.permute.xlu0 %791
    %v794 = vlaneseq
    %v795 = vshrl.u32 %v794, 7
    %v796 = vsub.s32 2, %v795
    %v797 = vrot.slane %v652, %v796
    %v798 = vmul.f32 %v788, %v797
    %v799 = vmul.f32 %v792, %v797
    %800 = vset.pattern.permute.xlu0 18
    %801 = vperm.xlu0 %800, %v644
    %v802 = vpop.permute.xlu0 %801
    %804 = vset.pattern.permute.xlu0 18
    %805 = vperm.xlu0 %804, %v649
    %v806 = vpop.permute.xlu0 %805
    %v808 = vlaneseq
    %v809 = vshrl.u32 %v808, 7
    %v810 = vsub.s32 2, %v809
    %v811 = vrot.slane %v654, %v810
    %v812 = vmul.f32 %v802, %v811
    %v813 = vmul.f32 %v806, %v811
    %816 = vrot.lane.b32.xlu0 %v812, 64
    %v817 = vpop.permute.xlu0 %816
    %818 = vrot.lane.b32.xlu0 %v813, 64
    %v819 = vpop.permute.xlu0 %818
    %v822 = vsel %vm427, %v798, %v817
    %v823 = vsel %vm427, %v799, %v819
    %824 = vst [vmem:[#allocation3 + $0x20] sm:$0xff] %v822
    %825 = vst [vmem:[#allocation3 + $0x28] sm:$0xff] %v823
    %v826 = vlaneseq
    %v827 = vshrl.u32 %v826, 7
    %v828 = vsub.s32 3, %v827
    %v829 = vrot.slane %v666, %v828
    %v830 = vmul.f32 %v656, %v829
    %v831 = vmul.f32 %v657, %v829
    %v832 = vmul.f32 %v830, 1.442695
    %v833 = vpow.pop %v832
    %v834 = vmul.f32 %v831, 1.442695
    %v835 = vpow.pop %v834
    %836 = vst [vmem:[#allocation2 + $0x30] sm:$0xff] %v833
    %837 = vst [vmem:[#allocation2 + $0x38] sm:$0xff] %v835
    %838 = vset.pattern.permute.xlu0 3
    %839 = vperm.xlu0 %838, %v644
    %v840 = vpop.permute.xlu0 %839
    %842 = vset.pattern.permute.xlu0 3
    %843 = vperm.xlu0 %842, %v649
    %v844 = vpop.permute.xlu0 %843
    %v846 = vlaneseq
    %v847 = vshrl.u32 %v846, 7
    %v848 = vsub.s32 3, %v847
    %v849 = vrot.slane %v652, %v848
    %v850 = vmul.f32 %v840, %v849
    %v851 = vmul.f32 %v844, %v849
    %852 = vset.pattern.permute.xlu0 19
    %853 = vperm.xlu0 %852, %v644
    %v854 = vpop.permute.xlu0 %853
    %856 = vset.pattern.permute.xlu0 19
    %857 = vperm.xlu0 %856, %v649
    %v858 = vpop.permute.xlu0 %857
    %v860 = vlaneseq
    %v861 = vshrl.u32 %v860, 7
    %v862 = vsub.s32 3, %v861
    %v863 = vrot.slane %v654, %v862
    %v864 = vmul.f32 %v854, %v863
    %v865 = vmul.f32 %v858, %v863
    %868 = vrot.lane.b32.xlu0 %v864, 64
    %v869 = vpop.permute.xlu0 %868
    %870 = vrot.lane.b32.xlu0 %v865, 64
    %v871 = vpop.permute.xlu0 %870
    %v874 = vsel %vm427, %v850, %v869
    %v875 = vsel %vm427, %v851, %v871
    %876 = vst [vmem:[#allocation3 + $0x30] sm:$0xff] %v874
    %877 = vst [vmem:[#allocation3 + $0x38] sm:$0xff] %v875
    %v878 = vlaneseq
    %v879 = vshrl.u32 %v878, 7
    %v880 = vsub.s32 4, %v879
    %v881 = vrot.slane %v666, %v880
    %v882 = vmul.f32 %v656, %v881
    %v883 = vmul.f32 %v657, %v881
    %v884 = vmul.f32 %v882, 1.442695
    %v885 = vpow.pop %v884
    %v886 = vmul.f32 %v883, 1.442695
    %v887 = vpow.pop %v886
    %888 = vst [vmem:[#allocation2 + $0x40] sm:$0xff] %v885
    %889 = vst [vmem:[#allocation2 + $0x48] sm:$0xff] %v887
    %890 = vset.pattern.permute.xlu0 4
    %891 = vperm.xlu0 %890, %v644
    %v892 = vpop.permute.xlu0 %891
    %894 = vset.pattern.permute.xlu0 4
    %895 = vperm.xlu0 %894, %v649
    %v896 = vpop.permute.xlu0 %895
    %v898 = vlaneseq
    %v899 = vshrl.u32 %v898, 7
    %v900 = vsub.s32 4, %v899
    %v901 = vrot.slane %v652, %v900
    %v902 = vmul.f32 %v892, %v901
    %v903 = vmul.f32 %v896, %v901
    %904 = vset.pattern.permute.xlu0 20
    %905 = vperm.xlu0 %904, %v644
    %v906 = vpop.permute.xlu0 %905
    %908 = vset.pattern.permute.xlu0 20
    %909 = vperm.xlu0 %908, %v649
    %v910 = vpop.permute.xlu0 %909
    %v912 = vlaneseq
    %v913 = vshrl.u32 %v912, 7
    %v914 = vsub.s32 4, %v913
    %v915 = vrot.slane %v654, %v914
    %v916 = vmul.f32 %v906, %v915
    %v917 = vmul.f32 %v910, %v915
    %920 = vrot.lane.b32.xlu0 %v916, 64
    %v921 = vpop.permute.xlu0 %920
    %922 = vrot.lane.b32.xlu0 %v917, 64
    %v923 = vpop.permute.xlu0 %922
    %v926 = vsel %vm427, %v902, %v921
    %v927 = vsel %vm427, %v903, %v923
    %928 = vst [vmem:[#allocation3 + $0x40] sm:$0xff] %v926
    %929 = vst [vmem:[#allocation3 + $0x48] sm:$0xff] %v927
    %v930 = vlaneseq
    %v931 = vshrl.u32 %v930, 7
    %v932 = vsub.s32 5, %v931
    %v933 = vrot.slane %v666, %v932
    %v934 = vmul.f32 %v656, %v933
    %v935 = vmul.f32 %v657, %v933
    %v936 = vmul.f32 %v934, 1.442695
    %v937 = vpow.pop %v936
    %v938 = vmul.f32 %v935, 1.442695
    %v939 = vpow.pop %v938
    %940 = vst [vmem:[#allocation2 + $0x50] sm:$0xff] %v937
    %941 = vst [vmem:[#allocation2 + $0x58] sm:$0xff] %v939
    %942 = vset.pattern.permute.xlu0 5
    %943 = vperm.xlu0 %942, %v644
    %v944 = vpop.permute.xlu0 %943
    %946 = vset.pattern.permute.xlu0 5
    %947 = vperm.xlu0 %946, %v649
    %v948 = vpop.permute.xlu0 %947
    %v950 = vlaneseq
    %v951 = vshrl.u32 %v950, 7
    %v952 = vsub.s32 5, %v951
    %v953 = vrot.slane %v652, %v952
    %v954 = vmul.f32 %v944, %v953
    %v955 = vmul.f32 %v948, %v953
    %956 = vset.pattern.permute.xlu0 21
    %957 = vperm.xlu0 %956, %v644
    %v958 = vpop.permute.xlu0 %957
    %960 = vset.pattern.permute.xlu0 21
    %961 = vperm.xlu0 %960, %v649
    %v962 = vpop.permute.xlu0 %961
    %v964 = vlaneseq
    %v965 = vshrl.u32 %v964, 7
    %v966 = vsub.s32 5, %v965
    %v967 = vrot.slane %v654, %v966
    %v968 = vmul.f32 %v958, %v967
    %v969 = vmul.f32 %v962, %v967
    %972 = vrot.lane.b32.xlu0 %v968, 64
    %v973 = vpop.permute.xlu0 %972
    %974 = vrot.lane.b32.xlu0 %v969, 64
    %v975 = vpop.permute.xlu0 %974
    %v978 = vsel %vm427, %v954, %v973
    %v979 = vsel %vm427, %v955, %v975
    %980 = vst [vmem:[#allocation3 + $0x50] sm:$0xff] %v978
    %981 = vst [vmem:[#allocation3 + $0x58] sm:$0xff] %v979
    %v982 = vlaneseq
    %v983 = vshrl.u32 %v982, 7
    %v984 = vsub.s32 6, %v983
    %v985 = vrot.slane %v666, %v984
    %v986 = vmul.f32 %v656, %v985
    %v987 = vmul.f32 %v657, %v985
    %v988 = vmul.f32 %v986, 1.442695
    %v989 = vpow.pop %v988
    %v990 = vmul.f32 %v987, 1.442695
    %v991 = vpow.pop %v990
    %992 = vst [vmem:[#allocation2 + $0x60] sm:$0xff] %v989
    %993 = vst [vmem:[#allocation2 + $0x68] sm:$0xff] %v991
    %994 = vset.pattern.permute.xlu0 6
    %995 = vperm.xlu0 %994, %v644
    %v996 = vpop.permute.xlu0 %995
    %998 = vset.pattern.permute.xlu0 6
    %999 = vperm.xlu0 %998, %v649
    %v1000 = vpop.permute.xlu0 %999
    %v1002 = vlaneseq
    %v1003 = vshrl.u32 %v1002, 7
    %v1004 = vsub.s32 6, %v1003
    %v1005 = vrot.slane %v652, %v1004
    %v1006 = vmul.f32 %v996, %v1005
    %v1007 = vmul.f32 %v1000, %v1005
    %1008 = vset.pattern.permute.xlu0 22
    %1009 = vperm.xlu0 %1008, %v644
    %v1010 = vpop.permute.xlu0 %1009
    %1012 = vset.pattern.permute.xlu0 22
    %1013 = vperm.xlu0 %1012, %v649
    %v1014 = vpop.permute.xlu0 %1013
    %v1016 = vlaneseq
    %v1017 = vshrl.u32 %v1016, 7
    %v1018 = vsub.s32 6, %v1017
    %v1019 = vrot.slane %v654, %v1018
    %v1020 = vmul.f32 %v1010, %v1019
    %v1021 = vmul.f32 %v1014, %v1019
    %1024 = vrot.lane.b32.xlu0 %v1020, 64
    %v1025 = vpop.permute.xlu0 %1024
    %1026 = vrot.lane.b32.xlu0 %v1021, 64
    %v1027 = vpop.permute.xlu0 %1026
    %v1030 = vsel %vm427, %v1006, %v1025
    %v1031 = vsel %vm427, %v1007, %v1027
    %1032 = vst [vmem:[#allocation3 + $0x60] sm:$0xff] %v1030
    %1033 = vst [vmem:[#allocation3 + $0x68] sm:$0xff] %v1031
    %v1034 = vlaneseq
    %v1035 = vshrl.u32 %v1034, 7
    %v1036 = vsub.s32 7, %v1035
    %v1037 = vrot.slane %v666, %v1036
    %v1038 = vmul.f32 %v656, %v1037
    %v1039 = vmul.f32 %v657, %v1037
    %v1040 = vmul.f32 %v1038, 1.442695
    %v1041 = vpow.pop %v1040
    %v1042 = vmul.f32 %v1039, 1.442695
    %v1043 = vpow.pop %v1042
    %1044 = vst [vmem:[#allocation2 + $0x70] sm:$0xff] %v1041
    %1045 = vst [vmem:[#allocation2 + $0x78] sm:$0xff] %v1043
    %1046 = vset.pattern.permute.xlu0 7
    %1047 = vperm.xlu0 %1046, %v644
    %v1048 = vpop.permute.xlu0 %1047
    %1050 = vset.pattern.permute.xlu0 7
    %1051 = vperm.xlu0 %1050, %v649
    %v1052 = vpop.permute.xlu0 %1051
    %v1054 = vlaneseq
    %v1055 = vshrl.u32 %v1054, 7
    %v1056 = vsub.s32 7, %v1055
    %v1057 = vrot.slane %v652, %v1056
    %v1058 = vmul.f32 %v1048, %v1057
    %v1059 = vmul.f32 %v1052, %v1057
    %1060 = vset.pattern.permute.xlu0 23
    %1061 = vperm.xlu0 %1060, %v644
    %v1062 = vpop.permute.xlu0 %1061
    %1064 = vset.pattern.permute.xlu0 23
    %1065 = vperm.xlu0 %1064, %v649
    %v1066 = vpop.permute.xlu0 %1065
    %v1068 = vlaneseq
    %v1069 = vshrl.u32 %v1068, 7
    %v1070 = vsub.s32 7, %v1069
    %v1071 = vrot.slane %v654, %v1070
    %v1072 = vmul.f32 %v1062, %v1071
    %v1073 = vmul.f32 %v1066, %v1071
    %1076 = vrot.lane.b32.xlu0 %v1072, 64
    %v1077 = vpop.permute.xlu0 %1076
    %1078 = vrot.lane.b32.xlu0 %v1073, 64
    %v1079 = vpop.permute.xlu0 %1078
    %v1082 = vsel %vm427, %v1058, %v1077
    %v1083 = vsel %vm427, %v1059, %v1079
    %1084 = vst [vmem:[#allocation3 + $0x70] sm:$0xff] %v1082
    %1085 = vst [vmem:[#allocation3 + $0x78] sm:$0xff] %v1083
    %v1086 = vlaneseq
    %v1087 = vshrl.u32 %v1086, 7
    %v1088 = vsub.s32 0, %v1087
    %v1089 = vrot.slane %v667, %v1088
    %v1090 = vmul.f32 %v656, %v1089
    %v1091 = vmul.f32 %v657, %v1089
    %v1092 = vmul.f32 %v1090, 1.442695
    %v1093 = vpow.pop %v1092
    %v1094 = vmul.f32 %v1091, 1.442695
    %v1095 = vpow.pop %v1094
    %1096 = vst [vmem:[#allocation2 + $0x80] sm:$0xff] %v1093
    %1097 = vst [vmem:[#allocation2 + $0x88] sm:$0xff] %v1095
    %1098 = vset.pattern.permute.xlu0 8
    %1099 = vperm.xlu0 %1098, %v644
    %v1100 = vpop.permute.xlu0 %1099
    %1102 = vset.pattern.permute.xlu0 8
    %1103 = vperm.xlu0 %1102, %v649
    %v1104 = vpop.permute.xlu0 %1103
    %v1106 = vlaneseq
    %v1107 = vshrl.u32 %v1106, 7
    %v1108 = vsub.s32 0, %v1107
    %v1109 = vrot.slane %v653, %v1108
    %v1110 = vmul.f32 %v1100, %v1109
    %v1111 = vmul.f32 %v1104, %v1109
    %1112 = vset.pattern.permute.xlu0 24
    %1113 = vperm.xlu0 %1112, %v644
    %v1114 = vpop.permute.xlu0 %1113
    %1116 = vset.pattern.permute.xlu0 24
    %1117 = vperm.xlu0 %1116, %v649
    %v1118 = vpop.permute.xlu0 %1117
    %v1120 = vlaneseq
    %v1121 = vshrl.u32 %v1120, 7
    %v1122 = vsub.s32 0, %v1121
    %v1123 = vrot.slane %v655, %v1122
    %v1124 = vmul.f32 %v1114, %v1123
    %v1125 = vmul.f32 %v1118, %v1123
    %1128 = vrot.lane.b32.xlu0 %v1124, 64
    %v1129 = vpop.permute.xlu0 %1128
    %1130 = vrot.lane.b32.xlu0 %v1125, 64
    %v1131 = vpop.permute.xlu0 %1130
    %v1134 = vsel %vm427, %v1110, %v1129
    %v1135 = vsel %vm427, %v1111, %v1131
    %1136 = vst [vmem:[#allocation3 + $0x80] sm:$0xff] %v1134
    %1137 = vst [vmem:[#allocation3 + $0x88] sm:$0xff] %v1135
    %v1138 = vlaneseq
    %v1139 = vshrl.u32 %v1138, 7
    %v1140 = vsub.s32 1, %v1139
    %v1141 = vrot.slane %v667, %v1140
    %v1142 = vmul.f32 %v656, %v1141
    %v1143 = vmul.f32 %v657, %v1141
    %v1144 = vmul.f32 %v1142, 1.442695
    %v1145 = vpow.pop %v1144
    %v1146 = vmul.f32 %v1143, 1.442695
    %v1147 = vpow.pop %v1146
    %1148 = vst [vmem:[#allocation2 + $0x90] sm:$0xff] %v1145
    %1149 = vst [vmem:[#allocation2 + $0x98] sm:$0xff] %v1147
    %1150 = vset.pattern.permute.xlu0 9
    %1151 = vperm.xlu0 %1150, %v644
    %v1152 = vpop.permute.xlu0 %1151
    %1154 = vset.pattern.permute.xlu0 9
    %1155 = vperm.xlu0 %1154, %v649
    %v1156 = vpop.permute.xlu0 %1155
    %v1158 = vlaneseq
    %v1159 = vshrl.u32 %v1158, 7
    %v1160 = vsub.s32 1, %v1159
    %v1161 = vrot.slane %v653, %v1160
    %v1162 = vmul.f32 %v1152, %v1161
    %v1163 = vmul.f32 %v1156, %v1161
    %1164 = vset.pattern.permute.xlu0 25
    %1165 = vperm.xlu0 %1164, %v644
    %v1166 = vpop.permute.xlu0 %1165
    %1168 = vset.pattern.permute.xlu0 25
    %1169 = vperm.xlu0 %1168, %v649
    %v1170 = vpop.permute.xlu0 %1169
    %v1172 = vlaneseq
    %v1173 = vshrl.u32 %v1172, 7
    %v1174 = vsub.s32 1, %v1173
    %v1175 = vrot.slane %v655, %v1174
    %v1176 = vmul.f32 %v1166, %v1175
    %v1177 = vmul.f32 %v1170, %v1175
    %1180 = vrot.lane.b32.xlu0 %v1176, 64
    %v1181 = vpop.permute.xlu0 %1180
    %1182 = vrot.lane.b32.xlu0 %v1177, 64
    %v1183 = vpop.permute.xlu0 %1182
    %v1186 = vsel %vm427, %v1162, %v1181
    %v1187 = vsel %vm427, %v1163, %v1183
    %1188 = vst [vmem:[#allocation3 + $0x90] sm:$0xff] %v1186
    %1189 = vst [vmem:[#allocation3 + $0x98] sm:$0xff] %v1187
    %v1190 = vlaneseq
    %v1191 = vshrl.u32 %v1190, 7
    %v1192 = vsub.s32 2, %v1191
    %v1193 = vrot.slane %v667, %v1192
    %v1194 = vmul.f32 %v656, %v1193
    %v1195 = vmul.f32 %v657, %v1193
    %v1196 = vmul.f32 %v1194, 1.442695
    %v1197 = vpow.pop %v1196
    %v1198 = vmul.f32 %v1195, 1.442695
    %v1199 = vpow.pop %v1198
    %1200 = vst [vmem:[#allocation2 + $0xa0] sm:$0xff] %v1197
    %1201 = vst [vmem:[#allocation2 + $0xa8] sm:$0xff] %v1199
    %1202 = vset.pattern.permute.xlu0 10
    %1203 = vperm.xlu0 %1202, %v644
    %v1204 = vpop.permute.xlu0 %1203
    %1206 = vset.pattern.permute.xlu0 10
    %1207 = vperm.xlu0 %1206, %v649
    %v1208 = vpop.permute.xlu0 %1207
    %v1210 = vlaneseq
    %v1211 = vshrl.u32 %v1210, 7
    %v1212 = vsub.s32 2, %v1211
    %v1213 = vrot.slane %v653, %v1212
    %v1214 = vmul.f32 %v1204, %v1213
    %v1215 = vmul.f32 %v1208, %v1213
    %1216 = vset.pattern.permute.xlu0 26
    %1217 = vperm.xlu0 %1216, %v644
    %v1218 = vpop.permute.xlu0 %1217
    %1220 = vset.pattern.permute.xlu0 26
    %1221 = vperm.xlu0 %1220, %v649
    %v1222 = vpop.permute.xlu0 %1221
    %v1224 = vlaneseq
    %v1225 = vshrl.u32 %v1224, 7
    %v1226 = vsub.s32 2, %v1225
    %v1227 = vrot.slane %v655, %v1226
    %v1228 = vmul.f32 %v1218, %v1227
    %v1229 = vmul.f32 %v1222, %v1227
    %1232 = vrot.lane.b32.xlu0 %v1228, 64
    %v1233 = vpop.permute.xlu0 %1232
    %1234 = vrot.lane.b32.xlu0 %v1229, 64
    %v1235 = vpop.permute.xlu0 %1234
    %v1238 = vsel %vm427, %v1214, %v1233
    %v1239 = vsel %vm427, %v1215, %v1235
    %1240 = vst [vmem:[#allocation3 + $0xa0] sm:$0xff] %v1238
    %1241 = vst [vmem:[#allocation3 + $0xa8] sm:$0xff] %v1239
    %v1242 = vlaneseq
    %v1243 = vshrl.u32 %v1242, 7
    %v1244 = vsub.s32 3, %v1243
    %v1245 = vrot.slane %v667, %v1244
    %v1246 = vmul.f32 %v656, %v1245
    %v1247 = vmul.f32 %v657, %v1245
    %v1248 = vmul.f32 %v1246, 1.442695
    %v1249 = vpow.pop %v1248
    %v1250 = vmul.f32 %v1247, 1.442695
    %v1251 = vpow.pop %v1250
    %1252 = vst [vmem:[#allocation2 + $0xb0] sm:$0xff] %v1249
    %1253 = vst [vmem:[#allocation2 + $0xb8] sm:$0xff] %v1251
    %1254 = vset.pattern.permute.xlu0 11
    %1255 = vperm.xlu0 %1254, %v644
    %v1256 = vpop.permute.xlu0 %1255
    %1258 = vset.pattern.permute.xlu0 11
    %1259 = vperm.xlu0 %1258, %v649
    %v1260 = vpop.permute.xlu0 %1259
    %v1262 = vlaneseq
    %v1263 = vshrl.u32 %v1262, 7
    %v1264 = vsub.s32 3, %v1263
    %v1265 = vrot.slane %v653, %v1264
    %v1266 = vmul.f32 %v1256, %v1265
    %v1267 = vmul.f32 %v1260, %v1265
    %1268 = vset.pattern.permute.xlu0 27
    %1269 = vperm.xlu0 %1268, %v644
    %v1270 = vpop.permute.xlu0 %1269
    %1272 = vset.pattern.permute.xlu0 27
    %1273 = vperm.xlu0 %1272, %v649
    %v1274 = vpop.permute.xlu0 %1273
    %v1276 = vlaneseq
    %v1277 = vshrl.u32 %v1276, 7
    %v1278 = vsub.s32 3, %v1277
    %v1279 = vrot.slane %v655, %v1278
    %v1280 = vmul.f32 %v1270, %v1279
    %v1281 = vmul.f32 %v1274, %v1279
    %1284 = vrot.lane.b32.xlu0 %v1280, 64
    %v1285 = vpop.permute.xlu0 %1284
    %1286 = vrot.lane.b32.xlu0 %v1281, 64
    %v1287 = vpop.permute.xlu0 %1286
    %v1290 = vsel %vm427, %v1266, %v1285
    %v1291 = vsel %vm427, %v1267, %v1287
    %1292 = vst [vmem:[#allocation3 + $0xb0] sm:$0xff] %v1290
    %1293 = vst [vmem:[#allocation3 + $0xb8] sm:$0xff] %v1291
    %v1294 = vlaneseq
    %v1295 = vshrl.u32 %v1294, 7
    %v1296 = vsub.s32 4, %v1295
    %v1297 = vrot.slane %v667, %v1296
    %v1298 = vmul.f32 %v656, %v1297
    %v1299 = vmul.f32 %v657, %v1297
    %v1300 = vmul.f32 %v1298, 1.442695
    %v1301 = vpow.pop %v1300
    %v1302 = vmul.f32 %v1299, 1.442695
    %v1303 = vpow.pop %v1302
    %1304 = vst [vmem:[#allocation2 + $0xc0] sm:$0xff] %v1301
    %1305 = vst [vmem:[#allocation2 + $0xc8] sm:$0xff] %v1303
    %1306 = vset.pattern.permute.xlu0 12
    %1307 = vperm.xlu0 %1306, %v644
    %v1308 = vpop.permute.xlu0 %1307
    %1310 = vset.pattern.permute.xlu0 12
    %1311 = vperm.xlu0 %1310, %v649
    %v1312 = vpop.permute.xlu0 %1311
    %v1314 = vlaneseq
    %v1315 = vshrl.u32 %v1314, 7
    %v1316 = vsub.s32 4, %v1315
    %v1317 = vrot.slane %v653, %v1316
    %v1318 = vmul.f32 %v1308, %v1317
    %v1319 = vmul.f32 %v1312, %v1317
    %1320 = vset.pattern.permute.xlu0 28
    %1321 = vperm.xlu0 %1320, %v644
    %v1322 = vpop.permute.xlu0 %1321
    %1324 = vset.pattern.permute.xlu0 28
    %1325 = vperm.xlu0 %1324, %v649
    %v1326 = vpop.permute.xlu0 %1325
    %v1328 = vlaneseq
    %v1329 = vshrl.u32 %v1328, 7
    %v1330 = vsub.s32 4, %v1329
    %v1331 = vrot.slane %v655, %v1330
    %v1332 = vmul.f32 %v1322, %v1331
    %v1333 = vmul.f32 %v1326, %v1331
    %1336 = vrot.lane.b32.xlu0 %v1332, 64
    %v1337 = vpop.permute.xlu0 %1336
    %1338 = vrot.lane.b32.xlu0 %v1333, 64
    %v1339 = vpop.permute.xlu0 %1338
    %v1342 = vsel %vm427, %v1318, %v1337
    %v1343 = vsel %vm427, %v1319, %v1339
    %1344 = vst [vmem:[#allocation3 + $0xc0] sm:$0xff] %v1342
    %1345 = vst [vmem:[#allocation3 + $0xc8] sm:$0xff] %v1343
    %v1346 = vlaneseq
    %v1347 = vshrl.u32 %v1346, 7
    %v1348 = vsub.s32 5, %v1347
    %v1349 = vrot.slane %v667, %v1348
    %v1350 = vmul.f32 %v656, %v1349
    %v1351 = vmul.f32 %v657, %v1349
    %v1352 = vmul.f32 %v1350, 1.442695
    %v1353 = vpow.pop %v1352
    %v1354 = vmul.f32 %v1351, 1.442695
    %v1355 = vpow.pop %v1354
    %1356 = vst [vmem:[#allocation2 + $0xd0] sm:$0xff] %v1353
    %1357 = vst [vmem:[#allocation2 + $0xd8] sm:$0xff] %v1355
    %1358 = vset.pattern.permute.xlu0 13
    %1359 = vperm.xlu0 %1358, %v644
    %v1360 = vpop.permute.xlu0 %1359
    %1362 = vset.pattern.permute.xlu0 13
    %1363 = vperm.xlu0 %1362, %v649
    %v1364 = vpop.permute.xlu0 %1363
    %v1366 = vlaneseq
    %v1367 = vshrl.u32 %v1366, 7
    %v1368 = vsub.s32 5, %v1367
    %v1369 = vrot.slane %v653, %v1368
    %v1370 = vmul.f32 %v1360, %v1369
    %v1371 = vmul.f32 %v1364, %v1369
    %1372 = vset.pattern.permute.xlu0 29
    %1373 = vperm.xlu0 %1372, %v644
    %v1374 = vpop.permute.xlu0 %1373
    %1376 = vset.pattern.permute.xlu0 29
    %1377 = vperm.xlu0 %1376, %v649
    %v1378 = vpop.permute.xlu0 %1377
    %v1380 = vlaneseq
    %v1381 = vshrl.u32 %v1380, 7
    %v1382 = vsub.s32 5, %v1381
    %v1383 = vrot.slane %v655, %v1382
    %v1384 = vmul.f32 %v1374, %v1383
    %v1385 = vmul.f32 %v1378, %v1383
    %1388 = vrot.lane.b32.xlu0 %v1384, 64
    %v1389 = vpop.permute.xlu0 %1388
    %1390 = vrot.lane.b32.xlu0 %v1385, 64
    %v1391 = vpop.permute.xlu0 %1390
    %v1394 = vsel %vm427, %v1370, %v1389
    %v1395 = vsel %vm427, %v1371, %v1391
    %1396 = vst [vmem:[#allocation3 + $0xd0] sm:$0xff] %v1394
    %1397 = vst [vmem:[#allocation3 + $0xd8] sm:$0xff] %v1395
    %v1398 = vlaneseq
    %v1399 = vshrl.u32 %v1398, 7
    %v1400 = vsub.s32 6, %v1399
    %v1401 = vrot.slane %v667, %v1400
    %v1402 = vmul.f32 %v656, %v1401
    %v1403 = vmul.f32 %v657, %v1401
    %v1404 = vmul.f32 %v1402, 1.442695
    %v1405 = vpow.pop %v1404
    %v1406 = vmul.f32 %v1403, 1.442695
    %v1407 = vpow.pop %v1406
    %1408 = vst [vmem:[#allocation2 + $0xe0] sm:$0xff] %v1405
    %1409 = vst [vmem:[#allocation2 + $0xe8] sm:$0xff] %v1407
    %1410 = vset.pattern.permute.xlu0 14
    %1411 = vperm.xlu0 %1410, %v644
    %v1412 = vpop.permute.xlu0 %1411
    %1414 = vset.pattern.permute.xlu0 14
    %1415 = vperm.xlu0 %1414, %v649
    %v1416 = vpop.permute.xlu0 %1415
    %v1418 = vlaneseq
    %v1419 = vshrl.u32 %v1418, 7
    %v1420 = vsub.s32 6, %v1419
    %v1421 = vrot.slane %v653, %v1420
    %v1422 = vmul.f32 %v1412, %v1421
    %v1423 = vmul.f32 %v1416, %v1421
    %1424 = vset.pattern.permute.xlu0 30
    %1425 = vperm.xlu0 %1424, %v644
    %v1426 = vpop.permute.xlu0 %1425
    %1428 = vset.pattern.permute.xlu0 30
    %1429 = vperm.xlu0 %1428, %v649
    %v1430 = vpop.permute.xlu0 %1429
    %v1432 = vlaneseq
    %v1433 = vshrl.u32 %v1432, 7
    %v1434 = vsub.s32 6, %v1433
    %v1435 = vrot.slane %v655, %v1434
    %v1436 = vmul.f32 %v1426, %v1435
    %v1437 = vmul.f32 %v1430, %v1435
    %1440 = vrot.lane.b32.xlu0 %v1436, 64
    %v1441 = vpop.permute.xlu0 %1440
    %1442 = vrot.lane.b32.xlu0 %v1437, 64
    %v1443 = vpop.permute.xlu0 %1442
    %v1446 = vsel %vm427, %v1422, %v1441
    %v1447 = vsel %vm427, %v1423, %v1443
    %1448 = vst [vmem:[#allocation3 + $0xe0] sm:$0xff] %v1446
    %1449 = vst [vmem:[#allocation3 + $0xe8] sm:$0xff] %v1447
    %v1450 = vlaneseq
    %v1451 = vshrl.u32 %v1450, 7
    %v1452 = vsub.s32 7, %v1451
    %v1453 = vrot.slane %v667, %v1452
    %v1454 = vmul.f32 %v656, %v1453
    %v1455 = vmul.f32 %v657, %v1453
    %v1456 = vmul.f32 %v1454, 1.442695
    %v1457 = vpow.pop %v1456
    %v1458 = vmul.f32 %v1455, 1.442695
    %v1459 = vpow.pop %v1458
    %1460 = vst [vmem:[#allocation2 + $0xf0] sm:$0xff] %v1457
    %1461 = vst [vmem:[#allocation2 + $0xf8] sm:$0xff] %v1459
    %1462 = vset.pattern.permute.xlu0 15
    %1463 = vperm.xlu0 %1462, %v644
    %v1464 = vpop.permute.xlu0 %1463
    %1466 = vset.pattern.permute.xlu0 15
    %1467 = vperm.xlu0 %1466, %v649
    %v1468 = vpop.permute.xlu0 %1467
    %v1470 = vlaneseq
    %v1471 = vshrl.u32 %v1470, 7
    %v1472 = vsub.s32 7, %v1471
    %v1473 = vrot.slane %v653, %v1472
    %v1474 = vmul.f32 %v1464, %v1473
    %v1475 = vmul.f32 %v1468, %v1473
    %1476 = vset.pattern.permute.xlu0 31
    %1477 = vperm.xlu0 %1476, %v644
    %v1478 = vpop.permute.xlu0 %1477
    %1480 = vset.pattern.permute.xlu0 31
    %1481 = vperm.xlu0 %1480, %v649
    %v1482 = vpop.permute.xlu0 %1481
    %v1484 = vlaneseq
    %v1485 = vshrl.u32 %v1484, 7
    %v1486 = vsub.s32 7, %v1485
    %v1487 = vrot.slane %v655, %v1486
    %v1488 = vmul.f32 %v1478, %v1487
    %v1489 = vmul.f32 %v1482, %v1487
    %1492 = vrot.lane.b32.xlu0 %v1488, 64
    %v1493 = vpop.permute.xlu0 %1492
    %1494 = vrot.lane.b32.xlu0 %v1489, 64
    %v1495 = vpop.permute.xlu0 %1494
    %v1498 = vsel %vm427, %v1474, %v1493
    %v1499 = vsel %vm427, %v1475, %v1495
    %1500 = vst [vmem:[#allocation3 + $0xf0] sm:$0xff] %v1498
    %1501 = vst [vmem:[#allocation3 + $0xf8] sm:$0xff] %v1499
    %v1502 = vld [vmem:[#allocation2] sm:$0xff]
    %v1503 = vld [vmem:[#allocation2 + $0x8] sm:$0xff]
    %v1504 = vmul.f32 %v1502, 0.0
    %v1505 = vmul.f32 %v1503, 0.0
    %v1506 = vld [vmem:[#allocation3] sm:$0xff]
    %v1507 = vld [vmem:[#allocation3 + $0x8] sm:$0xff]
    %v1508 = vadd.f32 %v1504, %v1506
    %v1509 = vadd.f32 %v1505, %v1507
    %1510 = vst [vmem:[#allocation4] sm:$0xff] %v1508
    %1511 = vst [vmem:[#allocation4 + $0x8] sm:$0xff] %v1509
    %v1512 = vld [vmem:[#allocation2 + $0x10] sm:$0xff]
    %v1513 = vld [vmem:[#allocation2 + $0x18] sm:$0xff]
    %v1514 = vmul.f32 %v1512, %v1508
    %v1515 = vmul.f32 %v1513, %v1509
    %v1516 = vld [vmem:[#allocation3 + $0x10] sm:$0xff]
    %v1517 = vld [vmem:[#allocation3 + $0x18] sm:$0xff]
    %v1518 = vadd.f32 %v1514, %v1516
    %v1519 = vadd.f32 %v1515, %v1517
    %1520 = vst [vmem:[#allocation4 + $0x10] sm:$0xff] %v1518
    %1521 = vst [vmem:[#allocation4 + $0x18] sm:$0xff] %v1519
    %v1522 = vld [vmem:[#allocation2 + $0x20] sm:$0xff]
    %v1523 = vld [vmem:[#allocation2 + $0x28] sm:$0xff]
    %v1524 = vmul.f32 %v1522, %v1518
    %v1525 = vmul.f32 %v1523, %v1519
    %v1526 = vld [vmem:[#allocation3 + $0x20] sm:$0xff]
    %v1527 = vld [vmem:[#allocation3 + $0x28] sm:$0xff]
    %v1528 = vadd.f32 %v1524, %v1526
    %v1529 = vadd.f32 %v1525, %v1527
    %1530 = vst [vmem:[#allocation4 + $0x20] sm:$0xff] %v1528
    %1531 = vst [vmem:[#allocation4 + $0x28] sm:$0xff] %v1529
    %v1532 = vld [vmem:[#allocation2 + $0x30] sm:$0xff]
    %v1533 = vld [vmem:[#allocation2 + $0x38] sm:$0xff]
    %v1534 = vmul.f32 %v1532, %v1528
    %v1535 = vmul.f32 %v1533, %v1529
    %v1536 = vld [vmem:[#allocation3 + $0x30] sm:$0xff]
    %v1537 = vld [vmem:[#allocation3 + $0x38] sm:$0xff]
    %v1538 = vadd.f32 %v1534, %v1536
    %v1539 = vadd.f32 %v1535, %v1537
    %1540 = vst [vmem:[#allocation4 + $0x30] sm:$0xff] %v1538
    %1541 = vst [vmem:[#allocation4 + $0x38] sm:$0xff] %v1539
    %v1542 = vld [vmem:[#allocation2 + $0x40] sm:$0xff]
    %v1543 = vld [vmem:[#allocation2 + $0x48] sm:$0xff]
    %v1544 = vmul.f32 %v1542, %v1538
    %v1545 = vmul.f32 %v1543, %v1539
    %v1546 = vld [vmem:[#allocation3 + $0x40] sm:$0xff]
    %v1547 = vld [vmem:[#allocation3 + $0x48] sm:$0xff]
    %v1548 = vadd.f32 %v1544, %v1546
    %v1549 = vadd.f32 %v1545, %v1547
    %1550 = vst [vmem:[#allocation4 + $0x40] sm:$0xff] %v1548
    %1551 = vst [vmem:[#allocation4 + $0x48] sm:$0xff] %v1549
    %v1552 = vld [vmem:[#allocation2 + $0x50] sm:$0xff]
    %v1553 = vld [vmem:[#allocation2 + $0x58] sm:$0xff]
    %v1554 = vmul.f32 %v1552, %v1548
    %v1555 = vmul.f32 %v1553, %v1549
    %v1556 = vld [vmem:[#allocation3 + $0x50] sm:$0xff]
    %v1557 = vld [vmem:[#allocation3 + $0x58] sm:$0xff]
    %v1558 = vadd.f32 %v1554, %v1556
    %v1559 = vadd.f32 %v1555, %v1557
    %1560 = vst [vmem:[#allocation4 + $0x50] sm:$0xff] %v1558
    %1561 = vst [vmem:[#allocation4 + $0x58] sm:$0xff] %v1559
    %v1562 = vld [vmem:[#allocation2 + $0x60] sm:$0xff]
    %v1563 = vld [vmem:[#allocation2 + $0x68] sm:$0xff]
    %v1564 = vmul.f32 %v1562, %v1558
    %v1565 = vmul.f32 %v1563, %v1559
    %v1566 = vld [vmem:[#allocation3 + $0x60] sm:$0xff]
    %v1567 = vld [vmem:[#allocation3 + $0x68] sm:$0xff]
    %v1568 = vadd.f32 %v1564, %v1566
    %v1569 = vadd.f32 %v1565, %v1567
    %1570 = vst [vmem:[#allocation4 + $0x60] sm:$0xff] %v1568
    %1571 = vst [vmem:[#allocation4 + $0x68] sm:$0xff] %v1569
    %v1572 = vld [vmem:[#allocation2 + $0x70] sm:$0xff]
    %v1573 = vld [vmem:[#allocation2 + $0x78] sm:$0xff]
    %v1574 = vmul.f32 %v1572, %v1568
    %v1575 = vmul.f32 %v1573, %v1569
    %v1576 = vld [vmem:[#allocation3 + $0x70] sm:$0xff]
    %v1577 = vld [vmem:[#allocation3 + $0x78] sm:$0xff]
    %v1578 = vadd.f32 %v1574, %v1576
    %v1579 = vadd.f32 %v1575, %v1577
    %1580 = vst [vmem:[#allocation4 + $0x70] sm:$0xff] %v1578
    %1581 = vst [vmem:[#allocation4 + $0x78] sm:$0xff] %v1579
    %v1582 = vld [vmem:[#allocation2 + $0x80] sm:$0xff]
    %v1583 = vld [vmem:[#allocation2 + $0x88] sm:$0xff]
    %v1584 = vmul.f32 %v1582, %v1578
    %v1585 = vmul.f32 %v1583, %v1579
    %v1586 = vld [vmem:[#allocation3 + $0x80] sm:$0xff]
    %v1587 = vld [vmem:[#allocation3 + $0x88] sm:$0xff]
    %v1588 = vadd.f32 %v1584, %v1586
    %v1589 = vadd.f32 %v1585, %v1587
    %1590 = vst [vmem:[#allocation4 + $0x80] sm:$0xff] %v1588
    %1591 = vst [vmem:[#allocation4 + $0x88] sm:$0xff] %v1589
    %v1592 = vld [vmem:[#allocation2 + $0x90] sm:$0xff]
    %v1593 = vld [vmem:[#allocation2 + $0x98] sm:$0xff]
    %v1594 = vmul.f32 %v1592, %v1588
    %v1595 = vmul.f32 %v1593, %v1589
    %v1596 = vld [vmem:[#allocation3 + $0x90] sm:$0xff]
    %v1597 = vld [vmem:[#allocation3 + $0x98] sm:$0xff]
    %v1598 = vadd.f32 %v1594, %v1596
    %v1599 = vadd.f32 %v1595, %v1597
    %1600 = vst [vmem:[#allocation4 + $0x90] sm:$0xff] %v1598
    %1601 = vst [vmem:[#allocation4 + $0x98] sm:$0xff] %v1599
    %v1602 = vld [vmem:[#allocation2 + $0xa0] sm:$0xff]
    %v1603 = vld [vmem:[#allocation2 + $0xa8] sm:$0xff]
    %v1604 = vmul.f32 %v1602, %v1598
    %v1605 = vmul.f32 %v1603, %v1599
    %v1606 = vld [vmem:[#allocation3 + $0xa0] sm:$0xff]
    %v1607 = vld [vmem:[#allocation3 + $0xa8] sm:$0xff]
    %v1608 = vadd.f32 %v1604, %v1606
    %v1609 = vadd.f32 %v1605, %v1607
    %1610 = vst [vmem:[#allocation4 + $0xa0] sm:$0xff] %v1608
    %1611 = vst [vmem:[#allocation4 + $0xa8] sm:$0xff] %v1609
    %v1612 = vld [vmem:[#allocation2 + $0xb0] sm:$0xff]
    %v1613 = vld [vmem:[#allocation2 + $0xb8] sm:$0xff]
    %v1614 = vmul.f32 %v1612, %v1608
    %v1615 = vmul.f32 %v1613, %v1609
    %v1616 = vld [vmem:[#allocation3 + $0xb0] sm:$0xff]
    %v1617 = vld [vmem:[#allocation3 + $0xb8] sm:$0xff]
    %v1618 = vadd.f32 %v1614, %v1616
    %v1619 = vadd.f32 %v1615, %v1617
    %1620 = vst [vmem:[#allocation4 + $0xb0] sm:$0xff] %v1618
    %1621 = vst [vmem:[#allocation4 + $0xb8] sm:$0xff] %v1619
    %v1622 = vld [vmem:[#allocation2 + $0xc0] sm:$0xff]
    %v1623 = vld [vmem:[#allocation2 + $0xc8] sm:$0xff]
    %v1624 = vmul.f32 %v1622, %v1618
    %v1625 = vmul.f32 %v1623, %v1619
    %v1626 = vld [vmem:[#allocation3 + $0xc0] sm:$0xff]
    %v1627 = vld [vmem:[#allocation3 + $0xc8] sm:$0xff]
    %v1628 = vadd.f32 %v1624, %v1626
    %v1629 = vadd.f32 %v1625, %v1627
    %1630 = vst [vmem:[#allocation4 + $0xc0] sm:$0xff] %v1628
    %1631 = vst [vmem:[#allocation4 + $0xc8] sm:$0xff] %v1629
    %v1632 = vld [vmem:[#allocation2 + $0xd0] sm:$0xff]
    %v1633 = vld [vmem:[#allocation2 + $0xd8] sm:$0xff]
    %v1634 = vmul.f32 %v1632, %v1628
    %v1635 = vmul.f32 %v1633, %v1629
    %v1636 = vld [vmem:[#allocation3 + $0xd0] sm:$0xff]
    %v1637 = vld [vmem:[#allocation3 + $0xd8] sm:$0xff]
    %v1638 = vadd.f32 %v1634, %v1636
    %v1639 = vadd.f32 %v1635, %v1637
    %1640 = vst [vmem:[#allocation4 + $0xd0] sm:$0xff] %v1638
    %1641 = vst [vmem:[#allocation4 + $0xd8] sm:$0xff] %v1639
    %v1642 = vld [vmem:[#allocation2 + $0xe0] sm:$0xff]
    %v1643 = vld [vmem:[#allocation2 + $0xe8] sm:$0xff]
    %v1644 = vmul.f32 %v1642, %v1638
    %v1645 = vmul.f32 %v1643, %v1639
    %v1646 = vld [vmem:[#allocation3 + $0xe0] sm:$0xff]
    %v1647 = vld [vmem:[#allocation3 + $0xe8] sm:$0xff]
    %v1648 = vadd.f32 %v1644, %v1646
    %v1649 = vadd.f32 %v1645, %v1647
    %1650 = vst [vmem:[#allocation4 + $0xe0] sm:$0xff] %v1648
    %1651 = vst [vmem:[#allocation4 + $0xe8] sm:$0xff] %v1649
    %v1652 = vld [vmem:[#allocation2 + $0xf0] sm:$0xff]
    %v1653 = vld [vmem:[#allocation2 + $0xf8] sm:$0xff]
    %v1654 = vmul.f32 %v1652, %v1648
    %v1655 = vmul.f32 %v1653, %v1649
    %v1656 = vld [vmem:[#allocation3 + $0xf0] sm:$0xff]
    %v1657 = vld [vmem:[#allocation3 + $0xf8] sm:$0xff]
    %v1658 = vadd.f32 %v1654, %v1656
    %v1659 = vadd.f32 %v1655, %v1657
    %1660 = vst [vmem:[#allocation4 + $0xf0] sm:$0xff] %v1658
    %1661 = vst [vmem:[#allocation4 + $0xf8] sm:$0xff] %v1659
    %vm1662 = vcmp.eq.s32.totalorder %v258, 0
    %vm1663 = vcmp.eq.s32.totalorder %v259, 0
    %vm1664 = vcmp.eq.s32.totalorder %v260, 0
    %vm1665 = vcmp.eq.s32.totalorder %v261, 0
    %v1666 = vsel %vm1662, %v507, 0.0
    %v1667 = vsel %vm1663, %v512, 0.0
    %v1668 = vsel %vm1664, %v517, 0.0
    %v1669 = vsel %vm1665, %v522, 0.0
    %vm1670 = vcmp.eq.s32.totalorder %v258, 1
    %vm1671 = vcmp.eq.s32.totalorder %v259, 1
    %vm1672 = vcmp.eq.s32.totalorder %v260, 1
    %vm1673 = vcmp.eq.s32.totalorder %v261, 1
    %v1674 = vsel %vm1670, %v507, 0.0
    %v1675 = vsel %vm1671, %v512, 0.0
    %v1676 = vsel %vm1672, %v517, 0.0
    %v1677 = vsel %vm1673, %v522, 0.0
    %vm1678 = vcmp.eq.s32.totalorder %v258, 2
    %vm1679 = vcmp.eq.s32.totalorder %v259, 2
    %vm1680 = vcmp.eq.s32.totalorder %v260, 2
    %vm1681 = vcmp.eq.s32.totalorder %v261, 2
    %v1682 = vsel %vm1678, %v507, 0.0
    %v1683 = vsel %vm1679, %v512, 0.0
    %v1684 = vsel %vm1680, %v517, 0.0
    %v1685 = vsel %vm1681, %v522, 0.0
    %vm1686 = vcmp.eq.s32.totalorder %v258, 3
    %vm1687 = vcmp.eq.s32.totalorder %v259, 3
    %vm1688 = vcmp.eq.s32.totalorder %v260, 3
    %vm1689 = vcmp.eq.s32.totalorder %v261, 3
    %v1690 = vsel %vm1686, %v507, 0.0
    %v1691 = vsel %vm1687, %v512, 0.0
    %v1692 = vsel %vm1688, %v517, 0.0
    %v1693 = vsel %vm1689, %v522, 0.0
    %vm1694 = vcmp.eq.s32.totalorder %v258, 4
    %vm1695 = vcmp.eq.s32.totalorder %v259, 4
    %vm1696 = vcmp.eq.s32.totalorder %v260, 4
    %vm1697 = vcmp.eq.s32.totalorder %v261, 4
    %v1698 = vsel %vm1694, %v507, 0.0
    %v1699 = vsel %vm1695, %v512, 0.0
    %v1700 = vsel %vm1696, %v517, 0.0
    %v1701 = vsel %vm1697, %v522, 0.0
    %vm1702 = vcmp.eq.s32.totalorder %v258, 5
    %vm1703 = vcmp.eq.s32.totalorder %v259, 5
    %vm1704 = vcmp.eq.s32.totalorder %v260, 5
    %vm1705 = vcmp.eq.s32.totalorder %v261, 5
    %v1706 = vsel %vm1702, %v507, 0.0
    %v1707 = vsel %vm1703, %v512, 0.0
    %v1708 = vsel %vm1704, %v517, 0.0
    %v1709 = vsel %vm1705, %v522, 0.0
    %vm1710 = vcmp.eq.s32.totalorder %v258, 6
    %vm1711 = vcmp.eq.s32.totalorder %v259, 6
    %vm1712 = vcmp.eq.s32.totalorder %v260, 6
    %vm1713 = vcmp.eq.s32.totalorder %v261, 6
    %v1714 = vsel %vm1710, %v507, 0.0
    %v1715 = vsel %vm1711, %v512, 0.0
    %v1716 = vsel %vm1712, %v517, 0.0
    %v1717 = vsel %vm1713, %v522, 0.0
    %vm1718 = vcmp.eq.s32.totalorder %v258, 7
    %vm1719 = vcmp.eq.s32.totalorder %v259, 7
    %vm1720 = vcmp.eq.s32.totalorder %v260, 7
    %vm1721 = vcmp.eq.s32.totalorder %v261, 7
    %v1722 = vsel %vm1718, %v507, 0.0
    %v1723 = vsel %vm1719, %v512, 0.0
    %v1724 = vsel %vm1720, %v517, 0.0
    %v1725 = vsel %vm1721, %v522, 0.0
    %vm1726 = vcmp.eq.s32.totalorder %v258, 8
    %vm1727 = vcmp.eq.s32.totalorder %v259, 8
    %vm1728 = vcmp.eq.s32.totalorder %v260, 8
    %vm1729 = vcmp.eq.s32.totalorder %v261, 8
    %v1730 = vsel %vm1726, %v507, 0.0
    %v1731 = vsel %vm1727, %v512, 0.0
    %v1732 = vsel %vm1728, %v517, 0.0
    %v1733 = vsel %vm1729, %v522, 0.0
    %vm1734 = vcmp.eq.s32.totalorder %v258, 9
    %vm1735 = vcmp.eq.s32.totalorder %v259, 9
    %vm1736 = vcmp.eq.s32.totalorder %v260, 9
    %vm1737 = vcmp.eq.s32.totalorder %v261, 9
    %v1738 = vsel %vm1734, %v507, 0.0
    %v1739 = vsel %vm1735, %v512, 0.0
    %v1740 = vsel %vm1736, %v517, 0.0
    %v1741 = vsel %vm1737, %v522, 0.0
    %vm1742 = vcmp.eq.s32.totalorder %v258, 10
    %vm1743 = vcmp.eq.s32.totalorder %v259, 10
    %vm1744 = vcmp.eq.s32.totalorder %v260, 10
    %vm1745 = vcmp.eq.s32.totalorder %v261, 10
    %v1746 = vsel %vm1742, %v507, 0.0
    %v1747 = vsel %vm1743, %v512, 0.0
    %v1748 = vsel %vm1744, %v517, 0.0
    %v1749 = vsel %vm1745, %v522, 0.0
    %vm1750 = vcmp.eq.s32.totalorder %v258, 11
    %vm1751 = vcmp.eq.s32.totalorder %v259, 11
    %vm1752 = vcmp.eq.s32.totalorder %v260, 11
    %vm1753 = vcmp.eq.s32.totalorder %v261, 11
    %v1754 = vsel %vm1750, %v507, 0.0
    %v1755 = vsel %vm1751, %v512, 0.0
    %v1756 = vsel %vm1752, %v517, 0.0
    %v1757 = vsel %vm1753, %v522, 0.0
    %vm1758 = vcmp.eq.s32.totalorder %v258, 12
    %vm1759 = vcmp.eq.s32.totalorder %v259, 12
    %vm1760 = vcmp.eq.s32.totalorder %v260, 12
    %vm1761 = vcmp.eq.s32.totalorder %v261, 12
    %v1762 = vsel %vm1758, %v507, 0.0
    %v1763 = vsel %vm1759, %v512, 0.0
    %v1764 = vsel %vm1760, %v517, 0.0
    %v1765 = vsel %vm1761, %v522, 0.0
    %vm1766 = vcmp.eq.s32.totalorder %v258, 13
    %vm1767 = vcmp.eq.s32.totalorder %v259, 13
    %vm1768 = vcmp.eq.s32.totalorder %v260, 13
    %vm1769 = vcmp.eq.s32.totalorder %v261, 13
    %v1770 = vsel %vm1766, %v507, 0.0
    %v1771 = vsel %vm1767, %v512, 0.0
    %v1772 = vsel %vm1768, %v517, 0.0
    %v1773 = vsel %vm1769, %v522, 0.0
    %vm1774 = vcmp.eq.s32.totalorder %v258, 14
    %vm1775 = vcmp.eq.s32.totalorder %v259, 14
    %vm1776 = vcmp.eq.s32.totalorder %v260, 14
    %vm1777 = vcmp.eq.s32.totalorder %v261, 14
    %v1778 = vsel %vm1774, %v507, 0.0
    %v1779 = vsel %vm1775, %v512, 0.0
    %v1780 = vsel %vm1776, %v517, 0.0
    %v1781 = vsel %vm1777, %v522, 0.0
    %vm1782 = vcmp.eq.s32.totalorder %v258, 15
    %vm1783 = vcmp.eq.s32.totalorder %v259, 15
    %vm1784 = vcmp.eq.s32.totalorder %v260, 15
    %vm1785 = vcmp.eq.s32.totalorder %v261, 15
    %v1786 = vsel %vm1782, %v507, 0.0
    %v1787 = vsel %vm1783, %v512, 0.0
    %v1788 = vsel %vm1784, %v517, 0.0
    %v1789 = vsel %vm1785, %v522, 0.0
    %1794 = vrot.lane.b32.xlu0 %v1666, 64
    %v1795 = vpop.permute.xlu0 %1794
    %1796 = vrot.lane.b32.xlu0 %v1667, 64
    %v1797 = vpop.permute.xlu0 %1796
    %1798 = vrot.lane.b32.xlu0 %v1668, 64
    %v1799 = vpop.permute.xlu0 %1798
    %1800 = vrot.lane.b32.xlu0 %v1669, 64
    %v1801 = vpop.permute.xlu0 %1800
    %1810 = vrot.lane.b32.xlu0 %v1674, 80
    %v1811 = vpop.permute.xlu0 %1810
    %1812 = vrot.lane.b32.xlu0 %v1675, 80
    %v1813 = vpop.permute.xlu0 %1812
    %1814 = vrot.lane.b32.xlu0 %v1676, 80
    %v1815 = vpop.permute.xlu0 %1814
    %1816 = vrot.lane.b32.xlu0 %v1677, 80
    %v1817 = vpop.permute.xlu0 %1816
    %1826 = vrot.lane.b32.xlu0 %v1682, 96
    %v1827 = vpop.permute.xlu0 %1826
    %1828 = vrot.lane.b32.xlu0 %v1683, 96
    %v1829 = vpop.permute.xlu0 %1828
    %1830 = vrot.lane.b32.xlu0 %v1684, 96
    %v1831 = vpop.permute.xlu0 %1830
    %1832 = vrot.lane.b32.xlu0 %v1685, 96
    %v1833 = vpop.permute.xlu0 %1832
    %1842 = vrot.lane.b32.xlu0 %v1690, 112
    %v1843 = vpop.permute.xlu0 %1842
    %1844 = vrot.lane.b32.xlu0 %v1691, 112
    %v1845 = vpop.permute.xlu0 %1844
    %1846 = vrot.lane.b32.xlu0 %v1692, 112
    %v1847 = vpop.permute.xlu0 %1846
    %1848 = vrot.lane.b32.xlu0 %v1693, 112
    %v1849 = vpop.permute.xlu0 %1848
    %1858 = vrot.lane.b32.xlu0 %v1706, 16
    %v1859 = vpop.permute.xlu0 %1858
    %1860 = vrot.lane.b32.xlu0 %v1707, 16
    %v1861 = vpop.permute.xlu0 %1860
    %1862 = vrot.lane.b32.xlu0 %v1708, 16
    %v1863 = vpop.permute.xlu0 %1862
    %1864 = vrot.lane.b32.xlu0 %v1709, 16
    %v1865 = vpop.permute.xlu0 %1864
    %1874 = vrot.lane.b32.xlu0 %v1714, 32
    %v1875 = vpop.permute.xlu0 %1874
    %1876 = vrot.lane.b32.xlu0 %v1715, 32
    %v1877 = vpop.permute.xlu0 %1876
    %1878 = vrot.lane.b32.xlu0 %v1716, 32
    %v1879 = vpop.permute.xlu0 %1878
    %1880 = vrot.lane.b32.xlu0 %v1717, 32
    %v1881 = vpop.permute.xlu0 %1880
    %1890 = vrot.lane.b32.xlu0 %v1722, 48
    %v1891 = vpop.permute.xlu0 %1890
    %1892 = vrot.lane.b32.xlu0 %v1723, 48
    %v1893 = vpop.permute.xlu0 %1892
    %1894 = vrot.lane.b32.xlu0 %v1724, 48
    %v1895 = vpop.permute.xlu0 %1894
    %1896 = vrot.lane.b32.xlu0 %v1725, 48
    %v1897 = vpop.permute.xlu0 %1896
    %1906 = vrot.lane.b32.xlu0 %v1730, 64
    %v1907 = vpop.permute.xlu0 %1906
    %1908 = vrot.lane.b32.xlu0 %v1731, 64
    %v1909 = vpop.permute.xlu0 %1908
    %1910 = vrot.lane.b32.xlu0 %v1732, 64
    %v1911 = vpop.permute.xlu0 %1910
    %1912 = vrot.lane.b32.xlu0 %v1733, 64
    %v1913 = vpop.permute.xlu0 %1912
    %1922 = vrot.lane.b32.xlu0 %v1738, 80
    %v1923 = vpop.permute.xlu0 %1922
    %1924 = vrot.lane.b32.xlu0 %v1739, 80
    %v1925 = vpop.permute.xlu0 %1924
    %1926 = vrot.lane.b32.xlu0 %v1740, 80
    %v1927 = vpop.permute.xlu0 %1926
    %1928 = vrot.lane.b32.xlu0 %v1741, 80
    %v1929 = vpop.permute.xlu0 %1928
    %1938 = vrot.lane.b32.xlu0 %v1746, 96
    %v1939 = vpop.permute.xlu0 %1938
    %1940 = vrot.lane.b32.xlu0 %v1747, 96
    %v1941 = vpop.permute.xlu0 %1940
    %1942 = vrot.lane.b32.xlu0 %v1748, 96
    %v1943 = vpop.permute.xlu0 %1942
    %1944 = vrot.lane.b32.xlu0 %v1749, 96
    %v1945 = vpop.permute.xlu0 %1944
    %1954 = vrot.lane.b32.xlu0 %v1754, 112
    %v1955 = vpop.permute.xlu0 %1954
    %1956 = vrot.lane.b32.xlu0 %v1755, 112
    %v1957 = vpop.permute.xlu0 %1956
    %1958 = vrot.lane.b32.xlu0 %v1756, 112
    %v1959 = vpop.permute.xlu0 %1958
    %1960 = vrot.lane.b32.xlu0 %v1757, 112
    %v1961 = vpop.permute.xlu0 %1960
    %1970 = vrot.lane.b32.xlu0 %v1770, 16
    %v1971 = vpop.permute.xlu0 %1970
    %1972 = vrot.lane.b32.xlu0 %v1771, 16
    %v1973 = vpop.permute.xlu0 %1972
    %1974 = vrot.lane.b32.xlu0 %v1772, 16
    %v1975 = vpop.permute.xlu0 %1974
    %1976 = vrot.lane.b32.xlu0 %v1773, 16
    %v1977 = vpop.permute.xlu0 %1976
    %1986 = vrot.lane.b32.xlu0 %v1778, 32
    %v1987 = vpop.permute.xlu0 %1986
    %1988 = vrot.lane.b32.xlu0 %v1779, 32
    %v1989 = vpop.permute.xlu0 %1988
    %1990 = vrot.lane.b32.xlu0 %v1780, 32
    %v1991 = vpop.permute.xlu0 %1990
    %1992 = vrot.lane.b32.xlu0 %v1781, 32
    %v1993 = vpop.permute.xlu0 %1992
    %2002 = vrot.lane.b32.xlu0 %v1786, 48
    %v2003 = vpop.permute.xlu0 %2002
    %2004 = vrot.lane.b32.xlu0 %v1787, 48
    %v2005 = vpop.permute.xlu0 %2004
    %2006 = vrot.lane.b32.xlu0 %v1788, 48
    %v2007 = vpop.permute.xlu0 %2006
    %2008 = vrot.lane.b32.xlu0 %v1789, 48
    %v2009 = vpop.permute.xlu0 %2008
    %vm2014 = vcmask 130048
    %v2015 = vsel %vm2014, %v1795, %v1811
    %v2016 = vsel %vm2014, %v1797, %v1813
    %v2017 = vsel %vm2014, %v1799, %v1815
    %v2018 = vsel %vm2014, %v1801, %v1817
    %v2019 = vsel %vm89, %v2015, %v1827
    %v2020 = vsel %vm89, %v2016, %v1829
    %v2021 = vsel %vm89, %v2017, %v1831
    %v2022 = vsel %vm89, %v2018, %v1833
    %vm2023 = vcmask 392192
    %v2024 = vsel %vm2023, %v2019, %v1843
    %v2025 = vsel %vm2023, %v2020, %v1845
    %v2026 = vsel %vm2023, %v2021, %v1847
    %v2027 = vsel %vm2023, %v2022, %v1849
    %v2028 = vsel %vm427, %v2024, %v1698
    %v2029 = vsel %vm427, %v2025, %v1699
    %v2030 = vsel %vm427, %v2026, %v1700
    %v2031 = vsel %vm427, %v2027, %v1701
    %vm2032 = vcmask 654336
    %v2033 = vsel %vm2032, %v2028, %v1859
    %v2034 = vsel %vm2032, %v2029, %v1861
    %v2035 = vsel %vm2032, %v2030, %v1863
    %v2036 = vsel %vm2032, %v2031, %v1865
    %vm2037 = vcmask 785408
    %v2038 = vsel %vm2037, %v2033, %v1875
    %v2039 = vsel %vm2037, %v2034, %v1877
    %v2040 = vsel %vm2037, %v2035, %v1879
    %v2041 = vsel %vm2037, %v2036, %v1881
    %vm2042 = vcmask 916480
    %v2043 = vsel %vm2042, %v2038, %v1891
    %v2044 = vsel %vm2042, %v2039, %v1893
    %v2045 = vsel %vm2042, %v2040, %v1895
    %v2046 = vsel %vm2042, %v2041, %v1897
    %v2047 = vsel %vm2014, %v1907, %v1923
    %v2048 = vsel %vm2014, %v1909, %v1925
    %v2049 = vsel %vm2014, %v1911, %v1927
    %v2050 = vsel %vm2014, %v1913, %v1929
    %v2051 = vsel %vm89, %v2047, %v1939
    %v2052 = vsel %vm89, %v2048, %v1941
    %v2053 = vsel %vm89, %v2049, %v1943
    %v2054 = vsel %vm89, %v2050, %v1945
    %v2055 = vsel %vm2023, %v2051, %v1955
    %v2056 = vsel %vm2023, %v2052, %v1957
    %v2057 = vsel %vm2023, %v2053, %v1959
    %v2058 = vsel %vm2023, %v2054, %v1961
    %v2059 = vsel %vm427, %v2055, %v1762
    %v2060 = vsel %vm427, %v2056, %v1763
    %v2061 = vsel %vm427, %v2057, %v1764
    %v2062 = vsel %vm427, %v2058, %v1765
    %v2063 = vsel %vm2032, %v2059, %v1971
    %v2064 = vsel %vm2032, %v2060, %v1973
    %v2065 = vsel %vm2032, %v2061, %v1975
    %v2066 = vsel %vm2032, %v2062, %v1977
    %v2067 = vsel %vm2037, %v2063, %v1987
    %v2068 = vsel %vm2037, %v2064, %v1989
    %v2069 = vsel %vm2037, %v2065, %v1991
    %v2070 = vsel %vm2037, %v2066, %v1993
    %v2071 = vsel %vm2042, %v2067, %v2003
    %v2072 = vsel %vm2042, %v2068, %v2005
    %v2073 = vsel %vm2042, %v2069, %v2007
    %v2074 = vsel %vm2042, %v2070, %v2009
    %v2075 = vld [vmem:[#allocation4] sm:$0xff]
    %v2076 = vld [vmem:[#allocation4 + $0x8] sm:$0xff]
    %v2077 = vld [vmem:[#allocation4 + $0x10] sm:$0xff]
    %v2078 = vld [vmem:[#allocation4 + $0x18] sm:$0xff]
    %v2079 = vld [vmem:[#allocation4 + $0x20] sm:$0xff]
    %v2080 = vld [vmem:[#allocation4 + $0x28] sm:$0xff]
    %v2081 = vld [vmem:[#allocation4 + $0x30] sm:$0xff]
    %v2082 = vld [vmem:[#allocation4 + $0x38] sm:$0xff]
    %v2083 = vld [vmem:[#allocation4 + $0x40] sm:$0xff]
    %v2084 = vld [vmem:[#allocation4 + $0x48] sm:$0xff]
    %v2085 = vld [vmem:[#allocation4 + $0x50] sm:$0xff]
    %v2086 = vld [vmem:[#allocation4 + $0x58] sm:$0xff]
    %v2087 = vld [vmem:[#allocation4 + $0x60] sm:$0xff]
    %v2088 = vld [vmem:[#allocation4 + $0x68] sm:$0xff]
    %v2089 = vld [vmem:[#allocation4 + $0x70] sm:$0xff]
    %v2090 = vld [vmem:[#allocation4 + $0x78] sm:$0xff]
    %v2091 = vld [vmem:[#allocation4 + $0x80] sm:$0xff]
    %v2092 = vld [vmem:[#allocation4 + $0x88] sm:$0xff]
    %v2093 = vld [vmem:[#allocation4 + $0x90] sm:$0xff]
    %v2094 = vld [vmem:[#allocation4 + $0x98] sm:$0xff]
    %v2095 = vld [vmem:[#allocation4 + $0xa0] sm:$0xff]
    %v2096 = vld [vmem:[#allocation4 + $0xa8] sm:$0xff]
    %v2097 = vld [vmem:[#allocation4 + $0xb0] sm:$0xff]
    %v2098 = vld [vmem:[#allocation4 + $0xb8] sm:$0xff]
    %v2099 = vld [vmem:[#allocation4 + $0xc0] sm:$0xff]
    %v2100 = vld [vmem:[#allocation4 + $0xc8] sm:$0xff]
    %v2101 = vld [vmem:[#allocation4 + $0xd0] sm:$0xff]
    %v2102 = vld [vmem:[#allocation4 + $0xd8] sm:$0xff]
    %v2103 = vld [vmem:[#allocation4 + $0xe0] sm:$0xff]
    %v2104 = vld [vmem:[#allocation4 + $0xe8] sm:$0xff]
    %v2105 = vld [vmem:[#allocation4 + $0xf0] sm:$0xff]
    %v2106 = vld [vmem:[#allocation4 + $0xf8] sm:$0xff]
    %2107 = vmatprep.subr.mxu0 0.0
    %2108 = vmatpush1.msra.mxu0 %v2075
    %2109 = vmatprep.subr.mxu0 0.0
    %2110 = vmatpush1.msra.mxu0 %v2076
    %2111 = vmatprep.subr.mxu0 0.0
    %2112 = vmatpush1.msra.mxu0 %v2077
    %2113 = vmatprep.subr.mxu0 0.0
    %2114 = vmatpush1.msra.mxu0 %v2078
    %2115 = vmatprep.subr.mxu0 0.0
    %2116 = vmatpush1.msra.mxu0 %v2079
    %2117 = vmatprep.subr.mxu0 0.0
    %2118 = vmatpush1.msra.mxu0 %v2080
    %2119 = vmatprep.subr.mxu0 0.0
    %2120 = vmatpush1.msra.mxu0 %v2081
    %2121 = vmatprep.subr.mxu0 0.0
    %2122 = vmatpush1.msra.mxu0 %v2082
    %2123 = vmatprep.subr.mxu0 0.0
    %2124 = vmatpush1.msra.mxu0 %v2083
    %2125 = vmatprep.subr.mxu0 0.0
    %2126 = vmatpush1.msra.mxu0 %v2084
    %2127 = vmatprep.subr.mxu0 0.0
    %2128 = vmatpush1.msra.mxu0 %v2085
    %2129 = vmatprep.subr.mxu0 0.0
    %2130 = vmatpush1.msra.mxu0 %v2086
    %2131 = vmatprep.subr.mxu0 0.0
    %2132 = vmatpush1.msra.mxu0 %v2087
    %2133 = vmatprep.subr.mxu0 0.0
    %2134 = vmatpush1.msra.mxu0 %v2088
    %2135 = vmatprep.subr.mxu0 0.0
    %2136 = vmatpush1.msra.mxu0 %v2089
    %2137 = vmatprep.subr.mxu0 0.0
    %2138 = vmatpush1.msra.mxu0 %v2090
    %2139 = vmatprep.subr.mxu0 0.0
    %2140 = vmatpush1.msra.mxu0 %v2091
    %2141 = vmatprep.subr.mxu0 0.0
    %2142 = vmatpush1.msra.mxu0 %v2092
    %2143 = vmatprep.subr.mxu0 0.0
    %2144 = vmatpush1.msra.mxu0 %v2093
    %2145 = vmatprep.subr.mxu0 0.0
    %2146 = vmatpush1.msra.mxu0 %v2094
    %2147 = vmatprep.subr.mxu0 0.0
    %2148 = vmatpush1.msra.mxu0 %v2095
    %2149 = vmatprep.subr.mxu0 0.0
    %2150 = vmatpush1.msra.mxu0 %v2096
    %2151 = vmatprep.subr.mxu0 0.0
    %2152 = vmatpush1.msra.mxu0 %v2097
    %2153 = vmatprep.subr.mxu0 0.0
    %2154 = vmatpush1.msra.mxu0 %v2098
    %2155 = vmatprep.subr.mxu0 0.0
    %2156 = vmatpush1.msra.mxu0 %v2099
    %2157 = vmatprep.subr.mxu0 0.0
    %2158 = vmatpush1.msra.mxu0 %v2100
    %2159 = vmatprep.subr.mxu0 0.0
    %2160 = vmatpush1.msra.mxu0 %v2101
    %2161 = vmatprep.subr.mxu0 0.0
    %2162 = vmatpush1.msra.mxu0 %v2102
    %2163 = vmatprep.subr.mxu0 0.0
    %2164 = vmatpush1.msra.mxu0 %v2103
    %2165 = vmatprep.subr.mxu0 0.0
    %2166 = vmatpush1.msra.mxu0 %v2104
    %2167 = vmatprep.subr.mxu0 0.0
    %2168 = vmatpush1.msra.mxu0 %v2105
    %2169 = vmatprep.subr.mxu0 0.0
    %2170 = vmatpush1.msra.mxu0 %v2106
    %2171 = vmatprep.mubr.f32.mxu0 %v2071
    %2172 = vmatmul.mubr.f32.gmra.mrb[0].mxu0 %v2043
    %v2173 = vpop.f32.mrb[0].mxu0
    %v2174 = vadd.f32 0.0, %v2173
    %v2175 = vpop.f32.mrb[0].mxu0
    %2176 = vmatprep.mubr.f32.mxu0 %v2072
    %2177 = vmatmul.mubr.f32.gmra.mrb[0].mxu0 %v2044
    %v2178 = vpop.f32.mrb[0].mxu0
    %v2179 = vadd.f32 0.0, %v2178
    %v2180 = vpop.f32.mrb[0].mxu0
    %2181 = vmatprep.mubr.f32.mxu0 %v2073
    %2182 = vmatmul.mubr.f32.gmra.mrb[0].mxu0 %v2045
    %v2183 = vpop.f32.mrb[0].mxu0
    %v2184 = vadd.f32 0.0, %v2183
    %v2185 = vpop.f32.mrb[0].mxu0
    %2186 = vmatprep.mubr.f32.mxu0 %v2074
    %2187 = vmatmul.mubr.f32.gmra.mrb[0].mxu0 %v2046
    %v2188 = vpop.f32.mrb[0].mxu0
    %v2189 = vadd.f32 0.0, %v2188
    %v2190 = vpop.f32.mrb[0].mxu0
    %2191 = vdwg.mxu0
    %2194 = vrot.lane.b32.xlu0 %v2184, 64
    %v2195 = vpop.permute.xlu0 %2194
    %2196 = vrot.lane.b32.xlu0 %v2189, 64
    %v2197 = vpop.permute.xlu0 %2196
    %v2200 = vlaneseq
    %v2201 = vshrl.u32 %v2200, 7
    %v2202 = vsub.s32 0, %v2201
    %v2203 = vrot.slane %v189, %v2202
    %v2204 = vmul.f32 %v412, %v2203
    %v2205 = vmul.f32 %v414, %v2203
    %v2206 = vmul.f32 %v416, %v2203
    %v2207 = vmul.f32 %v418, %v2203
    %v2208 = vadd.f32 %v2174, %v2204
    %v2209 = vadd.f32 %v2179, %v2205
    %v2210 = vadd.f32 %v2195, %v2206
    %v2211 = vadd.f32 %v2197, %v2207
    %v2212 = vsub.f32 0.0, %v169
    %v2213 = vsub.f32 0.0, %v174
    %v2214 = vsub.f32 0.0, %v179
    %v2215 = vsub.f32 0.0, %v184
    %v2216 = vmul.f32 %v2212, 1.442695
    %v2217 = vpow.pop %v2216
    %v2218 = vmul.f32 %v2213, 1.442695
    %v2219 = vpow.pop %v2218
    %v2220 = vmul.f32 %v2214, 1.442695
    %v2221 = vpow.pop %v2220
    %v2222 = vmul.f32 %v2215, 1.442695
    %v2223 = vpow.pop %v2222
    %v2224 = vadd.f32 %v2217, 1.0
    %v2225 = vadd.f32 %v2219, 1.0
    %v2226 = vadd.f32 %v2221, 1.0
    %v2227 = vadd.f32 %v2223, 1.0
    %v2228 = vrcp.pop %v2224
    %v2229 = vmul.f32 %v169, %v2228
    %v2230 = vrcp.pop %v2225
    %v2231 = vmul.f32 %v174, %v2230
    %v2232 = vrcp.pop %v2226
    %v2233 = vmul.f32 %v179, %v2232
    %v2234 = vrcp.pop %v2227
    %v2235 = vmul.f32 %v184, %v2234
    %2240 = vrot.lane.b32.xlu0 %v2229, 64
    %v2241 = vpop.permute.xlu0 %2240
    %2242 = vrot.lane.b32.xlu0 %v2231, 64
    %v2243 = vpop.permute.xlu0 %2242
    %2244 = vrot.lane.b32.xlu0 %v2233, 64
    %v2245 = vpop.permute.xlu0 %2244
    %2246 = vrot.lane.b32.xlu0 %v2235, 64
    %v2247 = vpop.permute.xlu0 %2246
    %v2252 = vmul.f32 %v2208, %v2241
    %v2253 = vmul.f32 %v2209, %v2243
    %v2254 = vmul.f32 %v2210, %v2245
    %v2255 = vmul.f32 %v2211, %v2247
    %v2256 = vmul.f32 %v2252, %v2252
    %v2257 = vmul.f32 %v2253, %v2253
    %v2258 = vmul.f32 %v2254, %v2254
    %v2259 = vmul.f32 %v2255, %v2255
    %v2260 = vsel %vm427, %v2256, 0.0
    %2261 = vadd.xlane.f32.xlu0 %v2260
    %v2262 = vpop.xlane.xlu0 %2261
    %v2263 = vsel %vm427, %v2257, 0.0
    %2264 = vadd.xlane.f32.xlu0 %v2263
    %v2265 = vpop.xlane.xlu0 %2264
    %v2266 = vsel %vm427, %v2258, 0.0
    %2267 = vadd.xlane.f32.xlu0 %v2266
    %v2268 = vpop.xlane.xlu0 %2267
    %v2269 = vsel %vm427, %v2259, 0.0
    %2270 = vadd.xlane.f32.xlu0 %v2269
    %v2271 = vpop.xlane.xlu0 %2270
    %v2272 = vrcp.pop 64.0
    %v2273 = vmul.f32 %v2262, %v2272
    %v2274 = vmul.f32 %v2265, %v2272
    %v2275 = vmul.f32 %v2268, %v2272
    %v2276 = vmul.f32 %v2271, %v2272
    %v2277 = vadd.f32 %v2273, 1e-05
    %v2278 = vadd.f32 %v2274, 1e-05
    %v2279 = vadd.f32 %v2275, 1e-05
    %v2280 = vadd.f32 %v2276, 1e-05
    %v2281 = vrsqrt.pop %v2277
    %v2282 = vrsqrt.pop %v2278
    %v2283 = vrsqrt.pop %v2279
    %v2284 = vrsqrt.pop %v2280
    %v2285 = vmul.f32 %v2252, %v2281
    %v2286 = vmul.f32 %v2253, %v2282
    %v2287 = vmul.f32 %v2254, %v2283
    %v2288 = vmul.f32 %v2255, %v2284
    %v2289 = vlaneseq
    %v2290 = vshrl.u32 %v2289, 7
    %v2291 = vsub.s32 0, %v2290
    %v2292 = vrot.slane %v190, %v2291
    %v2293 = vmul.f32 %v2285, %v2292
    %v2294 = vmul.f32 %v2286, %v2292
    %v2295 = vmul.f32 %v2287, %v2292
    %v2296 = vmul.f32 %v2288, %v2292
    %v2297 = vld [vmem:[%s7] sm:$0xff]
    %v2298 = vld [vmem:[%s7 + $0x8] sm:$0xff]
    %v2299 = vld [vmem:[%s7 + $0x10] sm:$0xff]
    %v2300 = vld [vmem:[%s7 + $0x18] sm:$0xff]
    %v2301 = vld [vmem:[%s7 + $0x20] sm:$0xff]
    %v2302 = vld [vmem:[%s7 + $0x28] sm:$0xff]
    %v2303 = vld [vmem:[%s7 + $0x30] sm:$0xff]
    %v2304 = vld [vmem:[%s7 + $0x38] sm:$0xff]
    %v2306 = vsel %vm427, %v2293, 0
    %v2309 = vsel %vm427, %v2294, 0
    %v2312 = vsel %vm427, %v2295, 0
    %v2315 = vsel %vm427, %v2296, 0
    %2317 = vmatprep.subr.mxu0 0.0
    %2318 = vmatpush1.msra.mxu0 %v2297
    %2319 = vmatprep.subr.mxu0 0.0
    %2320 = vmatpush1.msra.mxu0 %v2298
    %2321 = vmatprep.subr.mxu0 0.0
    %2322 = vmatpush1.msra.mxu0 %v2299
    %2323 = vmatprep.subr.mxu0 0.0
    %2324 = vmatpush1.msra.mxu0 %v2300
    %2325 = vmatprep.subr.mxu0 0.0
    %2326 = vmatpush1.msra.mxu0 %v2301
    %2327 = vmatprep.subr.mxu0 0.0
    %2328 = vmatpush1.msra.mxu0 %v2302
    %2329 = vmatprep.subr.mxu0 0.0
    %2330 = vmatpush1.msra.mxu0 %v2303
    %2331 = vmatprep.subr.mxu0 0.0
    %2332 = vmatpush1.msra.mxu0 %v2304
    %2333 = vmatprep.subr.mxu0 0.0
    %2334 = vmatpush1.msra.mxu0 0.0
    %2335 = vmatprep.subr.mxu0 0.0
    %2336 = vmatpush1.msra.mxu0 0.0
    %2337 = vmatprep.subr.mxu0 0.0
    %2338 = vmatpush1.msra.mxu0 0.0
    %2339 = vmatprep.subr.mxu0 0.0
    %2340 = vmatpush1.msra.mxu0 0.0
    %2341 = vmatprep.subr.mxu0 0.0
    %2342 = vmatpush1.msra.mxu0 0.0
    %2343 = vmatprep.subr.mxu0 0.0
    %2344 = vmatpush1.msra.mxu0 0.0
    %2345 = vmatprep.subr.mxu0 0.0
    %2346 = vmatpush1.msra.mxu0 0.0
    %2347 = vmatprep.subr.mxu0 0.0
    %2348 = vmatpush1.msra.mxu0 0.0
    %2349 = vmatprep.subr.mxu0 0.0
    %2350 = vmatpush1.msra.mxu0 0.0
    %2351 = vmatprep.subr.mxu0 0.0
    %2352 = vmatpush1.msra.mxu0 0.0
    %2353 = vmatprep.subr.mxu0 0.0
    %2354 = vmatpush1.msra.mxu0 0.0
    %2355 = vmatprep.subr.mxu0 0.0
    %2356 = vmatpush1.msra.mxu0 0.0
    %2357 = vmatprep.subr.mxu0 0.0
    %2358 = vmatpush1.msra.mxu0 0.0
    %2359 = vmatprep.subr.mxu0 0.0
    %2360 = vmatpush1.msra.mxu0 0.0
    %2361 = vmatprep.subr.mxu0 0.0
    %2362 = vmatpush1.msra.mxu0 0.0
    %2363 = vmatprep.subr.mxu0 0.0
    %2364 = vmatpush1.msra.mxu0 0.0
    %2365 = vmatprep.subr.mxu0 0.0
    %2366 = vmatpush1.msra.mxu0 0.0
    %2367 = vmatprep.subr.mxu0 0.0
    %2368 = vmatpush1.msra.mxu0 0.0
    %2369 = vmatprep.subr.mxu0 0.0
    %2370 = vmatpush1.msra.mxu0 0.0
    %2371 = vmatprep.subr.mxu0 0.0
    %2372 = vmatpush1.msra.mxu0 0.0
    %2373 = vmatprep.subr.mxu0 0.0
    %2374 = vmatpush1.msra.mxu0 0.0
    %2375 = vmatprep.subr.mxu0 0.0
    %2376 = vmatpush1.msra.mxu0 0.0
    %2377 = vmatprep.subr.mxu0 0.0
    %2378 = vmatpush1.msra.mxu0 0.0
    %2379 = vmatprep.subr.mxu0 0.0
    %2380 = vmatpush1.msra.mxu0 0.0
    %2381 = vmatprep.mubr.f32.mxu0 0.0
    %2382 = vmatmul.mubr.f32.gmra.mrb[0].mxu0 %v2306
    %v2383 = vpop.f32.mrb[0].mxu0
    %v2384 = vadd.f32 0.0, %v2383
    %v2385 = vpop.f32.mrb[0].mxu0
    %2386 = vmatprep.mubr.f32.mxu0 0.0
    %2387 = vmatmul.mubr.f32.gmra.mrb[0].mxu0 %v2309
    %v2388 = vpop.f32.mrb[0].mxu0
    %v2389 = vadd.f32 0.0, %v2388
    %v2390 = vpop.f32.mrb[0].mxu0
    %2391 = vmatprep.mubr.f32.mxu0 0.0
    %2392 = vmatmul.mubr.f32.gmra.mrb[0].mxu0 %v2312
    %v2393 = vpop.f32.mrb[0].mxu0
    %v2394 = vadd.f32 0.0, %v2393
    %v2395 = vpop.f32.mrb[0].mxu0
    %2396 = vmatprep.mubr.f32.mxu0 0.0
    %2397 = vmatmul.mubr.f32.gmra.mrb[0].mxu0 %v2315
    %v2398 = vpop.f32.mrb[0].mxu0
    %v2399 = vadd.f32 0.0, %v2398
    %v2400 = vpop.f32.mrb[0].mxu0
    %2401 = vdwg.mxu0
    %2402 = vst.msk [vmem:[#allocation13] sm:$0xff] %vm89, %v2384
    %2403 = vst.msk [vmem:[#allocation13 + $0x8] sm:$0xff] %vm89, %v2389
    %2404 = vst.msk [vmem:[#allocation13 + $0x10] sm:$0xff] %vm89, %v2394
    %2405 = vst.msk [vmem:[#allocation13 + $0x18] sm:$0xff] %vm89, %v2399
    // Predicated region
    $region50: #{tpu_custom_call.1} parent=1 // pred_check
      _
    $region51: #{tpu_custom_call.1} parent=1 // pred_check_branch
      %2407 = sbr.rel (0) target = $region53
    $region52: #{tpu_custom_call.1} parent=1 // pred_region
      %s2409 = ssub.s32 512, 512
      %2410 = vsyncadd [#allocation7], %s2409
      %s2411 = sshll.u32 [#allocation13], 4
      %s2412 = int_to_ptr.vmem [resolvable:$true] %s2411
      %2417 = dma.vmem_to_hbm [thread:$0]  %s2412, 512, %s8, [#allocation7], 128, 128, 8
    $region53: #{tpu_custom_call.1} parent=1 // pred_fallthru
      _
    // Predicated region
    $region54: #{tpu_custom_call.1} parent=1 // pred_check
      _
    $region55: #{tpu_custom_call.1} parent=1 // pred_check_branch
      %2419 = sbr.rel (0) target = $region57
    $region56: #{tpu_custom_call.1} parent=1 // pred_region
      %2420 = dma.done [#allocation7], 512
    $region57: #{tpu_custom_call.1} parent=1 // pred_fallthru
      _
    %2421 = vsyncpa [#allocation6], 1
    %2422 = vsyncpa [#allocation9], 1
    %2423 = vsyncpa [#allocation12], 1
    %2424 = vsyncpa [#allocation7], 1

</llo_original>
